<compile_context>
chip_gen: v7x
topology: tpu7x:2x2x1
jax: 0.10.0
libtpu: 0.0.40
codegen_flags: <defaults>
</compile_context>

<pallas_src>
import functools

import jax
import jax.numpy as jnp
from jax import lax
from jax.experimental import pallas as pl
from jax.experimental.pallas import tpu as pltpu

EPS = 1e-5
KS = 3  # kernel_size


def conv_stats_kernel(x0_ref, x1_ref, x2_ref, w_ref, mask_ref,
                      conv_ref, sum_ref, sq_ref, *, wp, l_out):
    """Pass 1: conv3d as 27 shifted matmuls (transposed, lane-dense layout) +
    per-tile BN partial sums (f32)."""
    cout = w_ref.shape[1]
    slabs = (x0_ref[0, 0], x1_ref[0, 0], x2_ref[0, 0])   # (Cin, L_in) bf16 each
    acc = jnp.zeros((cout, l_out), jnp.float32)
    t = 0
    for kd in range(KS):
        slab = slabs[kd]
        for kh in range(KS):
            for kw in range(KS):
                off = kh * wp + kw
                win = slab[:, off:off + l_out]            # static lane-offset window
                acc = acc + jnp.dot(w_ref[t], win,
                                    preferred_element_type=jnp.float32)
                t += 1
    masked = acc * mask_ref[...]                          # zero the padded positions
    conv_ref[0, 0] = masked
    sum_ref[0, 0] = jnp.sum(masked, axis=1, keepdims=True)
    sq_ref[0, 0] = jnp.sum(masked * masked, axis=1, keepdims=True)


def bn_relu_kernel(conv_ref, scale_ref, shift_ref, o_ref):
    """Pass 2: y = relu(conv * scale + shift); scale/shift fold BN mean/var/gamma/beta."""
    y = conv_ref[0, 0] * scale_ref[...] + shift_ref[...]
    o_ref[0, 0] = jnp.maximum(y, 0.0)


@jax.jit
def regular_conv_forward(x_ncdhw, weight_oidhw, gamma, beta):
    """Forward of RegularConv (3d, K=0, bn=True, relu) with Pallas hot path."""
    N, Cin, D, H, W = x_ncdhw.shape
    Cout = weight_oidhw.shape[0]
    Dp, Hp, Wp = D + 2, H + 2, W + 2
    L = Hp * Wp                      # per-(n, d) output length (padded plane, flattened)
    tail = 2 * Wp + 2                # largest in-plane tap offset
    L_in = L + tail

    # ---- glue: lay out the padded input once; channels on sublanes, plane on lanes ----
    xpad = jnp.pad(x_ncdhw, ((0, 0), (0, 0), (1, 1), (1, 1), (1, 1)))
    xp = jnp.transpose(xpad, (0, 2, 1, 3, 4)).reshape(N, Dp, Cin, L)
    xp = jnp.pad(xp, ((0, 0), (0, 0), (0, 0), (0, tail))).astype(jnp.bfloat16)

    # PyTorch Conv3d weight (Cout, Cin, kd, kh, kw) -> taps (27, Cout, Cin), bf16 for MXU
    w_taps = jnp.transpose(weight_oidhw, (2, 3, 4, 0, 1)).reshape(KS ** 3, Cout, Cin)
    w_taps = w_taps.astype(jnp.bfloat16)

    # validity mask over the padded plane (1 where h < H and w < W)
    valid = (jnp.arange(Hp)[:, None] < H) & (jnp.arange(Wp)[None, :] < W)
    mask = valid.reshape(1, L).astype(jnp.float32)

    cparams = pltpu.CompilerParams(
        dimension_semantics=("parallel", "parallel"),
        vmem_limit_bytes=32 * 1024 * 1024)

    flops1 = 2 * N * D * L * (KS ** 3) * Cin * Cout
    bytes1 = (3 * xp.size * 2 + w_taps.size * 2 + mask.size * 4
              + N * D * Cout * (L + 2) * 4)
    cost1 = pl.CostEstimate(flops=flops1, transcendentals=0, bytes_accessed=bytes1)

    def x_spec(kd):
        # Same padded array passed 3x; each spec streams the (n, d + kd) depth slab.
        return pl.BlockSpec((1, 1, Cin, L_in),
                            lambda n, d, kd=kd: (n, d + kd, 0, 0))

    conv_t, psum, psq = pl.pallas_call(
        functools.partial(conv_stats_kernel, wp=Wp, l_out=L),
        grid=(N, D),
        in_specs=[
            x_spec(0), x_spec(1), x_spec(2),
            pl.BlockSpec((KS ** 3, Cout, Cin), lambda n, d: (0, 0, 0)),
            pl.BlockSpec((1, L), lambda n, d: (0, 0)),
        ],
        out_specs=(
            pl.BlockSpec((1, 1, Cout, L), lambda n, d: (n, d, 0, 0)),
            pl.BlockSpec((1, 1, Cout, 1), lambda n, d: (n, d, 0, 0)),
            pl.BlockSpec((1, 1, Cout, 1), lambda n, d: (n, d, 0, 0)),
        ),
        out_shape=(
            jax.ShapeDtypeStruct((N, D, Cout, L), jnp.float32),
            jax.ShapeDtypeStruct((N, D, Cout, 1), jnp.float32),
            jax.ShapeDtypeStruct((N, D, Cout, 1), jnp.float32),
        ),
        compiler_params=cparams,
        cost_estimate=cost1,
    )(xp, xp, xp, w_taps, mask)

    # ---- fold the tiny per-tile partials into per-channel scale/shift (f32, biased var) ----
    cnt = jnp.float32(N * D * H * W)
    mean = jnp.sum(psum, axis=(0, 1)) / cnt                          # (Cout, 1)
    var = jnp.maximum(jnp.sum(psq, axis=(0, 1)) / cnt - mean * mean, 0.0)
    inv = lax.rsqrt(var + EPS)
    scale = gamma.reshape(Cout, 1).astype(jnp.float32) * inv
    shift = beta.reshape(Cout, 1).astype(jnp.float32) - mean * scale

    bytes2 = 2 * N * D * Cout * L * 4 + 2 * Cout * 4
    cost2 = pl.CostEstimate(flops=2 * N * D * Cout * L, transcendentals=0,
                            bytes_accessed=bytes2)

    out_t = pl.pallas_call(
        bn_relu_kernel,
        grid=(N, D),
        in_specs=[
            pl.BlockSpec((1, 1, Cout, L), lambda n, d: (n, d, 0, 0)),
            pl.BlockSpec((Cout, 1), lambda n, d: (0, 0)),
            pl.BlockSpec((Cout, 1), lambda n, d: (0, 0)),
        ],
        out_specs=pl.BlockSpec((1, 1, Cout, L), lambda n, d: (n, d, 0, 0)),
        out_shape=jax.ShapeDtypeStruct((N, D, Cout, L), jnp.float32),
        compiler_params=cparams,
        cost_estimate=cost2,
    )(conv_t, scale, shift)

    # ---- glue: strip padded plane positions and return NCDHW ----
    out = out_t.reshape(N, D, Cout, Hp, Wp)[:, :, :, :H, :W]
    return jnp.transpose(out, (0, 2, 1, 3, 4))

# TODO(synk): only the module's default config (3d conv, relu, bn, K=0) is wired up;
# prelu/lrelu/tanh/sigmoid activations and the K>0 repeated-pass loop are simple
# elementwise / repeated-call variants not implemented here.


def ref_forward(x, w, gamma, beta):
    """Plain-JAX reference replicating the PyTorch forward (training-mode BN)."""
    out = lax.conv_general_dilated(
        x, w, window_strides=(1, 1, 1),
        padding=((1, 1), (1, 1), (1, 1)),
        dimension_numbers=('NCDHW', 'OIDHW', 'NCDHW'),
        precision=lax.Precision.HIGHEST)
    mean = out.mean(axis=(0, 2, 3, 4), keepdims=True)
    var = ((out - mean) ** 2).mean(axis=(0, 2, 3, 4), keepdims=True)
    y = (out - mean) * lax.rsqrt(var + EPS)
    y = y * gamma.reshape(1, -1, 1, 1, 1) + beta.reshape(1, -1, 1, 1, 1)
    return jnp.maximum(y, 0.0)


if __name__ == "__main__":
    key = jax.random.PRNGKey(0)
    k1, k2, k3, k4 = jax.random.split(key, 4)

    # Small deterministic shapes: batch=2, channels=4 (in==out, required by the bn),
    # spatial 16x16x16 volume.
    N, C, D, H, W = 2, 4, 16, 16, 16
    x = jax.random.normal(k1, (N, C, D, H, W), jnp.float32)
    weight = 0.1 * jax.random.normal(k2, (C, C, 3, 3, 3), jnp.float32)   # Conv3d weight
    gamma = 1.0 + 0.1 * jax.random.normal(k3, (C,), jnp.float32)         # BN weight
    beta = 0.1 * jax.random.normal(k4, (C,), jnp.float32)                # BN bias

    out = regular_conv_forward(x, weight, gamma, beta)
    out = jax.block_until_ready(out)

    ref = ref_forward(x, weight, gamma, beta)
    assert out.shape == ref.shape == (N, C, D, H, W)
    max_err = float(jnp.max(jnp.abs(out - ref)))
    # bf16 MXU operands -> small (~1e-2 scale) absolute error vs the f32 reference.
    assert jnp.allclose(out, ref, atol=3e-2, rtol=1e-2), f"max abs err {max_err}"

    print("KERNEL_OK")
</pallas_src>

<mosaic_0001>
module attributes {stable_mosaic.version = 11 : i64} {
  func.func @conv_stats_kernel(%arg0: i32, %arg1: i32, %arg2: memref<1x1x4x362xbf16, #tpu.memory_space<vmem>>, %arg3: memref<1x1x4x362xbf16, #tpu.memory_space<vmem>>, %arg4: memref<1x1x4x362xbf16, #tpu.memory_space<vmem>>, %arg5: memref<27x4x4xbf16, #tpu.memory_space<vmem>>, %arg6: memref<1x324xf32, #tpu.memory_space<vmem>>, %arg7: memref<1x1x4x324xf32, #tpu.memory_space<vmem>>, %arg8: memref<1x1x4x1xf32, #tpu.memory_space<vmem>>, %arg9: memref<1x1x4x1xf32, #tpu.memory_space<vmem>>) attributes {dimension_semantics = [#tpu.dimension_semantics<parallel>, #tpu.dimension_semantics<parallel>], iteration_bounds = array<i64: 2, 16>, scalar_prefetch = 0 : i64, scratch_operands = 0 : i64, tpu.core_type = #tpu.core_type<tc>, window_params = [{transform_indices = @transform_0, window_bounds = array<i64: 1, 1, 4, 362>}, {transform_indices = @transform_1, window_bounds = array<i64: 1, 1, 4, 362>}, {transform_indices = @transform_2, window_bounds = array<i64: 1, 1, 4, 362>}, {pipeline_mode = #tpu.pipeline_mode<synchronous>, transform_indices = @transform_3, window_bounds = array<i64: 27, 4, 4>}, {pipeline_mode = #tpu.pipeline_mode<synchronous>, transform_indices = @transform_4, window_bounds = array<i64: 1, 324>}, {transform_indices = @transform_5, window_bounds = array<i64: 1, 1, 4, 324>}, {transform_indices = @transform_6, window_bounds = array<i64: 1, 1, 4, 1>}, {transform_indices = @transform_7, window_bounds = array<i64: 1, 1, 4, 1>}]} {
    %c0 = arith.constant 0 : index
    %c0_0 = arith.constant 0 : index
    %c0_1 = arith.constant 0 : index
    %c0_2 = arith.constant 0 : index
    %0 = vector.load %arg2[%c0, %c0_0, %c0_1, %c0_2] : memref<1x1x4x362xbf16, #tpu.memory_space<vmem>>, vector<1x1x4x362xbf16>
    %1 = vector.shape_cast %0 : vector<1x1x4x362xbf16> to vector<4x362xbf16>
    %c0_3 = arith.constant 0 : index
    %c0_4 = arith.constant 0 : index
    %c0_5 = arith.constant 0 : index
    %c0_6 = arith.constant 0 : index
    %2 = vector.load %arg3[%c0_3, %c0_4, %c0_5, %c0_6] : memref<1x1x4x362xbf16, #tpu.memory_space<vmem>>, vector<1x1x4x362xbf16>
    %3 = vector.shape_cast %2 : vector<1x1x4x362xbf16> to vector<4x362xbf16>
    %c0_7 = arith.constant 0 : index
    %c0_8 = arith.constant 0 : index
    %c0_9 = arith.constant 0 : index
    %c0_10 = arith.constant 0 : index
    %4 = vector.load %arg4[%c0_7, %c0_8, %c0_9, %c0_10] : memref<1x1x4x362xbf16, #tpu.memory_space<vmem>>, vector<1x1x4x362xbf16>
    %5 = vector.shape_cast %4 : vector<1x1x4x362xbf16> to vector<4x362xbf16>
    %cst = arith.constant 0.000000e+00 : f32
    %6 = vector.broadcast %cst : f32 to vector<4x324xf32>
    %7 = vector.extract_strided_slice %1 {offsets = [0, 0], sizes = [4, 324], strides = [1, 1]} : vector<4x362xbf16> to vector<4x324xbf16>
    %c0_11 = arith.constant 0 : index
    %c0_12 = arith.constant 0 : index
    %c0_13 = arith.constant 0 : index
    %8 = vector.load %arg5[%c0_11, %c0_12, %c0_13] : memref<27x4x4xbf16, #tpu.memory_space<vmem>>, vector<1x4x4xbf16>
    %9 = vector.shape_cast %8 : vector<1x4x4xbf16> to vector<4x4xbf16>
    %cst_14 = arith.constant dense<0.000000e+00> : vector<4x324xf32>
    %10 = tpu.matmul %9, %7, %cst_14 {dimension_numbers = #tpu.dot_dimension_numbers<[1], [0], [0], [1], [0, 0, 1, 1], [], []>} : vector<4x4xbf16>, vector<4x324xbf16>, vector<4x324xf32> -> vector<4x324xf32>
    %11 = arith.addf %6, %10 : vector<4x324xf32>
    %12 = vector.extract_strided_slice %1 {offsets = [0, 1], sizes = [4, 324], strides = [1, 1]} : vector<4x362xbf16> to vector<4x324xbf16>
    %c1 = arith.constant 1 : index
    %c0_15 = arith.constant 0 : index
    %c0_16 = arith.constant 0 : index
    %13 = vector.load %arg5[%c1, %c0_15, %c0_16] : memref<27x4x4xbf16, #tpu.memory_space<vmem>>, vector<1x4x4xbf16>
    %14 = vector.shape_cast %13 : vector<1x4x4xbf16> to vector<4x4xbf16>
    %cst_17 = arith.constant dense<0.000000e+00> : vector<4x324xf32>
    %15 = tpu.matmul %14, %12, %cst_17 {dimension_numbers = #tpu.dot_dimension_numbers<[1], [0], [0], [1], [0, 0, 1, 1], [], []>} : vector<4x4xbf16>, vector<4x324xbf16>, vector<4x324xf32> -> vector<4x324xf32>
    %16 = arith.addf %11, %15 : vector<4x324xf32>
    %17 = vector.extract_strided_slice %1 {offsets = [0, 2], sizes = [4, 324], strides = [1, 1]} : vector<4x362xbf16> to vector<4x324xbf16>
    %c2 = arith.constant 2 : index
    %c0_18 = arith.constant 0 : index
    %c0_19 = arith.constant 0 : index
    %18 = vector.load %arg5[%c2, %c0_18, %c0_19] : memref<27x4x4xbf16, #tpu.memory_space<vmem>>, vector<1x4x4xbf16>
    %19 = vector.shape_cast %18 : vector<1x4x4xbf16> to vector<4x4xbf16>
    %cst_20 = arith.constant dense<0.000000e+00> : vector<4x324xf32>
    %20 = tpu.matmul %19, %17, %cst_20 {dimension_numbers = #tpu.dot_dimension_numbers<[1], [0], [0], [1], [0, 0, 1, 1], [], []>} : vector<4x4xbf16>, vector<4x324xbf16>, vector<4x324xf32> -> vector<4x324xf32>
    %21 = arith.addf %16, %20 : vector<4x324xf32>
    %22 = vector.extract_strided_slice %1 {offsets = [0, 18], sizes = [4, 324], strides = [1, 1]} : vector<4x362xbf16> to vector<4x324xbf16>
    %c3 = arith.constant 3 : index
    %c0_21 = arith.constant 0 : index
    %c0_22 = arith.constant 0 : index
    %23 = vector.load %arg5[%c3, %c0_21, %c0_22] : memref<27x4x4xbf16, #tpu.memory_space<vmem>>, vector<1x4x4xbf16>
    %24 = vector.shape_cast %23 : vector<1x4x4xbf16> to vector<4x4xbf16>
    %cst_23 = arith.constant dense<0.000000e+00> : vector<4x324xf32>
    %25 = tpu.matmul %24, %22, %cst_23 {dimension_numbers = #tpu.dot_dimension_numbers<[1], [0], [0], [1], [0, 0, 1, 1], [], []>} : vector<4x4xbf16>, vector<4x324xbf16>, vector<4x324xf32> -> vector<4x324xf32>
    %26 = arith.addf %21, %25 : vector<4x324xf32>
    %27 = vector.extract_strided_slice %1 {offsets = [0, 19], sizes = [4, 324], strides = [1, 1]} : vector<4x362xbf16> to vector<4x324xbf16>
    %c4 = arith.constant 4 : index
    %c0_24 = arith.constant 0 : index
    %c0_25 = arith.constant 0 : index
    %28 = vector.load %arg5[%c4, %c0_24, %c0_25] : memref<27x4x4xbf16, #tpu.memory_space<vmem>>, vector<1x4x4xbf16>
    %29 = vector.shape_cast %28 : vector<1x4x4xbf16> to vector<4x4xbf16>
    %cst_26 = arith.constant dense<0.000000e+00> : vector<4x324xf32>
    %30 = tpu.matmul %29, %27, %cst_26 {dimension_numbers = #tpu.dot_dimension_numbers<[1], [0], [0], [1], [0, 0, 1, 1], [], []>} : vector<4x4xbf16>, vector<4x324xbf16>, vector<4x324xf32> -> vector<4x324xf32>
    %31 = arith.addf %26, %30 : vector<4x324xf32>
    %32 = vector.extract_strided_slice %1 {offsets = [0, 20], sizes = [4, 324], strides = [1, 1]} : vector<4x362xbf16> to vector<4x324xbf16>
    %c5 = arith.constant 5 : index
    %c0_27 = arith.constant 0 : index
    %c0_28 = arith.constant 0 : index
    %33 = vector.load %arg5[%c5, %c0_27, %c0_28] : memref<27x4x4xbf16, #tpu.memory_space<vmem>>, vector<1x4x4xbf16>
    %34 = vector.shape_cast %33 : vector<1x4x4xbf16> to vector<4x4xbf16>
    %cst_29 = arith.constant dense<0.000000e+00> : vector<4x324xf32>
    %35 = tpu.matmul %34, %32, %cst_29 {dimension_numbers = #tpu.dot_dimension_numbers<[1], [0], [0], [1], [0, 0, 1, 1], [], []>} : vector<4x4xbf16>, vector<4x324xbf16>, vector<4x324xf32> -> vector<4x324xf32>
    %36 = arith.addf %31, %35 : vector<4x324xf32>
    %37 = vector.extract_strided_slice %1 {offsets = [0, 36], sizes = [4, 324], strides = [1, 1]} : vector<4x362xbf16> to vector<4x324xbf16>
    %c6 = arith.constant 6 : index
    %c0_30 = arith.constant 0 : index
    %c0_31 = arith.constant 0 : index
    %38 = vector.load %arg5[%c6, %c0_30, %c0_31] : memref<27x4x4xbf16, #tpu.memory_space<vmem>>, vector<1x4x4xbf16>
    %39 = vector.shape_cast %38 : vector<1x4x4xbf16> to vector<4x4xbf16>
    %cst_32 = arith.constant dense<0.000000e+00> : vector<4x324xf32>
    %40 = tpu.matmul %39, %37, %cst_32 {dimension_numbers = #tpu.dot_dimension_numbers<[1], [0], [0], [1], [0, 0, 1, 1], [], []>} : vector<4x4xbf16>, vector<4x324xbf16>, vector<4x324xf32> -> vector<4x324xf32>
    %41 = arith.addf %36, %40 : vector<4x324xf32>
    %42 = vector.extract_strided_slice %1 {offsets = [0, 37], sizes = [4, 324], strides = [1, 1]} : vector<4x362xbf16> to vector<4x324xbf16>
    %c7 = arith.constant 7 : index
    %c0_33 = arith.constant 0 : index
    %c0_34 = arith.constant 0 : index
    %43 = vector.load %arg5[%c7, %c0_33, %c0_34] : memref<27x4x4xbf16, #tpu.memory_space<vmem>>, vector<1x4x4xbf16>
    %44 = vector.shape_cast %43 : vector<1x4x4xbf16> to vector<4x4xbf16>
    %cst_35 = arith.constant dense<0.000000e+00> : vector<4x324xf32>
    %45 = tpu.matmul %44, %42, %cst_35 {dimension_numbers = #tpu.dot_dimension_numbers<[1], [0], [0], [1], [0, 0, 1, 1], [], []>} : vector<4x4xbf16>, vector<4x324xbf16>, vector<4x324xf32> -> vector<4x324xf32>
    %46 = arith.addf %41, %45 : vector<4x324xf32>
    %47 = vector.extract_strided_slice %1 {offsets = [0, 38], sizes = [4, 324], strides = [1, 1]} : vector<4x362xbf16> to vector<4x324xbf16>
    %c8 = arith.constant 8 : index
    %c0_36 = arith.constant 0 : index
    %c0_37 = arith.constant 0 : index
    %48 = vector.load %arg5[%c8, %c0_36, %c0_37] : memref<27x4x4xbf16, #tpu.memory_space<vmem>>, vector<1x4x4xbf16>
    %49 = vector.shape_cast %48 : vector<1x4x4xbf16> to vector<4x4xbf16>
    %cst_38 = arith.constant dense<0.000000e+00> : vector<4x324xf32>
    %50 = tpu.matmul %49, %47, %cst_38 {dimension_numbers = #tpu.dot_dimension_numbers<[1], [0], [0], [1], [0, 0, 1, 1], [], []>} : vector<4x4xbf16>, vector<4x324xbf16>, vector<4x324xf32> -> vector<4x324xf32>
    %51 = arith.addf %46, %50 : vector<4x324xf32>
    %52 = vector.extract_strided_slice %3 {offsets = [0, 0], sizes = [4, 324], strides = [1, 1]} : vector<4x362xbf16> to vector<4x324xbf16>
    %c9 = arith.constant 9 : index
    %c0_39 = arith.constant 0 : index
    %c0_40 = arith.constant 0 : index
    %53 = vector.load %arg5[%c9, %c0_39, %c0_40] : memref<27x4x4xbf16, #tpu.memory_space<vmem>>, vector<1x4x4xbf16>
    %54 = vector.shape_cast %53 : vector<1x4x4xbf16> to vector<4x4xbf16>
    %cst_41 = arith.constant dense<0.000000e+00> : vector<4x324xf32>
    %55 = tpu.matmul %54, %52, %cst_41 {dimension_numbers = #tpu.dot_dimension_numbers<[1], [0], [0], [1], [0, 0, 1, 1], [], []>} : vector<4x4xbf16>, vector<4x324xbf16>, vector<4x324xf32> -> vector<4x324xf32>
    %56 = arith.addf %51, %55 : vector<4x324xf32>
    %57 = vector.extract_strided_slice %3 {offsets = [0, 1], sizes = [4, 324], strides = [1, 1]} : vector<4x362xbf16> to vector<4x324xbf16>
    %c10 = arith.constant 10 : index
    %c0_42 = arith.constant 0 : index
    %c0_43 = arith.constant 0 : index
    %58 = vector.load %arg5[%c10, %c0_42, %c0_43] : memref<27x4x4xbf16, #tpu.memory_space<vmem>>, vector<1x4x4xbf16>
    %59 = vector.shape_cast %58 : vector<1x4x4xbf16> to vector<4x4xbf16>
    %cst_44 = arith.constant dense<0.000000e+00> : vector<4x324xf32>
    %60 = tpu.matmul %59, %57, %cst_44 {dimension_numbers = #tpu.dot_dimension_numbers<[1], [0], [0], [1], [0, 0, 1, 1], [], []>} : vector<4x4xbf16>, vector<4x324xbf16>, vector<4x324xf32> -> vector<4x324xf32>
    %61 = arith.addf %56, %60 : vector<4x324xf32>
    %62 = vector.extract_strided_slice %3 {offsets = [0, 2], sizes = [4, 324], strides = [1, 1]} : vector<4x362xbf16> to vector<4x324xbf16>
    %c11 = arith.constant 11 : index
    %c0_45 = arith.constant 0 : index
    %c0_46 = arith.constant 0 : index
    %63 = vector.load %arg5[%c11, %c0_45, %c0_46] : memref<27x4x4xbf16, #tpu.memory_space<vmem>>, vector<1x4x4xbf16>
    %64 = vector.shape_cast %63 : vector<1x4x4xbf16> to vector<4x4xbf16>
    %cst_47 = arith.constant dense<0.000000e+00> : vector<4x324xf32>
    %65 = tpu.matmul %64, %62, %cst_47 {dimension_numbers = #tpu.dot_dimension_numbers<[1], [0], [0], [1], [0, 0, 1, 1], [], []>} : vector<4x4xbf16>, vector<4x324xbf16>, vector<4x324xf32> -> vector<4x324xf32>
    %66 = arith.addf %61, %65 : vector<4x324xf32>
    %67 = vector.extract_strided_slice %3 {offsets = [0, 18], sizes = [4, 324], strides = [1, 1]} : vector<4x362xbf16> to vector<4x324xbf16>
    %c12 = arith.constant 12 : index
    %c0_48 = arith.constant 0 : index
    %c0_49 = arith.constant 0 : index
    %68 = vector.load %arg5[%c12, %c0_48, %c0_49] : memref<27x4x4xbf16, #tpu.memory_space<vmem>>, vector<1x4x4xbf16>
    %69 = vector.shape_cast %68 : vector<1x4x4xbf16> to vector<4x4xbf16>
    %cst_50 = arith.constant dense<0.000000e+00> : vector<4x324xf32>
    %70 = tpu.matmul %69, %67, %cst_50 {dimension_numbers = #tpu.dot_dimension_numbers<[1], [0], [0], [1], [0, 0, 1, 1], [], []>} : vector<4x4xbf16>, vector<4x324xbf16>, vector<4x324xf32> -> vector<4x324xf32>
    %71 = arith.addf %66, %70 : vector<4x324xf32>
    %72 = vector.extract_strided_slice %3 {offsets = [0, 19], sizes = [4, 324], strides = [1, 1]} : vector<4x362xbf16> to vector<4x324xbf16>
    %c13 = arith.constant 13 : index
    %c0_51 = arith.constant 0 : index
    %c0_52 = arith.constant 0 : index
    %73 = vector.load %arg5[%c13, %c0_51, %c0_52] : memref<27x4x4xbf16, #tpu.memory_space<vmem>>, vector<1x4x4xbf16>
    %74 = vector.shape_cast %73 : vector<1x4x4xbf16> to vector<4x4xbf16>
    %cst_53 = arith.constant dense<0.000000e+00> : vector<4x324xf32>
    %75 = tpu.matmul %74, %72, %cst_53 {dimension_numbers = #tpu.dot_dimension_numbers<[1], [0], [0], [1], [0, 0, 1, 1], [], []>} : vector<4x4xbf16>, vector<4x324xbf16>, vector<4x324xf32> -> vector<4x324xf32>
    %76 = arith.addf %71, %75 : vector<4x324xf32>
    %77 = vector.extract_strided_slice %3 {offsets = [0, 20], sizes = [4, 324], strides = [1, 1]} : vector<4x362xbf16> to vector<4x324xbf16>
    %c14 = arith.constant 14 : index
    %c0_54 = arith.constant 0 : index
    %c0_55 = arith.constant 0 : index
    %78 = vector.load %arg5[%c14, %c0_54, %c0_55] : memref<27x4x4xbf16, #tpu.memory_space<vmem>>, vector<1x4x4xbf16>
    %79 = vector.shape_cast %78 : vector<1x4x4xbf16> to vector<4x4xbf16>
    %cst_56 = arith.constant dense<0.000000e+00> : vector<4x324xf32>
    %80 = tpu.matmul %79, %77, %cst_56 {dimension_numbers = #tpu.dot_dimension_numbers<[1], [0], [0], [1], [0, 0, 1, 1], [], []>} : vector<4x4xbf16>, vector<4x324xbf16>, vector<4x324xf32> -> vector<4x324xf32>
    %81 = arith.addf %76, %80 : vector<4x324xf32>
    %82 = vector.extract_strided_slice %3 {offsets = [0, 36], sizes = [4, 324], strides = [1, 1]} : vector<4x362xbf16> to vector<4x324xbf16>
    %c15 = arith.constant 15 : index
    %c0_57 = arith.constant 0 : index
    %c0_58 = arith.constant 0 : index
    %83 = vector.load %arg5[%c15, %c0_57, %c0_58] : memref<27x4x4xbf16, #tpu.memory_space<vmem>>, vector<1x4x4xbf16>
    %84 = vector.shape_cast %83 : vector<1x4x4xbf16> to vector<4x4xbf16>
    %cst_59 = arith.constant dense<0.000000e+00> : vector<4x324xf32>
    %85 = tpu.matmul %84, %82, %cst_59 {dimension_numbers = #tpu.dot_dimension_numbers<[1], [0], [0], [1], [0, 0, 1, 1], [], []>} : vector<4x4xbf16>, vector<4x324xbf16>, vector<4x324xf32> -> vector<4x324xf32>
    %86 = arith.addf %81, %85 : vector<4x324xf32>
    %87 = vector.extract_strided_slice %3 {offsets = [0, 37], sizes = [4, 324], strides = [1, 1]} : vector<4x362xbf16> to vector<4x324xbf16>
    %c16 = arith.constant 16 : index
    %c0_60 = arith.constant 0 : index
    %c0_61 = arith.constant 0 : index
    %88 = vector.load %arg5[%c16, %c0_60, %c0_61] : memref<27x4x4xbf16, #tpu.memory_space<vmem>>, vector<1x4x4xbf16>
    %89 = vector.shape_cast %88 : vector<1x4x4xbf16> to vector<4x4xbf16>
    %cst_62 = arith.constant dense<0.000000e+00> : vector<4x324xf32>
    %90 = tpu.matmul %89, %87, %cst_62 {dimension_numbers = #tpu.dot_dimension_numbers<[1], [0], [0], [1], [0, 0, 1, 1], [], []>} : vector<4x4xbf16>, vector<4x324xbf16>, vector<4x324xf32> -> vector<4x324xf32>
    %91 = arith.addf %86, %90 : vector<4x324xf32>
    %92 = vector.extract_strided_slice %3 {offsets = [0, 38], sizes = [4, 324], strides = [1, 1]} : vector<4x362xbf16> to vector<4x324xbf16>
    %c17 = arith.constant 17 : index
    %c0_63 = arith.constant 0 : index
    %c0_64 = arith.constant 0 : index
    %93 = vector.load %arg5[%c17, %c0_63, %c0_64] : memref<27x4x4xbf16, #tpu.memory_space<vmem>>, vector<1x4x4xbf16>
    %94 = vector.shape_cast %93 : vector<1x4x4xbf16> to vector<4x4xbf16>
    %cst_65 = arith.constant dense<0.000000e+00> : vector<4x324xf32>
    %95 = tpu.matmul %94, %92, %cst_65 {dimension_numbers = #tpu.dot_dimension_numbers<[1], [0], [0], [1], [0, 0, 1, 1], [], []>} : vector<4x4xbf16>, vector<4x324xbf16>, vector<4x324xf32> -> vector<4x324xf32>
    %96 = arith.addf %91, %95 : vector<4x324xf32>
    %97 = vector.extract_strided_slice %5 {offsets = [0, 0], sizes = [4, 324], strides = [1, 1]} : vector<4x362xbf16> to vector<4x324xbf16>
    %c18 = arith.constant 18 : index
    %c0_66 = arith.constant 0 : index
    %c0_67 = arith.constant 0 : index
    %98 = vector.load %arg5[%c18, %c0_66, %c0_67] : memref<27x4x4xbf16, #tpu.memory_space<vmem>>, vector<1x4x4xbf16>
    %99 = vector.shape_cast %98 : vector<1x4x4xbf16> to vector<4x4xbf16>
    %cst_68 = arith.constant dense<0.000000e+00> : vector<4x324xf32>
    %100 = tpu.matmul %99, %97, %cst_68 {dimension_numbers = #tpu.dot_dimension_numbers<[1], [0], [0], [1], [0, 0, 1, 1], [], []>} : vector<4x4xbf16>, vector<4x324xbf16>, vector<4x324xf32> -> vector<4x324xf32>
    %101 = arith.addf %96, %100 : vector<4x324xf32>
    %102 = vector.extract_strided_slice %5 {offsets = [0, 1], sizes = [4, 324], strides = [1, 1]} : vector<4x362xbf16> to vector<4x324xbf16>
    %c19 = arith.constant 19 : index
    %c0_69 = arith.constant 0 : index
    %c0_70 = arith.constant 0 : index
    %103 = vector.load %arg5[%c19, %c0_69, %c0_70] : memref<27x4x4xbf16, #tpu.memory_space<vmem>>, vector<1x4x4xbf16>
    %104 = vector.shape_cast %103 : vector<1x4x4xbf16> to vector<4x4xbf16>
    %cst_71 = arith.constant dense<0.000000e+00> : vector<4x324xf32>
    %105 = tpu.matmul %104, %102, %cst_71 {dimension_numbers = #tpu.dot_dimension_numbers<[1], [0], [0], [1], [0, 0, 1, 1], [], []>} : vector<4x4xbf16>, vector<4x324xbf16>, vector<4x324xf32> -> vector<4x324xf32>
    %106 = arith.addf %101, %105 : vector<4x324xf32>
    %107 = vector.extract_strided_slice %5 {offsets = [0, 2], sizes = [4, 324], strides = [1, 1]} : vector<4x362xbf16> to vector<4x324xbf16>
    %c20 = arith.constant 20 : index
    %c0_72 = arith.constant 0 : index
    %c0_73 = arith.constant 0 : index
    %108 = vector.load %arg5[%c20, %c0_72, %c0_73] : memref<27x4x4xbf16, #tpu.memory_space<vmem>>, vector<1x4x4xbf16>
    %109 = vector.shape_cast %108 : vector<1x4x4xbf16> to vector<4x4xbf16>
    %cst_74 = arith.constant dense<0.000000e+00> : vector<4x324xf32>
    %110 = tpu.matmul %109, %107, %cst_74 {dimension_numbers = #tpu.dot_dimension_numbers<[1], [0], [0], [1], [0, 0, 1, 1], [], []>} : vector<4x4xbf16>, vector<4x324xbf16>, vector<4x324xf32> -> vector<4x324xf32>
    %111 = arith.addf %106, %110 : vector<4x324xf32>
    %112 = vector.extract_strided_slice %5 {offsets = [0, 18], sizes = [4, 324], strides = [1, 1]} : vector<4x362xbf16> to vector<4x324xbf16>
    %c21 = arith.constant 21 : index
    %c0_75 = arith.constant 0 : index
    %c0_76 = arith.constant 0 : index
    %113 = vector.load %arg5[%c21, %c0_75, %c0_76] : memref<27x4x4xbf16, #tpu.memory_space<vmem>>, vector<1x4x4xbf16>
    %114 = vector.shape_cast %113 : vector<1x4x4xbf16> to vector<4x4xbf16>
    %cst_77 = arith.constant dense<0.000000e+00> : vector<4x324xf32>
    %115 = tpu.matmul %114, %112, %cst_77 {dimension_numbers = #tpu.dot_dimension_numbers<[1], [0], [0], [1], [0, 0, 1, 1], [], []>} : vector<4x4xbf16>, vector<4x324xbf16>, vector<4x324xf32> -> vector<4x324xf32>
    %116 = arith.addf %111, %115 : vector<4x324xf32>
    %117 = vector.extract_strided_slice %5 {offsets = [0, 19], sizes = [4, 324], strides = [1, 1]} : vector<4x362xbf16> to vector<4x324xbf16>
    %c22 = arith.constant 22 : index
    %c0_78 = arith.constant 0 : index
    %c0_79 = arith.constant 0 : index
    %118 = vector.load %arg5[%c22, %c0_78, %c0_79] : memref<27x4x4xbf16, #tpu.memory_space<vmem>>, vector<1x4x4xbf16>
    %119 = vector.shape_cast %118 : vector<1x4x4xbf16> to vector<4x4xbf16>
    %cst_80 = arith.constant dense<0.000000e+00> : vector<4x324xf32>
    %120 = tpu.matmul %119, %117, %cst_80 {dimension_numbers = #tpu.dot_dimension_numbers<[1], [0], [0], [1], [0, 0, 1, 1], [], []>} : vector<4x4xbf16>, vector<4x324xbf16>, vector<4x324xf32> -> vector<4x324xf32>
    %121 = arith.addf %116, %120 : vector<4x324xf32>
    %122 = vector.extract_strided_slice %5 {offsets = [0, 20], sizes = [4, 324], strides = [1, 1]} : vector<4x362xbf16> to vector<4x324xbf16>
    %c23 = arith.constant 23 : index
    %c0_81 = arith.constant 0 : index
    %c0_82 = arith.constant 0 : index
    %123 = vector.load %arg5[%c23, %c0_81, %c0_82] : memref<27x4x4xbf16, #tpu.memory_space<vmem>>, vector<1x4x4xbf16>
    %124 = vector.shape_cast %123 : vector<1x4x4xbf16> to vector<4x4xbf16>
    %cst_83 = arith.constant dense<0.000000e+00> : vector<4x324xf32>
    %125 = tpu.matmul %124, %122, %cst_83 {dimension_numbers = #tpu.dot_dimension_numbers<[1], [0], [0], [1], [0, 0, 1, 1], [], []>} : vector<4x4xbf16>, vector<4x324xbf16>, vector<4x324xf32> -> vector<4x324xf32>
    %126 = arith.addf %121, %125 : vector<4x324xf32>
    %127 = vector.extract_strided_slice %5 {offsets = [0, 36], sizes = [4, 324], strides = [1, 1]} : vector<4x362xbf16> to vector<4x324xbf16>
    %c24 = arith.constant 24 : index
    %c0_84 = arith.constant 0 : index
    %c0_85 = arith.constant 0 : index
    %128 = vector.load %arg5[%c24, %c0_84, %c0_85] : memref<27x4x4xbf16, #tpu.memory_space<vmem>>, vector<1x4x4xbf16>
    %129 = vector.shape_cast %128 : vector<1x4x4xbf16> to vector<4x4xbf16>
    %cst_86 = arith.constant dense<0.000000e+00> : vector<4x324xf32>
    %130 = tpu.matmul %129, %127, %cst_86 {dimension_numbers = #tpu.dot_dimension_numbers<[1], [0], [0], [1], [0, 0, 1, 1], [], []>} : vector<4x4xbf16>, vector<4x324xbf16>, vector<4x324xf32> -> vector<4x324xf32>
    %131 = arith.addf %126, %130 : vector<4x324xf32>
    %132 = vector.extract_strided_slice %5 {offsets = [0, 37], sizes = [4, 324], strides = [1, 1]} : vector<4x362xbf16> to vector<4x324xbf16>
    %c25 = arith.constant 25 : index
    %c0_87 = arith.constant 0 : index
    %c0_88 = arith.constant 0 : index
    %133 = vector.load %arg5[%c25, %c0_87, %c0_88] : memref<27x4x4xbf16, #tpu.memory_space<vmem>>, vector<1x4x4xbf16>
    %134 = vector.shape_cast %133 : vector<1x4x4xbf16> to vector<4x4xbf16>
    %cst_89 = arith.constant dense<0.000000e+00> : vector<4x324xf32>
    %135 = tpu.matmul %134, %132, %cst_89 {dimension_numbers = #tpu.dot_dimension_numbers<[1], [0], [0], [1], [0, 0, 1, 1], [], []>} : vector<4x4xbf16>, vector<4x324xbf16>, vector<4x324xf32> -> vector<4x324xf32>
    %136 = arith.addf %131, %135 : vector<4x324xf32>
    %137 = vector.extract_strided_slice %5 {offsets = [0, 38], sizes = [4, 324], strides = [1, 1]} : vector<4x362xbf16> to vector<4x324xbf16>
    %c26 = arith.constant 26 : index
    %c0_90 = arith.constant 0 : index
    %c0_91 = arith.constant 0 : index
    %138 = vector.load %arg5[%c26, %c0_90, %c0_91] : memref<27x4x4xbf16, #tpu.memory_space<vmem>>, vector<1x4x4xbf16>
    %139 = vector.shape_cast %138 : vector<1x4x4xbf16> to vector<4x4xbf16>
    %cst_92 = arith.constant dense<0.000000e+00> : vector<4x324xf32>
    %140 = tpu.matmul %139, %137, %cst_92 {dimension_numbers = #tpu.dot_dimension_numbers<[1], [0], [0], [1], [0, 0, 1, 1], [], []>} : vector<4x4xbf16>, vector<4x324xbf16>, vector<4x324xf32> -> vector<4x324xf32>
    %141 = arith.addf %136, %140 : vector<4x324xf32>
    %c0_93 = arith.constant 0 : index
    %c0_94 = arith.constant 0 : index
    %142 = vector.load %arg6[%c0_93, %c0_94] : memref<1x324xf32, #tpu.memory_space<vmem>>, vector<1x324xf32>
    %143 = vector.broadcast %142 : vector<1x324xf32> to vector<4x324xf32>
    %144 = arith.mulf %141, %143 : vector<4x324xf32>
    %c0_95 = arith.constant 0 : index
    %c0_96 = arith.constant 0 : index
    %c0_97 = arith.constant 0 : index
    %c0_98 = arith.constant 0 : index
    %145 = vector.load %arg7[%c0_95, %c0_96, %c0_97, %c0_98] : memref<1x1x4x324xf32, #tpu.memory_space<vmem>>, vector<1x1x4x324xf32>
    %146 = vector.shape_cast %145 : vector<1x1x4x324xf32> to vector<4x324xf32>
    %147 = vector.shape_cast %144 : vector<4x324xf32> to vector<1x1x4x324xf32>
    tpu.vector_store %arg7[%c0_95, %c0_96, %c0_97, %c0_98], %147 {strides = array<i32>} : memref<1x1x4x324xf32, #tpu.memory_space<vmem>>, vector<1x1x4x324xf32>,
    %cst_99 = arith.constant dense<0.000000e+00> : vector<4xf32>
    %148 = vector.multi_reduction <add>, %144, %cst_99 [1] : vector<4x324xf32> to vector<4xf32>
    %149 = vector.shape_cast %148 : vector<4xf32> to vector<4x1xf32>
    %c0_100 = arith.constant 0 : index
    %c0_101 = arith.constant 0 : index
    %c0_102 = arith.constant 0 : index
    %c0_103 = arith.constant 0 : index
    %150 = vector.load %arg8[%c0_100, %c0_101, %c0_102, %c0_103] : memref<1x1x4x1xf32, #tpu.memory_space<vmem>>, vector<1x1x4x1xf32>
    %151 = vector.shape_cast %150 : vector<1x1x4x1xf32> to vector<4x1xf32>
    %152 = vector.shape_cast %149 : vector<4x1xf32> to vector<1x1x4x1xf32>
    tpu.vector_store %arg8[%c0_100, %c0_101, %c0_102, %c0_103], %152 {strides = array<i32>} : memref<1x1x4x1xf32, #tpu.memory_space<vmem>>, vector<1x1x4x1xf32>,
    %153 = arith.mulf %144, %144 : vector<4x324xf32>
    %cst_104 = arith.constant dense<0.000000e+00> : vector<4xf32>
    %154 = vector.multi_reduction <add>, %153, %cst_104 [1] : vector<4x324xf32> to vector<4xf32>
    %155 = vector.shape_cast %154 : vector<4xf32> to vector<4x1xf32>
    %c0_105 = arith.constant 0 : index
    %c0_106 = arith.constant 0 : index
    %c0_107 = arith.constant 0 : index
    %c0_108 = arith.constant 0 : index
    %156 = vector.load %arg9[%c0_105, %c0_106, %c0_107, %c0_108] : memref<1x1x4x1xf32, #tpu.memory_space<vmem>>, vector<1x1x4x1xf32>
    %157 = vector.shape_cast %156 : vector<1x1x4x1xf32> to vector<4x1xf32>
    %158 = vector.shape_cast %155 : vector<4x1xf32> to vector<1x1x4x1xf32>
    tpu.vector_store %arg9[%c0_105, %c0_106, %c0_107, %c0_108], %158 {strides = array<i32>} : memref<1x1x4x1xf32, #tpu.memory_space<vmem>>, vector<1x1x4x1xf32>,
    return
  }
  func.func @transform_0(%arg0: i32, %arg1: i32) -> (i32, i32, i32, i32) {
    %c0_i32 = arith.constant 0 : i32
    %0 = arith.addi %arg1, %c0_i32 : i32
    %c0_i32_0 = arith.constant 0 : i32
    %c0_i32_1 = arith.constant 0 : i32
    %c0_i32_2 = arith.constant 0 : i32
    return %arg0, %0, %c0_i32_0, %c0_i32_1 : i32, i32, i32, i32
  }
  func.func @transform_1(%arg0: i32, %arg1: i32) -> (i32, i32, i32, i32) {
    %c1_i32 = arith.constant 1 : i32
    %0 = arith.addi %arg1, %c1_i32 : i32
    %c0_i32 = arith.constant 0 : i32
    %c0_i32_0 = arith.constant 0 : i32
    %c0_i32_1 = arith.constant 0 : i32
    return %arg0, %0, %c0_i32, %c0_i32_0 : i32, i32, i32, i32
  }
  func.func @transform_2(%arg0: i32, %arg1: i32) -> (i32, i32, i32, i32) {
    %c2_i32 = arith.constant 2 : i32
    %0 = arith.addi %arg1, %c2_i32 : i32
    %c0_i32 = arith.constant 0 : i32
    %c0_i32_0 = arith.constant 0 : i32
    %c0_i32_1 = arith.constant 0 : i32
    return %arg0, %0, %c0_i32, %c0_i32_0 : i32, i32, i32, i32
  }
  func.func @transform_3(%arg0: i32, %arg1: i32) -> (i32, i32, i32) {
    %c0_i32 = arith.constant 0 : i32
    %c0_i32_0 = arith.constant 0 : i32
    %c0_i32_1 = arith.constant 0 : i32
    %c0_i32_2 = arith.constant 0 : i32
    return %c0_i32, %c0_i32_0, %c0_i32_1 : i32, i32, i32
  }
  func.func @transform_4(%arg0: i32, %arg1: i32) -> (i32, i32) {
    %c0_i32 = arith.constant 0 : i32
    %c0_i32_0 = arith.constant 0 : i32
    %c0_i32_1 = arith.constant 0 : i32
    return %c0_i32, %c0_i32_0 : i32, i32
  }
  func.func @transform_5(%arg0: i32, %arg1: i32) -> (i32, i32, i32, i32) {
    %c0_i32 = arith.constant 0 : i32
    %c0_i32_0 = arith.constant 0 : i32
    %c0_i32_1 = arith.constant 0 : i32
    return %arg0, %arg1, %c0_i32, %c0_i32_0 : i32, i32, i32, i32
  }
  func.func @transform_6(%arg0: i32, %arg1: i32) -> (i32, i32, i32, i32) {
    %c0_i32 = arith.constant 0 : i32
    %c0_i32_0 = arith.constant 0 : i32
    %c0_i32_1 = arith.constant 0 : i32
    return %arg0, %arg1, %c0_i32, %c0_i32_0 : i32, i32, i32, i32
  }
  func.func @transform_7(%arg0: i32, %arg1: i32) -> (i32, i32, i32, i32) {
    %c0_i32 = arith.constant 0 : i32
    %c0_i32_0 = arith.constant 0 : i32
    %c0_i32_1 = arith.constant 0 : i32
    return %arg0, %arg1, %c0_i32, %c0_i32_0 : i32, i32, i32, i32
  }
}

module attributes {stable_mosaic.version = 11 : i64} {
  func.func @bn_relu_kernel(%arg0: i32, %arg1: i32, %arg2: memref<1x1x4x324xf32, #tpu.memory_space<vmem>>, %arg3: memref<4x1xf32, #tpu.memory_space<vmem>>, %arg4: memref<4x1xf32, #tpu.memory_space<vmem>>, %arg5: memref<1x1x4x324xf32, #tpu.memory_space<vmem>>) attributes {dimension_semantics = [#tpu.dimension_semantics<parallel>, #tpu.dimension_semantics<parallel>], iteration_bounds = array<i64: 2, 16>, scalar_prefetch = 0 : i64, scratch_operands = 0 : i64, tpu.core_type = #tpu.core_type<tc>, window_params = [{transform_indices = @transform_0, window_bounds = array<i64: 1, 1, 4, 324>}, {pipeline_mode = #tpu.pipeline_mode<synchronous>, transform_indices = @transform_1, window_bounds = array<i64: 4, 1>}, {pipeline_mode = #tpu.pipeline_mode<synchronous>, transform_indices = @transform_2, window_bounds = array<i64: 4, 1>}, {transform_indices = @transform_3, window_bounds = array<i64: 1, 1, 4, 324>}]} {
    %c0 = arith.constant 0 : index
    %c0_0 = arith.constant 0 : index
    %c0_1 = arith.constant 0 : index
    %c0_2 = arith.constant 0 : index
    %0 = vector.load %arg2[%c0, %c0_0, %c0_1, %c0_2] : memref<1x1x4x324xf32, #tpu.memory_space<vmem>>, vector<1x1x4x324xf32>
    %1 = vector.shape_cast %0 : vector<1x1x4x324xf32> to vector<4x324xf32>
    %c0_3 = arith.constant 0 : index
    %c0_4 = arith.constant 0 : index
    %2 = vector.load %arg3[%c0_3, %c0_4] : memref<4x1xf32, #tpu.memory_space<vmem>>, vector<4x1xf32>
    %3 = vector.broadcast %2 : vector<4x1xf32> to vector<4x324xf32>
    %4 = arith.mulf %1, %3 : vector<4x324xf32>
    %c0_5 = arith.constant 0 : index
    %c0_6 = arith.constant 0 : index
    %5 = vector.load %arg4[%c0_5, %c0_6] : memref<4x1xf32, #tpu.memory_space<vmem>>, vector<4x1xf32>
    %6 = vector.broadcast %5 : vector<4x1xf32> to vector<4x324xf32>
    %7 = arith.addf %4, %6 : vector<4x324xf32>
    %cst = arith.constant 0.000000e+00 : f32
    %8 = vector.broadcast %cst : f32 to vector<4x324xf32>
    %9 = arith.maximumf %7, %8 : vector<4x324xf32>
    %c0_7 = arith.constant 0 : index
    %c0_8 = arith.constant 0 : index
    %c0_9 = arith.constant 0 : index
    %c0_10 = arith.constant 0 : index
    %10 = vector.load %arg5[%c0_7, %c0_8, %c0_9, %c0_10] : memref<1x1x4x324xf32, #tpu.memory_space<vmem>>, vector<1x1x4x324xf32>
    %11 = vector.shape_cast %10 : vector<1x1x4x324xf32> to vector<4x324xf32>
    %12 = vector.shape_cast %9 : vector<4x324xf32> to vector<1x1x4x324xf32>
    tpu.vector_store %arg5[%c0_7, %c0_8, %c0_9, %c0_10], %12 {strides = array<i32>} : memref<1x1x4x324xf32, #tpu.memory_space<vmem>>, vector<1x1x4x324xf32>,
    return
  }
  func.func @transform_0(%arg0: i32, %arg1: i32) -> (i32, i32, i32, i32) {
    %c0_i32 = arith.constant 0 : i32
    %c0_i32_0 = arith.constant 0 : i32
    %c0_i32_1 = arith.constant 0 : i32
    return %arg0, %arg1, %c0_i32, %c0_i32_0 : i32, i32, i32, i32
  }
  func.func @transform_1(%arg0: i32, %arg1: i32) -> (i32, i32) {
    %c0_i32 = arith.constant 0 : i32
    %c0_i32_0 = arith.constant 0 : i32
    %c0_i32_1 = arith.constant 0 : i32
    return %c0_i32, %c0_i32_0 : i32, i32
  }
  func.func @transform_2(%arg0: i32, %arg1: i32) -> (i32, i32) {
    %c0_i32 = arith.constant 0 : i32
    %c0_i32_0 = arith.constant 0 : i32
    %c0_i32_1 = arith.constant 0 : i32
    return %c0_i32, %c0_i32_0 : i32, i32
  }
  func.func @transform_3(%arg0: i32, %arg1: i32) -> (i32, i32, i32, i32) {
    %c0_i32 = arith.constant 0 : i32
    %c0_i32_0 = arith.constant 0 : i32
    %c0_i32_1 = arith.constant 0 : i32
    return %arg0, %arg1, %c0_i32, %c0_i32_0 : i32, i32, i32, i32
  }
}

</mosaic_0001>

<llo_original>
// kernel: regular_conv_forward.3
$region0: #{regular_conv_forward.3}
  #allocation0 [shape = 'u32[]', space=smem, size = 0x4, offset = 0x4, fixed_abs, tag = 'smem constant byte address 0x4 - core index']
  #allocation1 [shape = 'u32[144,128]{1,0:T(1,128)}', space=vmem, size = 0x12000, scoped, tag = 'internal scratch']
  %s0 = inlined_call_operand.vmem [shape: f32[2,16,4,324], index: 0, kind: input, shape index: {}]
  %s1 = inlined_call_operand.vmem [shape: f32[4,1], index: 1, kind: input, shape index: {}]
  %s2 = inlined_call_operand.vmem [shape: f32[4,1], index: 2, kind: input, shape index: {}]
  %s3 = inlined_call_operand.vmem [shape: f32[2,16,4,324], index: 3, kind: output, shape index: {}]
  %s4 = sld [smem:[#allocation0]]
  $region45: #{regular_conv_forward.3} parent=0
    _
  %s6 = ssub.s32 1, %s4
  %s7 = scalar_select 0, %s6, %s4
  loop: start=0, step=1, limit=34
  $region2: #{regular_conv_forward.3} parent=0 // loop_pre_header
    _
  $region3: #{regular_conv_forward.3} parent=0 // loop_header
    %s9 = sphi 0, %s13
    %p10 = scmp.ge.s32.totalorder %s9, 34
    %s16 = sphi 0, %s28
    %s17 = sphi 0, %s24
    %s18 = sphi 0, %s16
    %s19 = sphi 0, %s17
    %s20 = sphi 0, %s18
    %s21 = sphi 0, %s19
    %s33 = sphi 0, %s35
    %s36 = sphi 0, %s33
    %s37 = sphi 0, %s36
    %s53 = sphi 0, %s37
    %s57 = sphi 0, %s57
    %s59 = sphi 0, %s57
    %s60 = sphi 0, %s59
    %s74 = sphi 0, %s60
    %s78 = sphi 0, %s78
    %s80 = sphi 0, %s78
    %s81 = sphi 0, %s80
    %s95 = sphi 0, %s81
    %s103 = sphi 0, %s105
    %s106 = sphi 0, %s103
    %s107 = sphi 0, %s106
    %s123 = sphi 0, %s107
  $region4: #{regular_conv_forward.3} parent=0 // loop_header_branch
    %12 = sbr.rel (%p10) target = $region8
  $region5: #{regular_conv_forward.3} parent=0 // loop_body
    %s14 = ssub.s32 %s9, 1
    %s15 = ssub.s32 %s9, 2
    %s22 = sadd.s32 1, %s17
    %p23 = scmp.ge.s32.totalorder %s22, 16
    %s24 = scalar_select %p23, 0, %s22
    %s25 = sadd.s32 1, %s16
    %s26 = scalar_select %p23, %s25, %s16
    %p27 = scmp.ge.s32.totalorder %s26, 2
    %s28 = scalar_select %p27, 0, %s26
    %s29 = ssub.s32 %s16, %s28
    %s30 = ssub.s32 %s17, %s24
    %s31 = sor.u32 %s29, %s30
    %p32 = scmp.eq.s32.totalorder %s31, 0
    %s34 = sadd.s32 %s33, 1
    %s35 = scalar_select %p32, %s33, %s34
    %p38 = pneg %p32
    %p39 = scmp.eq.s32.totalorder %s9, 31
    %p40 = por %p38, %p39
    %p41 = scmp.ne.s32.totalorder %s33, %s36
    %p42 = scmp.eq.s32.totalorder %s9, 0
    %p43 = por %p41, %p42
    %p44 = scmp.ne.s32.totalorder %s33, %s36
    %p45 = scmp.eq.s32.totalorder %s14, 31
    %p46 = por %p44, %p45
    %p47 = scmp.ne.s32.totalorder %s36, %s37
    %p48 = scmp.eq.s32.totalorder %s14, 0
    %p49 = por %p47, %p48
    %p50 = scmp.ne.s32.totalorder %s36, %s37
    %p51 = scmp.eq.s32.totalorder %s15, 31
    %p52 = por %p50, %p51
    %p54 = scmp.ne.s32.totalorder %s37, %s53
    %p55 = scmp.eq.s32.totalorder %s15, 0
    %p56 = por %p54, %p55
    %s58 = sadd.s32 %s57, 1
    %p61 = scmp.eq.s32.totalorder %s9, 31
    %p62 = scmp.ne.s32.totalorder %s57, %s59
    %p63 = scmp.eq.s32.totalorder %s9, 0
    %p64 = por %p62, %p63
    %p65 = scmp.ne.s32.totalorder %s57, %s59
    %p66 = scmp.eq.s32.totalorder %s14, 31
    %p67 = por %p65, %p66
    %p68 = scmp.ne.s32.totalorder %s59, %s60
    %p69 = scmp.eq.s32.totalorder %s14, 0
    %p70 = por %p68, %p69
    %p71 = scmp.ne.s32.totalorder %s59, %s60
    %p72 = scmp.eq.s32.totalorder %s15, 31
    %p73 = por %p71, %p72
    %p75 = scmp.ne.s32.totalorder %s60, %s74
    %p76 = scmp.eq.s32.totalorder %s15, 0
    %p77 = por %p75, %p76
    %s79 = sadd.s32 %s78, 1
    %p82 = scmp.eq.s32.totalorder %s9, 31
    %p83 = scmp.ne.s32.totalorder %s78, %s80
    %p84 = scmp.eq.s32.totalorder %s9, 0
    %p85 = por %p83, %p84
    %p86 = scmp.ne.s32.totalorder %s78, %s80
    %p87 = scmp.eq.s32.totalorder %s14, 31
    %p88 = por %p86, %p87
    %p89 = scmp.ne.s32.totalorder %s80, %s81
    %p90 = scmp.eq.s32.totalorder %s14, 0
    %p91 = por %p89, %p90
    %p92 = scmp.ne.s32.totalorder %s80, %s81
    %p93 = scmp.eq.s32.totalorder %s15, 31
    %p94 = por %p92, %p93
    %p96 = scmp.ne.s32.totalorder %s81, %s95
    %p97 = scmp.eq.s32.totalorder %s15, 0
    %p98 = por %p96, %p97
    %s99 = ssub.s32 %s16, %s28
    %s100 = ssub.s32 %s17, %s24
    %s101 = sor.u32 %s99, %s100
    %p102 = scmp.eq.s32.totalorder %s101, 0
    %s104 = sadd.s32 %s103, 1
    %s105 = scalar_select %p102, %s103, %s104
    %p108 = pneg %p102
    %p109 = scmp.eq.s32.totalorder %s9, 31
    %p110 = por %p108, %p109
    %p111 = scmp.ne.s32.totalorder %s103, %s106
    %p112 = scmp.eq.s32.totalorder %s9, 0
    %p113 = por %p111, %p112
    %p114 = scmp.ne.s32.totalorder %s103, %s106
    %p115 = scmp.eq.s32.totalorder %s14, 31
    %p116 = por %p114, %p115
    %p117 = scmp.ne.s32.totalorder %s106, %s107
    %p118 = scmp.eq.s32.totalorder %s14, 0
    %p119 = por %p117, %p118
    %p120 = scmp.ne.s32.totalorder %s106, %s107
    %p121 = scmp.eq.s32.totalorder %s15, 31
    %p122 = por %p120, %p121
    %p124 = scmp.ne.s32.totalorder %s107, %s123
    %p125 = scmp.eq.s32.totalorder %s15, 0
    %p126 = por %p124, %p125
    %p127 = scmp.le.s32.totalorder 1, %s9
    %p128 = scmp.lt.s32.totalorder %s9, 33
    %p129 = pnand %p127, %p128
    %p130 = pneg %p129
    // Predicated region
    $region9: #{regular_conv_forward.3} parent=5 // pred_check
      _
    $region10: #{regular_conv_forward.3} parent=5 // pred_check_branch
      %132 = sbr.rel (%p129) target = $region12
    $region11: #{regular_conv_forward.3} parent=5 // pred_region
      %s133 = ssub.s32 %s9, 1
      // Predicated region
      $region13: #{regular_conv_forward.3} parent=11 // pred_check
        %p134 = pneg %p70
      $region14: #{regular_conv_forward.3} parent=11 // pred_check_branch
        %136 = sbr.rel (%p134) target = $region16
      $region15: #{regular_conv_forward.3} parent=11 // pred_region
        _
      $region16: #{regular_conv_forward.3} parent=11 // pred_fallthru
        _
      // Predicated region
      $region17: #{regular_conv_forward.3} parent=11 // pred_check
        %p137 = pneg %p91
      $region18: #{regular_conv_forward.3} parent=11 // pred_check_branch
        %139 = sbr.rel (%p137) target = $region20
      $region19: #{regular_conv_forward.3} parent=11 // pred_region
        _
      $region20: #{regular_conv_forward.3} parent=11 // pred_fallthru
        _
    $region12: #{regular_conv_forward.3} parent=5 // pred_fallthru
      _
    %p140 = scmp.lt.s32.totalorder %s9, 32
    // Predicated region
    $region21: #{regular_conv_forward.3} parent=5 // pred_check
      %p141 = pneg %p140
    $region22: #{regular_conv_forward.3} parent=5 // pred_check_branch
      %143 = sbr.rel (%p141) target = $region24
    $region23: #{regular_conv_forward.3} parent=5 // pred_region
      // Predicated region
      $region25: #{regular_conv_forward.3} parent=23 // pred_check
        %p144 = pneg %p43
      $region26: #{regular_conv_forward.3} parent=23 // pred_check_branch
        %146 = sbr.rel (%p144) target = $region28
      $region27: #{regular_conv_forward.3} parent=23 // pred_region
        %p147 = scmp.lt.s32.totalorder %s16, 1
        %s148 = scalar_select %p147, %s16, 1
        %p149 = scmp.lt.s32.totalorder %s17, 15
        %s150 = scalar_select %p149, %s17, 15
        %s151 = smul.addr %s150, 3
        %s152 = smul.addr %s148, 48
        %s153 = sadd.s32 %s151, %s152
        %s154 = smul.addr %s153, 4
        %s155 = scalar_lea.vmem %s0, %s154
      $region28: #{regular_conv_forward.3} parent=23 // pred_fallthru
        _
    $region24: #{regular_conv_forward.3} parent=5 // pred_fallthru
      _
    %p156 = scmp.le.s32.totalorder 1, %s9
    %p157 = scmp.lt.s32.totalorder %s9, 33
    %p158 = pnand %p156, %p157
    %p159 = pneg %p158
    // Predicated region
    $region29: #{regular_conv_forward.3} parent=5 // pred_check
      _
    $region30: #{regular_conv_forward.3} parent=5 // pred_check_branch
      %161 = sbr.rel (%p158) target = $region32
    $region31: #{regular_conv_forward.3} parent=5 // pred_region
      %s162 = ssub.s32 %s9, 1
      %p163 = scmp.lt.s32.totalorder %s18, 1
      %s164 = scalar_select %p163, %s18, 1
      %p165 = scmp.lt.s32.totalorder %s19, 15
      %s166 = scalar_select %p165, %s19, 15
      %s167 = smul.addr %s166, 3
      %s168 = smul.addr %s164, 48
      %s169 = sadd.s32 %s167, %s168
      %s170 = smul.addr %s169, 4
      %s171 = scalar_lea.vmem %s0, %s170
      %p172 = pneg %p49
      %p173 = pneg %p46
      %p174 = pneg %p70
      %p175 = pneg %p67
      %p176 = pneg %p91
      %p177 = pneg %p88
      %p178 = pneg %p119
      %p179 = pneg %p116
      %p180 = scmp.lt.s32.totalorder %s18, 1
      %s181 = scalar_select %p180, %s18, 1
      %p182 = scmp.lt.s32.totalorder %s19, 15
      %s183 = scalar_select %p182, %s19, 15
      %s184 = smul.addr %s183, 3
      %s185 = smul.addr %s181, 48
      %s186 = sadd.s32 %s184, %s185
      %s187 = smul.addr %s186, 4
      %s188 = scalar_lea.vmem %s3, %s187
      %p189 = scmp.lt.s32.totalorder %s18, 1
      %s190 = scalar_select %p189, %s18, 1
      %p191 = scmp.lt.s32.totalorder %s19, 15
      %s192 = scalar_select %p191, %s19, 15
      %s193 = smul.addr %s192, 3
      %s194 = smul.addr %s190, 48
      %s195 = sadd.s32 %s193, %s194
      %s196 = smul.addr %s195, 4
      %s197 = scalar_lea.vmem %s0, %s196
      %p198 = scmp.lt.s32.totalorder %s18, 1
      %s199 = scalar_select %p198, %s18, 1
      %p200 = scmp.lt.s32.totalorder %s19, 15
      %s201 = scalar_select %p200, %s19, 15
      %s202 = smul.addr %s201, 3
      %s203 = smul.addr %s199, 48
      %s204 = sadd.s32 %s202, %s203
      %s205 = smul.addr %s204, 4
      %s206 = scalar_lea.vmem %s3, %s205
      %v207 = vld [vmem:[%s197] sm:$0xff]
      %v208 = vld [vmem:[%s197 + $0x8] sm:$0xf]
      %v209 = vld [vmem:[%s1] sm:$0xf]
      %211 = vset.pattern.permute.xlu0 0
      %212 = vperm.xlu0 %211, %v209
      %v213 = vpop.permute.xlu0 %212
      %v215 = vunpack.c.l.s4 839922192
      %v216 = vunpack.c.0.s8 %v215
      %v217 = vlaneseq
      %v218 = vshrl.u32 %v217, 7
      %v219 = vsub.s32 %v216, %v218
      %v220 = vrot.slane %v213, %v219
      %v222 = vmul.f32 %v207, %v220
      %v223 = vmul.f32 %v208, %v220
      %v224 = vld [vmem:[%s2] sm:$0xf]
      %226 = vset.pattern.permute.xlu0 0
      %227 = vperm.xlu0 %226, %v224
      %v228 = vpop.permute.xlu0 %227
      %v230 = vunpack.c.l.s4 839922192
      %v231 = vunpack.c.0.s8 %v230
      %v232 = vlaneseq
      %v233 = vshrl.u32 %v232, 7
      %v234 = vsub.s32 %v231, %v233
      %v235 = vrot.slane %v228, %v234
      %v237 = vadd.f32 %v222, %v235
      %v238 = vadd.f32 %v223, %v235
      %v239 = vmax.f32 %v237, 0.0
      %v240 = vmax.f32 %v238, 0.0
      %241 = vst [vmem:[%s206] sm:$0xff] %v239
      %vm242 = vcmask 551936
      %243 = vst.msk [vmem:[%s206 + $0x8] sm:$0xf] %vm242, %v240
      %p244 = scmp.lt.s32.totalorder %s18, 1
      %s245 = scalar_select %p244, %s18, 1
      %p246 = scmp.lt.s32.totalorder %s19, 15
      %s247 = scalar_select %p246, %s19, 15
      %s248 = smul.addr %s247, 3
      %s249 = smul.addr %s245, 48
      %s250 = sadd.s32 %s248, %s249
      %s251 = smul.addr %s250, 4
      %s252 = scalar_lea.vmem %s3, %s251
      // Predicated region
      $region33: #{regular_conv_forward.3} parent=31 // pred_check
        %p253 = pneg %p116
      $region34: #{regular_conv_forward.3} parent=31 // pred_check_branch
        %255 = sbr.rel (%p253) target = $region36
      $region35: #{regular_conv_forward.3} parent=31 // pred_region
        _
      $region36: #{regular_conv_forward.3} parent=31 // pred_fallthru
        _
    $region32: #{regular_conv_forward.3} parent=5 // pred_fallthru
      _
    %p256 = scmp.le.s32.totalorder 2, %s9
    // Predicated region
    $region37: #{regular_conv_forward.3} parent=5 // pred_check
      %p257 = pneg %p256
    $region38: #{regular_conv_forward.3} parent=5 // pred_check_branch
      %259 = sbr.rel (%p257) target = $region40
    $region39: #{regular_conv_forward.3} parent=5 // pred_region
      %s260 = ssub.s32 %s9, 2
      // Predicated region
      $region41: #{regular_conv_forward.3} parent=39 // pred_check
        %p261 = pneg %p122
      $region42: #{regular_conv_forward.3} parent=39 // pred_check_branch
        %263 = sbr.rel (%p261) target = $region44
      $region43: #{regular_conv_forward.3} parent=39 // pred_region
        %p264 = scmp.lt.s32.totalorder %s20, 1
        %s265 = scalar_select %p264, %s20, 1
        %p266 = scmp.lt.s32.totalorder %s21, 15
        %s267 = scalar_select %p266, %s21, 15
        %s268 = smul.addr %s267, 3
        %s269 = smul.addr %s265, 48
        %s270 = sadd.s32 %s268, %s269
        %s271 = smul.addr %s270, 4
        %s272 = scalar_lea.vmem %s3, %s271
      $region44: #{regular_conv_forward.3} parent=39 // pred_fallthru
        _
    $region40: #{regular_conv_forward.3} parent=5 // pred_fallthru
      _
  $region6: #{regular_conv_forward.3} parent=0 // loop_footer
    %s13 = sadd.s32 1, %s9
  $region7: #{regular_conv_forward.3} parent=0 // loop_footer_branch
    %8 = sbr.rel target = $region3
  $region8: #{regular_conv_forward.3} parent=0 // loop_exit
    _

// kernel: regular_conv_forward.2
$region0: #{regular_conv_forward.2}
  #allocation0 [shape = 'u32[]', space=smem, size = 0x4, offset = 0x4, fixed_abs, tag = 'smem constant byte address 0x4 - core index']
  #allocation1 [shape = 'u32[144,128]{1,0:T(1,128)}', space=vmem, size = 0x12000, scoped, tag = 'internal scratch']
  %s0 = inlined_call_operand.vmem [shape: bf16[2,18,4,362], index: 0, kind: input, shape index: {}, may-alias: {0,1,2}]
  %s1 = inlined_call_operand.vmem [shape: bf16[2,18,4,362], index: 1, kind: input, shape index: {}, may-alias: {0,1,2}]
  %s2 = inlined_call_operand.vmem [shape: bf16[2,18,4,362], index: 2, kind: input, shape index: {}, may-alias: {0,1,2}]
  %s3 = inlined_call_operand.vmem [shape: bf16[27,4,4], index: 3, kind: input, shape index: {}]
  %s4 = inlined_call_operand.vmem [shape: f32[1,324], index: 4, kind: input, shape index: {}]
  %s5 = inlined_call_operand.vmem [shape: f32[2,16,4,324], index: 5, kind: output, shape index: {0}]
  %s6 = inlined_call_operand.vmem [shape: f32[2,16,4,1], index: 6, kind: output, shape index: {1}]
  %s7 = inlined_call_operand.vmem [shape: f32[2,16,4,1], index: 7, kind: output, shape index: {2}]
  %8 = xla_tuple %s5, %s6, %s7
  %s9 = sld [smem:[#allocation0]]
  $region69: #{regular_conv_forward.2} parent=0
    _
  %s11 = ssub.s32 1, %s9
  %s12 = scalar_select 0, %s11, %s9
  loop: start=0, step=1, limit=34
  $region2: #{regular_conv_forward.2} parent=0 // loop_pre_header
    _
  $region3: #{regular_conv_forward.2} parent=0 // loop_header
    %s14 = sphi 0, %s18
    %p15 = scmp.ge.s32.totalorder %s14, 34
    %s21 = sphi 0, %s33
    %s22 = sphi 0, %s29
    %s23 = sphi 0, %s21
    %s24 = sphi 0, %s22
    %s25 = sphi 0, %s23
    %s26 = sphi 0, %s24
    %s38 = sphi 0, %s40
    %s41 = sphi 0, %s38
    %s42 = sphi 0, %s41
    %s58 = sphi 0, %s42
    %s68 = sphi 0, %s70
    %s71 = sphi 0, %s68
    %s72 = sphi 0, %s71
    %s88 = sphi 0, %s72
    %s98 = sphi 0, %s100
    %s101 = sphi 0, %s98
    %s102 = sphi 0, %s101
    %s118 = sphi 0, %s102
    %s122 = sphi 0, %s122
    %s124 = sphi 0, %s122
    %s125 = sphi 0, %s124
    %s139 = sphi 0, %s125
    %s143 = sphi 0, %s143
    %s145 = sphi 0, %s143
    %s146 = sphi 0, %s145
    %s160 = sphi 0, %s146
    %s168 = sphi 0, %s170
    %s171 = sphi 0, %s168
    %s172 = sphi 0, %s171
    %s188 = sphi 0, %s172
    %s196 = sphi 0, %s198
    %s199 = sphi 0, %s196
    %s200 = sphi 0, %s199
    %s216 = sphi 0, %s200
    %s224 = sphi 0, %s226
    %s227 = sphi 0, %s224
    %s228 = sphi 0, %s227
    %s244 = sphi 0, %s228
  $region4: #{regular_conv_forward.2} parent=0 // loop_header_branch
    %17 = sbr.rel (%p15) target = $region8
  $region5: #{regular_conv_forward.2} parent=0 // loop_body
    %s19 = ssub.s32 %s14, 1
    %s20 = ssub.s32 %s14, 2
    %s27 = sadd.s32 1, %s22
    %p28 = scmp.ge.s32.totalorder %s27, 16
    %s29 = scalar_select %p28, 0, %s27
    %s30 = sadd.s32 1, %s21
    %s31 = scalar_select %p28, %s30, %s21
    %p32 = scmp.ge.s32.totalorder %s31, 2
    %s33 = scalar_select %p32, 0, %s31
    %s34 = ssub.s32 %s21, %s33
    %s35 = ssub.s32 %s22, %s29
    %s36 = sor.u32 %s34, %s35
    %p37 = scmp.eq.s32.totalorder %s36, 0
    %s39 = sadd.s32 %s38, 1
    %s40 = scalar_select %p37, %s38, %s39
    %p43 = pneg %p37
    %p44 = scmp.eq.s32.totalorder %s14, 31
    %p45 = por %p43, %p44
    %p46 = scmp.ne.s32.totalorder %s38, %s41
    %p47 = scmp.eq.s32.totalorder %s14, 0
    %p48 = por %p46, %p47
    %p49 = scmp.ne.s32.totalorder %s38, %s41
    %p50 = scmp.eq.s32.totalorder %s19, 31
    %p51 = por %p49, %p50
    %p52 = scmp.ne.s32.totalorder %s41, %s42
    %p53 = scmp.eq.s32.totalorder %s19, 0
    %p54 = por %p52, %p53
    %p55 = scmp.ne.s32.totalorder %s41, %s42
    %p56 = scmp.eq.s32.totalorder %s20, 31
    %p57 = por %p55, %p56
    %p59 = scmp.ne.s32.totalorder %s42, %s58
    %p60 = scmp.eq.s32.totalorder %s20, 0
    %p61 = por %p59, %p60
    %s62 = sadd.s32 %s22, 1
    %s63 = sadd.s32 %s29, 1
    %s64 = ssub.s32 %s21, %s33
    %s65 = ssub.s32 %s62, %s63
    %s66 = sor.u32 %s64, %s65
    %p67 = scmp.eq.s32.totalorder %s66, 0
    %s69 = sadd.s32 %s68, 1
    %s70 = scalar_select %p67, %s68, %s69
    %p73 = pneg %p67
    %p74 = scmp.eq.s32.totalorder %s14, 31
    %p75 = por %p73, %p74
    %p76 = scmp.ne.s32.totalorder %s68, %s71
    %p77 = scmp.eq.s32.totalorder %s14, 0
    %p78 = por %p76, %p77
    %p79 = scmp.ne.s32.totalorder %s68, %s71
    %p80 = scmp.eq.s32.totalorder %s19, 31
    %p81 = por %p79, %p80
    %p82 = scmp.ne.s32.totalorder %s71, %s72
    %p83 = scmp.eq.s32.totalorder %s19, 0
    %p84 = por %p82, %p83
    %p85 = scmp.ne.s32.totalorder %s71, %s72
    %p86 = scmp.eq.s32.totalorder %s20, 31
    %p87 = por %p85, %p86
    %p89 = scmp.ne.s32.totalorder %s72, %s88
    %p90 = scmp.eq.s32.totalorder %s20, 0
    %p91 = por %p89, %p90
    %s92 = sadd.s32 %s22, 2
    %s93 = sadd.s32 %s29, 2
    %s94 = ssub.s32 %s21, %s33
    %s95 = ssub.s32 %s92, %s93
    %s96 = sor.u32 %s94, %s95
    %p97 = scmp.eq.s32.totalorder %s96, 0
    %s99 = sadd.s32 %s98, 1
    %s100 = scalar_select %p97, %s98, %s99
    %p103 = pneg %p97
    %p104 = scmp.eq.s32.totalorder %s14, 31
    %p105 = por %p103, %p104
    %p106 = scmp.ne.s32.totalorder %s98, %s101
    %p107 = scmp.eq.s32.totalorder %s14, 0
    %p108 = por %p106, %p107
    %p109 = scmp.ne.s32.totalorder %s98, %s101
    %p110 = scmp.eq.s32.totalorder %s19, 31
    %p111 = por %p109, %p110
    %p112 = scmp.ne.s32.totalorder %s101, %s102
    %p113 = scmp.eq.s32.totalorder %s19, 0
    %p114 = por %p112, %p113
    %p115 = scmp.ne.s32.totalorder %s101, %s102
    %p116 = scmp.eq.s32.totalorder %s20, 31
    %p117 = por %p115, %p116
    %p119 = scmp.ne.s32.totalorder %s102, %s118
    %p120 = scmp.eq.s32.totalorder %s20, 0
    %p121 = por %p119, %p120
    %s123 = sadd.s32 %s122, 1
    %p126 = scmp.eq.s32.totalorder %s14, 31
    %p127 = scmp.ne.s32.totalorder %s122, %s124
    %p128 = scmp.eq.s32.totalorder %s14, 0
    %p129 = por %p127, %p128
    %p130 = scmp.ne.s32.totalorder %s122, %s124
    %p131 = scmp.eq.s32.totalorder %s19, 31
    %p132 = por %p130, %p131
    %p133 = scmp.ne.s32.totalorder %s124, %s125
    %p134 = scmp.eq.s32.totalorder %s19, 0
    %p135 = por %p133, %p134
    %p136 = scmp.ne.s32.totalorder %s124, %s125
    %p137 = scmp.eq.s32.totalorder %s20, 31
    %p138 = por %p136, %p137
    %p140 = scmp.ne.s32.totalorder %s125, %s139
    %p141 = scmp.eq.s32.totalorder %s20, 0
    %p142 = por %p140, %p141
    %s144 = sadd.s32 %s143, 1
    %p147 = scmp.eq.s32.totalorder %s14, 31
    %p148 = scmp.ne.s32.totalorder %s143, %s145
    %p149 = scmp.eq.s32.totalorder %s14, 0
    %p150 = por %p148, %p149
    %p151 = scmp.ne.s32.totalorder %s143, %s145
    %p152 = scmp.eq.s32.totalorder %s19, 31
    %p153 = por %p151, %p152
    %p154 = scmp.ne.s32.totalorder %s145, %s146
    %p155 = scmp.eq.s32.totalorder %s19, 0
    %p156 = por %p154, %p155
    %p157 = scmp.ne.s32.totalorder %s145, %s146
    %p158 = scmp.eq.s32.totalorder %s20, 31
    %p159 = por %p157, %p158
    %p161 = scmp.ne.s32.totalorder %s146, %s160
    %p162 = scmp.eq.s32.totalorder %s20, 0
    %p163 = por %p161, %p162
    %s164 = ssub.s32 %s21, %s33
    %s165 = ssub.s32 %s22, %s29
    %s166 = sor.u32 %s164, %s165
    %p167 = scmp.eq.s32.totalorder %s166, 0
    %s169 = sadd.s32 %s168, 1
    %s170 = scalar_select %p167, %s168, %s169
    %p173 = pneg %p167
    %p174 = scmp.eq.s32.totalorder %s14, 31
    %p175 = por %p173, %p174
    %p176 = scmp.ne.s32.totalorder %s168, %s171
    %p177 = scmp.eq.s32.totalorder %s14, 0
    %p178 = por %p176, %p177
    %p179 = scmp.ne.s32.totalorder %s168, %s171
    %p180 = scmp.eq.s32.totalorder %s19, 31
    %p181 = por %p179, %p180
    %p182 = scmp.ne.s32.totalorder %s171, %s172
    %p183 = scmp.eq.s32.totalorder %s19, 0
    %p184 = por %p182, %p183
    %p185 = scmp.ne.s32.totalorder %s171, %s172
    %p186 = scmp.eq.s32.totalorder %s20, 31
    %p187 = por %p185, %p186
    %p189 = scmp.ne.s32.totalorder %s172, %s188
    %p190 = scmp.eq.s32.totalorder %s20, 0
    %p191 = por %p189, %p190
    %s192 = ssub.s32 %s21, %s33
    %s193 = ssub.s32 %s22, %s29
    %s194 = sor.u32 %s192, %s193
    %p195 = scmp.eq.s32.totalorder %s194, 0
    %s197 = sadd.s32 %s196, 1
    %s198 = scalar_select %p195, %s196, %s197
    %p201 = pneg %p195
    %p202 = scmp.eq.s32.totalorder %s14, 31
    %p203 = por %p201, %p202
    %p204 = scmp.ne.s32.totalorder %s196, %s199
    %p205 = scmp.eq.s32.totalorder %s14, 0
    %p206 = por %p204, %p205
    %p207 = scmp.ne.s32.totalorder %s196, %s199
    %p208 = scmp.eq.s32.totalorder %s19, 31
    %p209 = por %p207, %p208
    %p210 = scmp.ne.s32.totalorder %s199, %s200
    %p211 = scmp.eq.s32.totalorder %s19, 0
    %p212 = por %p210, %p211
    %p213 = scmp.ne.s32.totalorder %s199, %s200
    %p214 = scmp.eq.s32.totalorder %s20, 31
    %p215 = por %p213, %p214
    %p217 = scmp.ne.s32.totalorder %s200, %s216
    %p218 = scmp.eq.s32.totalorder %s20, 0
    %p219 = por %p217, %p218
    %s220 = ssub.s32 %s21, %s33
    %s221 = ssub.s32 %s22, %s29
    %s222 = sor.u32 %s220, %s221
    %p223 = scmp.eq.s32.totalorder %s222, 0
    %s225 = sadd.s32 %s224, 1
    %s226 = scalar_select %p223, %s224, %s225
    %p229 = pneg %p223
    %p230 = scmp.eq.s32.totalorder %s14, 31
    %p231 = por %p229, %p230
    %p232 = scmp.ne.s32.totalorder %s224, %s227
    %p233 = scmp.eq.s32.totalorder %s14, 0
    %p234 = por %p232, %p233
    %p235 = scmp.ne.s32.totalorder %s224, %s227
    %p236 = scmp.eq.s32.totalorder %s19, 31
    %p237 = por %p235, %p236
    %p238 = scmp.ne.s32.totalorder %s227, %s228
    %p239 = scmp.eq.s32.totalorder %s19, 0
    %p240 = por %p238, %p239
    %p241 = scmp.ne.s32.totalorder %s227, %s228
    %p242 = scmp.eq.s32.totalorder %s20, 31
    %p243 = por %p241, %p242
    %p245 = scmp.ne.s32.totalorder %s228, %s244
    %p246 = scmp.eq.s32.totalorder %s20, 0
    %p247 = por %p245, %p246
    %p248 = scmp.le.s32.totalorder 1, %s14
    %p249 = scmp.lt.s32.totalorder %s14, 33
    %p250 = pnand %p248, %p249
    %p251 = pneg %p250
    // Predicated region
    $region9: #{regular_conv_forward.2} parent=5 // pred_check
      _
    $region10: #{regular_conv_forward.2} parent=5 // pred_check_branch
      %253 = sbr.rel (%p250) target = $region12
    $region11: #{regular_conv_forward.2} parent=5 // pred_region
      %s254 = ssub.s32 %s14, 1
      // Predicated region
      $region13: #{regular_conv_forward.2} parent=11 // pred_check
        %p255 = pneg %p135
      $region14: #{regular_conv_forward.2} parent=11 // pred_check_branch
        %257 = sbr.rel (%p255) target = $region16
      $region15: #{regular_conv_forward.2} parent=11 // pred_region
        _
      $region16: #{regular_conv_forward.2} parent=11 // pred_fallthru
        _
      // Predicated region
      $region17: #{regular_conv_forward.2} parent=11 // pred_check
        %p258 = pneg %p156
      $region18: #{regular_conv_forward.2} parent=11 // pred_check_branch
        %260 = sbr.rel (%p258) target = $region20
      $region19: #{regular_conv_forward.2} parent=11 // pred_region
        _
      $region20: #{regular_conv_forward.2} parent=11 // pred_fallthru
        _
    $region12: #{regular_conv_forward.2} parent=5 // pred_fallthru
      _
    %p261 = scmp.lt.s32.totalorder %s14, 32
    // Predicated region
    $region21: #{regular_conv_forward.2} parent=5 // pred_check
      %p262 = pneg %p261
    $region22: #{regular_conv_forward.2} parent=5 // pred_check_branch
      %264 = sbr.rel (%p262) target = $region24
    $region23: #{regular_conv_forward.2} parent=5 // pred_region
      // Predicated region
      $region25: #{regular_conv_forward.2} parent=23 // pred_check
        %p265 = pneg %p48
      $region26: #{regular_conv_forward.2} parent=23 // pred_check_branch
        %267 = sbr.rel (%p265) target = $region28
      $region27: #{regular_conv_forward.2} parent=23 // pred_region
        %p268 = scmp.lt.s32.totalorder %s21, 1
        %s269 = scalar_select %p268, %s21, 1
        %p270 = scmp.lt.s32.totalorder %s22, 17
        %s271 = scalar_select %p270, %s22, 17
        %s272 = smul.addr %s271, 3
        %s273 = smul.addr %s269, 54
        %s274 = sadd.s32 %s272, %s273
        %s275 = smul.addr %s274, 2
        %s276 = scalar_lea.vmem %s0, %s275
      $region28: #{regular_conv_forward.2} parent=23 // pred_fallthru
        _
      // Predicated region
      $region29: #{regular_conv_forward.2} parent=23 // pred_check
        %p277 = pneg %p78
      $region30: #{regular_conv_forward.2} parent=23 // pred_check_branch
        %279 = sbr.rel (%p277) target = $region32
      $region31: #{regular_conv_forward.2} parent=23 // pred_region
        %s280 = sadd.s32 %s22, 1
        %p281 = scmp.lt.s32.totalorder %s21, 1
        %s282 = scalar_select %p281, %s21, 1
        %p283 = scmp.lt.s32.totalorder %s280, 17
        %s284 = scalar_select %p283, %s280, 17
        %s285 = smul.addr %s284, 3
        %s286 = smul.addr %s282, 54
        %s287 = sadd.s32 %s285, %s286
        %s288 = smul.addr %s287, 2
        %s289 = scalar_lea.vmem %s1, %s288
        %s290 = sadd.s32 %s22, 1
      $region32: #{regular_conv_forward.2} parent=23 // pred_fallthru
        _
      // Predicated region
      $region33: #{regular_conv_forward.2} parent=23 // pred_check
        %p291 = pneg %p108
      $region34: #{regular_conv_forward.2} parent=23 // pred_check_branch
        %293 = sbr.rel (%p291) target = $region36
      $region35: #{regular_conv_forward.2} parent=23 // pred_region
        %s294 = sadd.s32 %s22, 2
        %p295 = scmp.lt.s32.totalorder %s21, 1
        %s296 = scalar_select %p295, %s21, 1
        %p297 = scmp.lt.s32.totalorder %s294, 17
        %s298 = scalar_select %p297, %s294, 17
        %s299 = smul.addr %s298, 3
        %s300 = smul.addr %s296, 54
        %s301 = sadd.s32 %s299, %s300
        %s302 = smul.addr %s301, 2
        %s303 = scalar_lea.vmem %s2, %s302
        %s304 = sadd.s32 %s22, 2
      $region36: #{regular_conv_forward.2} parent=23 // pred_fallthru
        _
    $region24: #{regular_conv_forward.2} parent=5 // pred_fallthru
      _
    %p305 = scmp.le.s32.totalorder 1, %s14
    %p306 = scmp.lt.s32.totalorder %s14, 33
    %p307 = pnand %p305, %p306
    %p308 = pneg %p307
    // Predicated region
    $region37: #{regular_conv_forward.2} parent=5 // pred_check
      _
    $region38: #{regular_conv_forward.2} parent=5 // pred_check_branch
      %310 = sbr.rel (%p307) target = $region40
    $region39: #{regular_conv_forward.2} parent=5 // pred_region
      %s311 = ssub.s32 %s14, 1
      %p312 = scmp.lt.s32.totalorder %s23, 1
      %s313 = scalar_select %p312, %s23, 1
      %p314 = scmp.lt.s32.totalorder %s24, 17
      %s315 = scalar_select %p314, %s24, 17
      %s316 = smul.addr %s315, 3
      %s317 = smul.addr %s313, 54
      %s318 = sadd.s32 %s316, %s317
      %s319 = smul.addr %s318, 2
      %s320 = scalar_lea.vmem %s0, %s319
      %p321 = pneg %p54
      %p322 = pneg %p51
      %s323 = sadd.s32 %s24, 1
      %p324 = scmp.lt.s32.totalorder %s23, 1
      %s325 = scalar_select %p324, %s23, 1
      %p326 = scmp.lt.s32.totalorder %s323, 17
      %s327 = scalar_select %p326, %s323, 17
      %s328 = smul.addr %s327, 3
      %s329 = smul.addr %s325, 54
      %s330 = sadd.s32 %s328, %s329
      %s331 = smul.addr %s330, 2
      %s332 = scalar_lea.vmem %s1, %s331
      %p333 = pneg %p84
      %p334 = pneg %p81
      %s335 = sadd.s32 %s24, 2
      %p336 = scmp.lt.s32.totalorder %s23, 1
      %s337 = scalar_select %p336, %s23, 1
      %p338 = scmp.lt.s32.totalorder %s335, 17
      %s339 = scalar_select %p338, %s335, 17
      %s340 = smul.addr %s339, 3
      %s341 = smul.addr %s337, 54
      %s342 = sadd.s32 %s340, %s341
      %s343 = smul.addr %s342, 2
      %s344 = scalar_lea.vmem %s2, %s343
      %p345 = pneg %p114
      %p346 = pneg %p111
      %p347 = pneg %p135
      %p348 = pneg %p132
      %p349 = pneg %p156
      %p350 = pneg %p153
      %p351 = pneg %p184
      %p352 = pneg %p181
      %p353 = scmp.lt.s32.totalorder %s23, 1
      %s354 = scalar_select %p353, %s23, 1
      %p355 = scmp.lt.s32.totalorder %s24, 15
      %s356 = scalar_select %p355, %s24, 15
      %s357 = smul.addr %s356, 3
      %s358 = smul.addr %s354, 48
      %s359 = sadd.s32 %s357, %s358
      %s360 = smul.addr %s359, 4
      %s361 = scalar_lea.vmem %s5, %s360
      %p362 = pneg %p212
      %p363 = pneg %p209
      %p364 = scmp.lt.s32.totalorder %s23, 1
      %s365 = scalar_select %p364, %s23, 1
      %p366 = scmp.lt.s32.totalorder %s24, 15
      %s367 = scalar_select %p366, %s24, 15
      %s368 = smul.addr %s365, 16
      %s369 = sadd.s32 %s367, %s368
      %s370 = smul.addr %s369, 4
      %s371 = scalar_lea.vmem %s6, %s370
      %p372 = pneg %p240
      %p373 = pneg %p237
      %p374 = scmp.lt.s32.totalorder %s23, 1
      %s375 = scalar_select %p374, %s23, 1
      %p376 = scmp.lt.s32.totalorder %s24, 15
      %s377 = scalar_select %p376, %s24, 15
      %s378 = smul.addr %s375, 16
      %s379 = sadd.s32 %s377, %s378
      %s380 = smul.addr %s379, 4
      %s381 = scalar_lea.vmem %s7, %s380
      %p382 = scmp.lt.s32.totalorder %s23, 1
      %s383 = scalar_select %p382, %s23, 1
      %p384 = scmp.lt.s32.totalorder %s24, 17
      %s385 = scalar_select %p384, %s24, 17
      %s386 = smul.addr %s385, 3
      %s387 = smul.addr %s383, 54
      %s388 = sadd.s32 %s386, %s387
      %s389 = smul.addr %s388, 2
      %s390 = scalar_lea.vmem %s0, %s389
      %s391 = sadd.s32 %s24, 1
      %p392 = scmp.lt.s32.totalorder %s23, 1
      %s393 = scalar_select %p392, %s23, 1
      %p394 = scmp.lt.s32.totalorder %s391, 17
      %s395 = scalar_select %p394, %s391, 17
      %s396 = smul.addr %s395, 3
      %s397 = smul.addr %s393, 54
      %s398 = sadd.s32 %s396, %s397
      %s399 = smul.addr %s398, 2
      %s400 = scalar_lea.vmem %s1, %s399
      %s401 = sadd.s32 %s24, 1
      %s402 = sadd.s32 %s24, 2
      %p403 = scmp.lt.s32.totalorder %s23, 1
      %s404 = scalar_select %p403, %s23, 1
      %p405 = scmp.lt.s32.totalorder %s402, 17
      %s406 = scalar_select %p405, %s402, 17
      %s407 = smul.addr %s406, 3
      %s408 = smul.addr %s404, 54
      %s409 = sadd.s32 %s407, %s408
      %s410 = smul.addr %s409, 2
      %s411 = scalar_lea.vmem %s2, %s410
      %s412 = sadd.s32 %s24, 2
      %p413 = scmp.lt.s32.totalorder %s23, 1
      %s414 = scalar_select %p413, %s23, 1
      %p415 = scmp.lt.s32.totalorder %s24, 15
      %s416 = scalar_select %p415, %s24, 15
      %s417 = smul.addr %s416, 3
      %s418 = smul.addr %s414, 48
      %s419 = sadd.s32 %s417, %s418
      %s420 = smul.addr %s419, 4
      %s421 = scalar_lea.vmem %s5, %s420
      %p422 = scmp.lt.s32.totalorder %s23, 1
      %s423 = scalar_select %p422, %s23, 1
      %p424 = scmp.lt.s32.totalorder %s24, 15
      %s425 = scalar_select %p424, %s24, 15
      %s426 = smul.addr %s423, 16
      %s427 = sadd.s32 %s425, %s426
      %s428 = smul.addr %s427, 4
      %s429 = scalar_lea.vmem %s6, %s428
      %p430 = scmp.lt.s32.totalorder %s23, 1
      %s431 = scalar_select %p430, %s23, 1
      %p432 = scmp.lt.s32.totalorder %s24, 15
      %s433 = scalar_select %p432, %s24, 15
      %s434 = smul.addr %s431, 16
      %s435 = sadd.s32 %s433, %s434
      %s436 = smul.addr %s435, 4
      %s437 = scalar_lea.vmem %s7, %s436
      %v439 = vld [vmem:[%s390] sm:$0x3f]
      %v440 = vld [vmem:[%s400] sm:$0x3f]
      %v441 = vld [vmem:[%s411] sm:$0x3f]
      %v442 = vld [vmem:[%s3] sm:$0x3]
      %s443 = scalar_lea.vmem %s3, 2
      %v444 = vld [vmem:[%s443] sm:$0x3]
      %v446 = vcombine.high %v439, %v439
      %v448 = vunpack.c.l.s4 1983009808
      %v449 = vunpack.c.0.s8 %v448
      %v450 = vlaneseq
      %v451 = vshrl.u32 %v450, 7
      %v452 = vsub.s32 %v449, %v451
      %v453 = vrot.slane %v439, %v452
      %v455 = vunpack.c.l.s4 1983009808
      %v456 = vunpack.c.0.s8 %v455
      %v457 = vlaneseq
      %v458 = vshrl.u32 %v457, 7
      %v459 = vsub.s32 %v456, %v458
      %v460 = vrot.slane %v446, %v459
      %v461 = vcombine.high %v453, %v453
      %462 = vrot.lane.b32.xlu0 %v453, 127
      %v463 = vpop.permute.xlu0 %462
      %464 = vrot.lane.b32.xlu0 %v461, 127
      %v465 = vpop.permute.xlu0 %464
      %466 = vrot.lane.b32.xlu0 %v460, 127
      %v467 = vpop.permute.xlu0 %466
      %vm468 = vcmask 1039360
      %v469 = vsel %vm468, %v463, %v465
      %v470 = vsel %vm468, %v465, %v467
      %vm471 = vcmask 31744
      %v473 = vsel %vm471, %v444, 0
      %vm475 = vcmask 1041408
      %v477 = vsel %vm475, %v469, 0
      %v480 = vsel %vm475, %v470, 0
      %v483 = vsel %vm475, %v467, 0
      %485 = vmatprep.subr.bf16.mxu0 %v480
      %486 = vmatpush1.bf16.msra.mxu0 %v477
      %487 = vmatprep.subr.bf16.mxu0 0
      %488 = vmatpush1.bf16.msra.mxu0 0
      %489 = vmatprep.subr.bf16.mxu0 0
      %490 = vmatpush1.bf16.msra.mxu0 0
      %491 = vmatprep.subr.bf16.mxu0 0
      %492 = vmatpush1.bf16.msra.mxu0 0
      %493 = vmatprep.subr.bf16.mxu0 0
      %494 = vmatpush1.bf16.msra.mxu0 0
      %495 = vmatprep.subr.bf16.mxu0 0
      %496 = vmatpush1.bf16.msra.mxu0 0
      %497 = vmatprep.subr.bf16.mxu0 0
      %498 = vmatpush1.bf16.msra.mxu0 0
      %499 = vmatprep.subr.bf16.mxu0 0
      %500 = vmatpush1.bf16.msra.mxu0 0
      %501 = vmatprep.subr.bf16.mxu0 0
      %502 = vmatpush1.bf16.msra.mxu0 0
      %503 = vmatprep.subr.bf16.mxu0 0
      %504 = vmatpush1.bf16.msra.mxu0 0
      %505 = vmatprep.subr.bf16.mxu0 0
      %506 = vmatpush1.bf16.msra.mxu0 0
      %507 = vmatprep.subr.bf16.mxu0 0
      %508 = vmatpush1.bf16.msra.mxu0 0
      %509 = vmatprep.subr.bf16.mxu0 0
      %510 = vmatpush1.bf16.msra.mxu0 0
      %511 = vmatprep.subr.bf16.mxu0 0
      %512 = vmatpush1.bf16.msra.mxu0 0
      %513 = vmatprep.subr.bf16.mxu0 0
      %514 = vmatpush1.bf16.msra.mxu0 0
      %515 = vmatprep.subr.bf16.mxu0 0
      %516 = vmatpush1.bf16.msra.mxu0 0
      %517 = vmatprep.mubr.bf16.mxu0 0
      %518 = vmatmul.mubr.bf16.gmra.mrb[0].mxu0 %v473
      %v519 = vpop.f32.mrb[0].mxu0
      %v520 = vadd.f32 0.0, %v519
      %v521 = vpop.f32.mrb[0].mxu0
      %v522 = vadd.f32 0.0, %v521
      %v523 = vpop.f32.mrb[0].mxu0
      %v524 = vpop.f32.mrb[0].mxu0
      %525 = vdwg.mxu0
      %526 = vmatprep.subr.bf16.mxu0 0
      %527 = vmatpush1.bf16.msra.mxu0 %v483
      %528 = vmatprep.subr.bf16.mxu0 0
      %529 = vmatpush1.bf16.msra.mxu0 0
      %530 = vmatprep.subr.bf16.mxu0 0
      %531 = vmatpush1.bf16.msra.mxu0 0
      %532 = vmatprep.subr.bf16.mxu0 0
      %533 = vmatpush1.bf16.msra.mxu0 0
      %534 = vmatprep.subr.bf16.mxu0 0
      %535 = vmatpush1.bf16.msra.mxu0 0
      %536 = vmatprep.subr.bf16.mxu0 0
      %537 = vmatpush1.bf16.msra.mxu0 0
      %538 = vmatprep.subr.bf16.mxu0 0
      %539 = vmatpush1.bf16.msra.mxu0 0
      %540 = vmatprep.subr.bf16.mxu0 0
      %541 = vmatpush1.bf16.msra.mxu0 0
      %542 = vmatprep.subr.bf16.mxu0 0
      %543 = vmatpush1.bf16.msra.mxu0 0
      %544 = vmatprep.subr.bf16.mxu0 0
      %545 = vmatpush1.bf16.msra.mxu0 0
      %546 = vmatprep.subr.bf16.mxu0 0
      %547 = vmatpush1.bf16.msra.mxu0 0
      %548 = vmatprep.subr.bf16.mxu0 0
      %549 = vmatpush1.bf16.msra.mxu0 0
      %550 = vmatprep.subr.bf16.mxu0 0
      %551 = vmatpush1.bf16.msra.mxu0 0
      %552 = vmatprep.subr.bf16.mxu0 0
      %553 = vmatpush1.bf16.msra.mxu0 0
      %554 = vmatprep.subr.bf16.mxu0 0
      %555 = vmatpush1.bf16.msra.mxu0 0
      %556 = vmatprep.subr.bf16.mxu0 0
      %557 = vmatpush1.bf16.msra.mxu0 0
      %558 = vmatprep.mubr.bf16.mxu0 0
      %559 = vmatmul.mubr.bf16.gmra.mrb[0].mxu0 %v473
      %v560 = vpop.f32.mrb[0].mxu0
      %v561 = vadd.f32 0.0, %v560
      %v562 = vpop.f32.mrb[0].mxu0
      %v563 = vpop.f32.mrb[0].mxu0
      %v564 = vpop.f32.mrb[0].mxu0
      %565 = vdwg.mxu0
      %v567 = vsel %vm471, %v442, 0
      %v570 = vsel %vm475, %v453, 0
      %v573 = vsel %vm475, %v461, 0
      %v576 = vsel %vm475, %v460, 0
      %578 = vmatprep.subr.bf16.mxu0 %v573
      %579 = vmatpush1.bf16.msra.mxu0 %v570
      %580 = vmatprep.subr.bf16.mxu0 0
      %581 = vmatpush1.bf16.msra.mxu0 0
      %582 = vmatprep.subr.bf16.mxu0 0
      %583 = vmatpush1.bf16.msra.mxu0 0
      %584 = vmatprep.subr.bf16.mxu0 0
      %585 = vmatpush1.bf16.msra.mxu0 0
      %586 = vmatprep.subr.bf16.mxu0 0
      %587 = vmatpush1.bf16.msra.mxu0 0
      %588 = vmatprep.subr.bf16.mxu0 0
      %589 = vmatpush1.bf16.msra.mxu0 0
      %590 = vmatprep.subr.bf16.mxu0 0
      %591 = vmatpush1.bf16.msra.mxu0 0
      %592 = vmatprep.subr.bf16.mxu0 0
      %593 = vmatpush1.bf16.msra.mxu0 0
      %594 = vmatprep.subr.bf16.mxu0 0
      %595 = vmatpush1.bf16.msra.mxu0 0
      %596 = vmatprep.subr.bf16.mxu0 0
      %597 = vmatpush1.bf16.msra.mxu0 0
      %598 = vmatprep.subr.bf16.mxu0 0
      %599 = vmatpush1.bf16.msra.mxu0 0
      %600 = vmatprep.subr.bf16.mxu0 0
      %601 = vmatpush1.bf16.msra.mxu0 0
      %602 = vmatprep.subr.bf16.mxu0 0
      %603 = vmatpush1.bf16.msra.mxu0 0
      %604 = vmatprep.subr.bf16.mxu0 0
      %605 = vmatpush1.bf16.msra.mxu0 0
      %606 = vmatprep.subr.bf16.mxu0 0
      %607 = vmatpush1.bf16.msra.mxu0 0
      %608 = vmatprep.subr.bf16.mxu0 0
      %609 = vmatpush1.bf16.msra.mxu0 0
      %610 = vmatprep.mubr.bf16.mxu0 0
      %611 = vmatmul.mubr.bf16.gmra.mrb[0].mxu0 %v567
      %v612 = vpop.f32.mrb[0].mxu0
      %v613 = vadd.f32 %v520, %v612
      %v614 = vpop.f32.mrb[0].mxu0
      %v615 = vadd.f32 %v522, %v614
      %v616 = vpop.f32.mrb[0].mxu0
      %v617 = vpop.f32.mrb[0].mxu0
      %618 = vdwg.mxu0
      %619 = vmatprep.subr.bf16.mxu0 0
      %620 = vmatpush1.bf16.msra.mxu0 %v576
      %621 = vmatprep.subr.bf16.mxu0 0
      %622 = vmatpush1.bf16.msra.mxu0 0
      %623 = vmatprep.subr.bf16.mxu0 0
      %624 = vmatpush1.bf16.msra.mxu0 0
      %625 = vmatprep.subr.bf16.mxu0 0
      %626 = vmatpush1.bf16.msra.mxu0 0
      %627 = vmatprep.subr.bf16.mxu0 0
      %628 = vmatpush1.bf16.msra.mxu0 0
      %629 = vmatprep.subr.bf16.mxu0 0
      %630 = vmatpush1.bf16.msra.mxu0 0
      %631 = vmatprep.subr.bf16.mxu0 0
      %632 = vmatpush1.bf16.msra.mxu0 0
      %633 = vmatprep.subr.bf16.mxu0 0
      %634 = vmatpush1.bf16.msra.mxu0 0
      %635 = vmatprep.subr.bf16.mxu0 0
      %636 = vmatpush1.bf16.msra.mxu0 0
      %637 = vmatprep.subr.bf16.mxu0 0
      %638 = vmatpush1.bf16.msra.mxu0 0
      %639 = vmatprep.subr.bf16.mxu0 0
      %640 = vmatpush1.bf16.msra.mxu0 0
      %641 = vmatprep.subr.bf16.mxu0 0
      %642 = vmatpush1.bf16.msra.mxu0 0
      %643 = vmatprep.subr.bf16.mxu0 0
      %644 = vmatpush1.bf16.msra.mxu0 0
      %645 = vmatprep.subr.bf16.mxu0 0
      %646 = vmatpush1.bf16.msra.mxu0 0
      %647 = vmatprep.subr.bf16.mxu0 0
      %648 = vmatpush1.bf16.msra.mxu0 0
      %649 = vmatprep.subr.bf16.mxu0 0
      %650 = vmatpush1.bf16.msra.mxu0 0
      %651 = vmatprep.mubr.bf16.mxu0 0
      %652 = vmatmul.mubr.bf16.gmra.mrb[0].mxu0 %v567
      %v653 = vpop.f32.mrb[0].mxu0
      %v654 = vadd.f32 %v561, %v653
      %v655 = vpop.f32.mrb[0].mxu0
      %v656 = vpop.f32.mrb[0].mxu0
      %v657 = vpop.f32.mrb[0].mxu0
      %658 = vdwg.mxu0
      %s659 = scalar_lea.vmem %s3, 4
      %v660 = vld [vmem:[%s659] sm:$0x3]
      %661 = vrot.lane.b32.xlu0 %v453, 126
      %v662 = vpop.permute.xlu0 %661
      %663 = vrot.lane.b32.xlu0 %v461, 126
      %v664 = vpop.permute.xlu0 %663
      %665 = vrot.lane.b32.xlu0 %v460, 126
      %v666 = vpop.permute.xlu0 %665
      %vm667 = vcmask 1031168
      %v668 = vsel %vm667, %v662, %v664
      %v669 = vsel %vm667, %v664, %v666
      %v671 = vsel %vm471, %v660, 0
      %v674 = vsel %vm475, %v668, 0
      %v677 = vsel %vm475, %v669, 0
      %v680 = vsel %vm475, %v666, 0
      %682 = vmatprep.subr.bf16.mxu0 %v677
      %683 = vmatpush1.bf16.msra.mxu0 %v674
      %684 = vmatprep.subr.bf16.mxu0 0
      %685 = vmatpush1.bf16.msra.mxu0 0
      %686 = vmatprep.subr.bf16.mxu0 0
      %687 = vmatpush1.bf16.msra.mxu0 0
      %688 = vmatprep.subr.bf16.mxu0 0
      %689 = vmatpush1.bf16.msra.mxu0 0
      %690 = vmatprep.subr.bf16.mxu0 0
      %691 = vmatpush1.bf16.msra.mxu0 0
      %692 = vmatprep.subr.bf16.mxu0 0
      %693 = vmatpush1.bf16.msra.mxu0 0
      %694 = vmatprep.subr.bf16.mxu0 0
      %695 = vmatpush1.bf16.msra.mxu0 0
      %696 = vmatprep.subr.bf16.mxu0 0
      %697 = vmatpush1.bf16.msra.mxu0 0
      %698 = vmatprep.subr.bf16.mxu0 0
      %699 = vmatpush1.bf16.msra.mxu0 0
      %700 = vmatprep.subr.bf16.mxu0 0
      %701 = vmatpush1.bf16.msra.mxu0 0
      %702 = vmatprep.subr.bf16.mxu0 0
      %703 = vmatpush1.bf16.msra.mxu0 0
      %704 = vmatprep.subr.bf16.mxu0 0
      %705 = vmatpush1.bf16.msra.mxu0 0
      %706 = vmatprep.subr.bf16.mxu0 0
      %707 = vmatpush1.bf16.msra.mxu0 0
      %708 = vmatprep.subr.bf16.mxu0 0
      %709 = vmatpush1.bf16.msra.mxu0 0
      %710 = vmatprep.subr.bf16.mxu0 0
      %711 = vmatpush1.bf16.msra.mxu0 0
      %712 = vmatprep.subr.bf16.mxu0 0
      %713 = vmatpush1.bf16.msra.mxu0 0
      %714 = vmatprep.mubr.bf16.mxu0 0
      %715 = vmatmul.mubr.bf16.gmra.mrb[0].mxu0 %v671
      %v716 = vpop.f32.mrb[0].mxu0
      %v717 = vadd.f32 0.0, %v716
      %v718 = vpop.f32.mrb[0].mxu0
      %v719 = vadd.f32 0.0, %v718
      %v720 = vpop.f32.mrb[0].mxu0
      %v721 = vpop.f32.mrb[0].mxu0
      %722 = vdwg.mxu0
      %723 = vmatprep.subr.bf16.mxu0 0
      %724 = vmatpush1.bf16.msra.mxu0 %v680
      %725 = vmatprep.subr.bf16.mxu0 0
      %726 = vmatpush1.bf16.msra.mxu0 0
      %727 = vmatprep.subr.bf16.mxu0 0
      %728 = vmatpush1.bf16.msra.mxu0 0
      %729 = vmatprep.subr.bf16.mxu0 0
      %730 = vmatpush1.bf16.msra.mxu0 0
      %731 = vmatprep.subr.bf16.mxu0 0
      %732 = vmatpush1.bf16.msra.mxu0 0
      %733 = vmatprep.subr.bf16.mxu0 0
      %734 = vmatpush1.bf16.msra.mxu0 0
      %735 = vmatprep.subr.bf16.mxu0 0
      %736 = vmatpush1.bf16.msra.mxu0 0
      %737 = vmatprep.subr.bf16.mxu0 0
      %738 = vmatpush1.bf16.msra.mxu0 0
      %739 = vmatprep.subr.bf16.mxu0 0
      %740 = vmatpush1.bf16.msra.mxu0 0
      %741 = vmatprep.subr.bf16.mxu0 0
      %742 = vmatpush1.bf16.msra.mxu0 0
      %743 = vmatprep.subr.bf16.mxu0 0
      %744 = vmatpush1.bf16.msra.mxu0 0
      %745 = vmatprep.subr.bf16.mxu0 0
      %746 = vmatpush1.bf16.msra.mxu0 0
      %747 = vmatprep.subr.bf16.mxu0 0
      %748 = vmatpush1.bf16.msra.mxu0 0
      %749 = vmatprep.subr.bf16.mxu0 0
      %750 = vmatpush1.bf16.msra.mxu0 0
      %751 = vmatprep.subr.bf16.mxu0 0
      %752 = vmatpush1.bf16.msra.mxu0 0
      %753 = vmatprep.subr.bf16.mxu0 0
      %754 = vmatpush1.bf16.msra.mxu0 0
      %755 = vmatprep.mubr.bf16.mxu0 0
      %756 = vmatmul.mubr.bf16.gmra.mrb[0].mxu0 %v671
      %v757 = vpop.f32.mrb[0].mxu0
      %v758 = vadd.f32 0.0, %v757
      %v759 = vpop.f32.mrb[0].mxu0
      %v760 = vpop.f32.mrb[0].mxu0
      %v761 = vpop.f32.mrb[0].mxu0
      %762 = vdwg.mxu0
      %v763 = vadd.f32 %v613, %v717
      %v764 = vadd.f32 %v615, %v719
      %v765 = vadd.f32 %v654, %v758
      %s766 = scalar_lea.vmem %s3, 6
      %v767 = vld [vmem:[%s766] sm:$0x3]
      %768 = vrot.lane.b32.xlu0 %v453, 110
      %v769 = vpop.permute.xlu0 %768
      %770 = vrot.lane.b32.xlu0 %v461, 110
      %v771 = vpop.permute.xlu0 %770
      %772 = vrot.lane.b32.xlu0 %v460, 110
      %v773 = vpop.permute.xlu0 %772
      %vm774 = vcmask 900096
      %v775 = vsel %vm774, %v769, %v771
      %v776 = vsel %vm774, %v771, %v773
      %v778 = vsel %vm471, %v767, 0
      %v781 = vsel %vm475, %v775, 0
      %v784 = vsel %vm475, %v776, 0
      %v787 = vsel %vm475, %v773, 0
      %789 = vmatprep.subr.bf16.mxu0 %v784
      %790 = vmatpush1.bf16.msra.mxu0 %v781
      %791 = vmatprep.subr.bf16.mxu0 0
      %792 = vmatpush1.bf16.msra.mxu0 0
      %793 = vmatprep.subr.bf16.mxu0 0
      %794 = vmatpush1.bf16.msra.mxu0 0
      %795 = vmatprep.subr.bf16.mxu0 0
      %796 = vmatpush1.bf16.msra.mxu0 0
      %797 = vmatprep.subr.bf16.mxu0 0
      %798 = vmatpush1.bf16.msra.mxu0 0
      %799 = vmatprep.subr.bf16.mxu0 0
      %800 = vmatpush1.bf16.msra.mxu0 0
      %801 = vmatprep.subr.bf16.mxu0 0
      %802 = vmatpush1.bf16.msra.mxu0 0
      %803 = vmatprep.subr.bf16.mxu0 0
      %804 = vmatpush1.bf16.msra.mxu0 0
      %805 = vmatprep.subr.bf16.mxu0 0
      %806 = vmatpush1.bf16.msra.mxu0 0
      %807 = vmatprep.subr.bf16.mxu0 0
      %808 = vmatpush1.bf16.msra.mxu0 0
      %809 = vmatprep.subr.bf16.mxu0 0
      %810 = vmatpush1.bf16.msra.mxu0 0
      %811 = vmatprep.subr.bf16.mxu0 0
      %812 = vmatpush1.bf16.msra.mxu0 0
      %813 = vmatprep.subr.bf16.mxu0 0
      %814 = vmatpush1.bf16.msra.mxu0 0
      %815 = vmatprep.subr.bf16.mxu0 0
      %816 = vmatpush1.bf16.msra.mxu0 0
      %817 = vmatprep.subr.bf16.mxu0 0
      %818 = vmatpush1.bf16.msra.mxu0 0
      %819 = vmatprep.subr.bf16.mxu0 0
      %820 = vmatpush1.bf16.msra.mxu0 0
      %821 = vmatprep.mubr.bf16.mxu0 0
      %822 = vmatmul.mubr.bf16.gmra.mrb[0].mxu0 %v778
      %v823 = vpop.f32.mrb[0].mxu0
      %v824 = vadd.f32 0.0, %v823
      %v825 = vpop.f32.mrb[0].mxu0
      %v826 = vadd.f32 0.0, %v825
      %v827 = vpop.f32.mrb[0].mxu0
      %v828 = vpop.f32.mrb[0].mxu0
      %829 = vdwg.mxu0
      %830 = vmatprep.subr.bf16.mxu0 0
      %831 = vmatpush1.bf16.msra.mxu0 %v787
      %832 = vmatprep.subr.bf16.mxu0 0
      %833 = vmatpush1.bf16.msra.mxu0 0
      %834 = vmatprep.subr.bf16.mxu0 0
      %835 = vmatpush1.bf16.msra.mxu0 0
      %836 = vmatprep.subr.bf16.mxu0 0
      %837 = vmatpush1.bf16.msra.mxu0 0
      %838 = vmatprep.subr.bf16.mxu0 0
      %839 = vmatpush1.bf16.msra.mxu0 0
      %840 = vmatprep.subr.bf16.mxu0 0
      %841 = vmatpush1.bf16.msra.mxu0 0
      %842 = vmatprep.subr.bf16.mxu0 0
      %843 = vmatpush1.bf16.msra.mxu0 0
      %844 = vmatprep.subr.bf16.mxu0 0
      %845 = vmatpush1.bf16.msra.mxu0 0
      %846 = vmatprep.subr.bf16.mxu0 0
      %847 = vmatpush1.bf16.msra.mxu0 0
      %848 = vmatprep.subr.bf16.mxu0 0
      %849 = vmatpush1.bf16.msra.mxu0 0
      %850 = vmatprep.subr.bf16.mxu0 0
      %851 = vmatpush1.bf16.msra.mxu0 0
      %852 = vmatprep.subr.bf16.mxu0 0
      %853 = vmatpush1.bf16.msra.mxu0 0
      %854 = vmatprep.subr.bf16.mxu0 0
      %855 = vmatpush1.bf16.msra.mxu0 0
      %856 = vmatprep.subr.bf16.mxu0 0
      %857 = vmatpush1.bf16.msra.mxu0 0
      %858 = vmatprep.subr.bf16.mxu0 0
      %859 = vmatpush1.bf16.msra.mxu0 0
      %860 = vmatprep.subr.bf16.mxu0 0
      %861 = vmatpush1.bf16.msra.mxu0 0
      %862 = vmatprep.mubr.bf16.mxu0 0
      %863 = vmatmul.mubr.bf16.gmra.mrb[0].mxu0 %v778
      %v864 = vpop.f32.mrb[0].mxu0
      %v865 = vadd.f32 0.0, %v864
      %v866 = vpop.f32.mrb[0].mxu0
      %v867 = vpop.f32.mrb[0].mxu0
      %v868 = vpop.f32.mrb[0].mxu0
      %869 = vdwg.mxu0
      %v870 = vadd.f32 %v763, %v824
      %v871 = vadd.f32 %v764, %v826
      %v872 = vadd.f32 %v765, %v865
      %s873 = scalar_lea.vmem %s3, 8
      %v874 = vld [vmem:[%s873] sm:$0x3]
      %875 = vrot.lane.b32.xlu0 %v453, 109
      %v876 = vpop.permute.xlu0 %875
      %877 = vrot.lane.b32.xlu0 %v461, 109
      %v878 = vpop.permute.xlu0 %877
      %879 = vrot.lane.b32.xlu0 %v460, 109
      %v880 = vpop.permute.xlu0 %879
      %vm881 = vcmask 891904
      %v882 = vsel %vm881, %v876, %v878
      %v883 = vsel %vm881, %v878, %v880
      %v885 = vsel %vm471, %v874, 0
      %v888 = vsel %vm475, %v882, 0
      %v891 = vsel %vm475, %v883, 0
      %v894 = vsel %vm475, %v880, 0
      %896 = vmatprep.subr.bf16.mxu0 %v891
      %897 = vmatpush1.bf16.msra.mxu0 %v888
      %898 = vmatprep.subr.bf16.mxu0 0
      %899 = vmatpush1.bf16.msra.mxu0 0
      %900 = vmatprep.subr.bf16.mxu0 0
      %901 = vmatpush1.bf16.msra.mxu0 0
      %902 = vmatprep.subr.bf16.mxu0 0
      %903 = vmatpush1.bf16.msra.mxu0 0
      %904 = vmatprep.subr.bf16.mxu0 0
      %905 = vmatpush1.bf16.msra.mxu0 0
      %906 = vmatprep.subr.bf16.mxu0 0
      %907 = vmatpush1.bf16.msra.mxu0 0
      %908 = vmatprep.subr.bf16.mxu0 0
      %909 = vmatpush1.bf16.msra.mxu0 0
      %910 = vmatprep.subr.bf16.mxu0 0
      %911 = vmatpush1.bf16.msra.mxu0 0
      %912 = vmatprep.subr.bf16.mxu0 0
      %913 = vmatpush1.bf16.msra.mxu0 0
      %914 = vmatprep.subr.bf16.mxu0 0
      %915 = vmatpush1.bf16.msra.mxu0 0
      %916 = vmatprep.subr.bf16.mxu0 0
      %917 = vmatpush1.bf16.msra.mxu0 0
      %918 = vmatprep.subr.bf16.mxu0 0
      %919 = vmatpush1.bf16.msra.mxu0 0
      %920 = vmatprep.subr.bf16.mxu0 0
      %921 = vmatpush1.bf16.msra.mxu0 0
      %922 = vmatprep.subr.bf16.mxu0 0
      %923 = vmatpush1.bf16.msra.mxu0 0
      %924 = vmatprep.subr.bf16.mxu0 0
      %925 = vmatpush1.bf16.msra.mxu0 0
      %926 = vmatprep.subr.bf16.mxu0 0
      %927 = vmatpush1.bf16.msra.mxu0 0
      %928 = vmatprep.mubr.bf16.mxu0 0
      %929 = vmatmul.mubr.bf16.gmra.mrb[0].mxu0 %v885
      %v930 = vpop.f32.mrb[0].mxu0
      %v931 = vadd.f32 0.0, %v930
      %v932 = vpop.f32.mrb[0].mxu0
      %v933 = vadd.f32 0.0, %v932
      %v934 = vpop.f32.mrb[0].mxu0
      %v935 = vpop.f32.mrb[0].mxu0
      %936 = vdwg.mxu0
      %937 = vmatprep.subr.bf16.mxu0 0
      %938 = vmatpush1.bf16.msra.mxu0 %v894
      %939 = vmatprep.subr.bf16.mxu0 0
      %940 = vmatpush1.bf16.msra.mxu0 0
      %941 = vmatprep.subr.bf16.mxu0 0
      %942 = vmatpush1.bf16.msra.mxu0 0
      %943 = vmatprep.subr.bf16.mxu0 0
      %944 = vmatpush1.bf16.msra.mxu0 0
      %945 = vmatprep.subr.bf16.mxu0 0
      %946 = vmatpush1.bf16.msra.mxu0 0
      %947 = vmatprep.subr.bf16.mxu0 0
      %948 = vmatpush1.bf16.msra.mxu0 0
      %949 = vmatprep.subr.bf16.mxu0 0
      %950 = vmatpush1.bf16.msra.mxu0 0
      %951 = vmatprep.subr.bf16.mxu0 0
      %952 = vmatpush1.bf16.msra.mxu0 0
      %953 = vmatprep.subr.bf16.mxu0 0
      %954 = vmatpush1.bf16.msra.mxu0 0
      %955 = vmatprep.subr.bf16.mxu0 0
      %956 = vmatpush1.bf16.msra.mxu0 0
      %957 = vmatprep.subr.bf16.mxu0 0
      %958 = vmatpush1.bf16.msra.mxu0 0
      %959 = vmatprep.subr.bf16.mxu0 0
      %960 = vmatpush1.bf16.msra.mxu0 0
      %961 = vmatprep.subr.bf16.mxu0 0
      %962 = vmatpush1.bf16.msra.mxu0 0
      %963 = vmatprep.subr.bf16.mxu0 0
      %964 = vmatpush1.bf16.msra.mxu0 0
      %965 = vmatprep.subr.bf16.mxu0 0
      %966 = vmatpush1.bf16.msra.mxu0 0
      %967 = vmatprep.subr.bf16.mxu0 0
      %968 = vmatpush1.bf16.msra.mxu0 0
      %969 = vmatprep.mubr.bf16.mxu0 0
      %970 = vmatmul.mubr.bf16.gmra.mrb[0].mxu0 %v885
      %v971 = vpop.f32.mrb[0].mxu0
      %v972 = vadd.f32 0.0, %v971
      %v973 = vpop.f32.mrb[0].mxu0
      %v974 = vpop.f32.mrb[0].mxu0
      %v975 = vpop.f32.mrb[0].mxu0
      %976 = vdwg.mxu0
      %v977 = vadd.f32 %v870, %v931
      %v978 = vadd.f32 %v871, %v933
      %v979 = vadd.f32 %v872, %v972
      %s980 = scalar_lea.vmem %s3, 10
      %v981 = vld [vmem:[%s980] sm:$0x3]
      %982 = vrot.lane.b32.xlu0 %v453, 108
      %v983 = vpop.permute.xlu0 %982
      %984 = vrot.lane.b32.xlu0 %v461, 108
      %v985 = vpop.permute.xlu0 %984
      %986 = vrot.lane.b32.xlu0 %v460, 108
      %v987 = vpop.permute.xlu0 %986
      %vm988 = vcmask 883712
      %v989 = vsel %vm988, %v983, %v985
      %v990 = vsel %vm988, %v985, %v987
      %v992 = vsel %vm471, %v981, 0
      %v995 = vsel %vm475, %v989, 0
      %v998 = vsel %vm475, %v990, 0
      %v1001 = vsel %vm475, %v987, 0
      %1003 = vmatprep.subr.bf16.mxu0 %v998
      %1004 = vmatpush1.bf16.msra.mxu0 %v995
      %1005 = vmatprep.subr.bf16.mxu0 0
      %1006 = vmatpush1.bf16.msra.mxu0 0
      %1007 = vmatprep.subr.bf16.mxu0 0
      %1008 = vmatpush1.bf16.msra.mxu0 0
      %1009 = vmatprep.subr.bf16.mxu0 0
      %1010 = vmatpush1.bf16.msra.mxu0 0
      %1011 = vmatprep.subr.bf16.mxu0 0
      %1012 = vmatpush1.bf16.msra.mxu0 0
      %1013 = vmatprep.subr.bf16.mxu0 0
      %1014 = vmatpush1.bf16.msra.mxu0 0
      %1015 = vmatprep.subr.bf16.mxu0 0
      %1016 = vmatpush1.bf16.msra.mxu0 0
      %1017 = vmatprep.subr.bf16.mxu0 0
      %1018 = vmatpush1.bf16.msra.mxu0 0
      %1019 = vmatprep.subr.bf16.mxu0 0
      %1020 = vmatpush1.bf16.msra.mxu0 0
      %1021 = vmatprep.subr.bf16.mxu0 0
      %1022 = vmatpush1.bf16.msra.mxu0 0
      %1023 = vmatprep.subr.bf16.mxu0 0
      %1024 = vmatpush1.bf16.msra.mxu0 0
      %1025 = vmatprep.subr.bf16.mxu0 0
      %1026 = vmatpush1.bf16.msra.mxu0 0
      %1027 = vmatprep.subr.bf16.mxu0 0
      %1028 = vmatpush1.bf16.msra.mxu0 0
      %1029 = vmatprep.subr.bf16.mxu0 0
      %1030 = vmatpush1.bf16.msra.mxu0 0
      %1031 = vmatprep.subr.bf16.mxu0 0
      %1032 = vmatpush1.bf16.msra.mxu0 0
      %1033 = vmatprep.subr.bf16.mxu0 0
      %1034 = vmatpush1.bf16.msra.mxu0 0
      %1035 = vmatprep.mubr.bf16.mxu0 0
      %1036 = vmatmul.mubr.bf16.gmra.mrb[0].mxu0 %v992
      %v1037 = vpop.f32.mrb[0].mxu0
      %v1038 = vadd.f32 0.0, %v1037
      %v1039 = vpop.f32.mrb[0].mxu0
      %v1040 = vadd.f32 0.0, %v1039
      %v1041 = vpop.f32.mrb[0].mxu0
      %v1042 = vpop.f32.mrb[0].mxu0
      %1043 = vdwg.mxu0
      %1044 = vmatprep.subr.bf16.mxu0 0
      %1045 = vmatpush1.bf16.msra.mxu0 %v1001
      %1046 = vmatprep.subr.bf16.mxu0 0
      %1047 = vmatpush1.bf16.msra.mxu0 0
      %1048 = vmatprep.subr.bf16.mxu0 0
      %1049 = vmatpush1.bf16.msra.mxu0 0
      %1050 = vmatprep.subr.bf16.mxu0 0
      %1051 = vmatpush1.bf16.msra.mxu0 0
      %1052 = vmatprep.subr.bf16.mxu0 0
      %1053 = vmatpush1.bf16.msra.mxu0 0
      %1054 = vmatprep.subr.bf16.mxu0 0
      %1055 = vmatpush1.bf16.msra.mxu0 0
      %1056 = vmatprep.subr.bf16.mxu0 0
      %1057 = vmatpush1.bf16.msra.mxu0 0
      %1058 = vmatprep.subr.bf16.mxu0 0
      %1059 = vmatpush1.bf16.msra.mxu0 0
      %1060 = vmatprep.subr.bf16.mxu0 0
      %1061 = vmatpush1.bf16.msra.mxu0 0
      %1062 = vmatprep.subr.bf16.mxu0 0
      %1063 = vmatpush1.bf16.msra.mxu0 0
      %1064 = vmatprep.subr.bf16.mxu0 0
      %1065 = vmatpush1.bf16.msra.mxu0 0
      %1066 = vmatprep.subr.bf16.mxu0 0
      %1067 = vmatpush1.bf16.msra.mxu0 0
      %1068 = vmatprep.subr.bf16.mxu0 0
      %1069 = vmatpush1.bf16.msra.mxu0 0
      %1070 = vmatprep.subr.bf16.mxu0 0
      %1071 = vmatpush1.bf16.msra.mxu0 0
      %1072 = vmatprep.subr.bf16.mxu0 0
      %1073 = vmatpush1.bf16.msra.mxu0 0
      %1074 = vmatprep.subr.bf16.mxu0 0
      %1075 = vmatpush1.bf16.msra.mxu0 0
      %1076 = vmatprep.mubr.bf16.mxu0 0
      %1077 = vmatmul.mubr.bf16.gmra.mrb[0].mxu0 %v992
      %v1078 = vpop.f32.mrb[0].mxu0
      %v1079 = vadd.f32 0.0, %v1078
      %v1080 = vpop.f32.mrb[0].mxu0
      %v1081 = vpop.f32.mrb[0].mxu0
      %v1082 = vpop.f32.mrb[0].mxu0
      %1083 = vdwg.mxu0
      %v1084 = vadd.f32 %v977, %v1038
      %v1085 = vadd.f32 %v978, %v1040
      %v1086 = vadd.f32 %v979, %v1079
      %s1087 = scalar_lea.vmem %s3, 12
      %v1088 = vld [vmem:[%s1087] sm:$0x3]
      %1089 = vrot.lane.b32.xlu0 %v453, 92
      %v1090 = vpop.permute.xlu0 %1089
      %1091 = vrot.lane.b32.xlu0 %v461, 92
      %v1092 = vpop.permute.xlu0 %1091
      %1093 = vrot.lane.b32.xlu0 %v460, 92
      %v1094 = vpop.permute.xlu0 %1093
      %vm1095 = vcmask 752640
      %v1096 = vsel %vm1095, %v1090, %v1092
      %v1097 = vsel %vm1095, %v1092, %v1094
      %v1099 = vsel %vm471, %v1088, 0
      %v1102 = vsel %vm475, %v1096, 0
      %v1105 = vsel %vm475, %v1097, 0
      %v1108 = vsel %vm475, %v1094, 0
      %1110 = vmatprep.subr.bf16.mxu0 %v1105
      %1111 = vmatpush1.bf16.msra.mxu0 %v1102
      %1112 = vmatprep.subr.bf16.mxu0 0
      %1113 = vmatpush1.bf16.msra.mxu0 0
      %1114 = vmatprep.subr.bf16.mxu0 0
      %1115 = vmatpush1.bf16.msra.mxu0 0
      %1116 = vmatprep.subr.bf16.mxu0 0
      %1117 = vmatpush1.bf16.msra.mxu0 0
      %1118 = vmatprep.subr.bf16.mxu0 0
      %1119 = vmatpush1.bf16.msra.mxu0 0
      %1120 = vmatprep.subr.bf16.mxu0 0
      %1121 = vmatpush1.bf16.msra.mxu0 0
      %1122 = vmatprep.subr.bf16.mxu0 0
      %1123 = vmatpush1.bf16.msra.mxu0 0
      %1124 = vmatprep.subr.bf16.mxu0 0
      %1125 = vmatpush1.bf16.msra.mxu0 0
      %1126 = vmatprep.subr.bf16.mxu0 0
      %1127 = vmatpush1.bf16.msra.mxu0 0
      %1128 = vmatprep.subr.bf16.mxu0 0
      %1129 = vmatpush1.bf16.msra.mxu0 0
      %1130 = vmatprep.subr.bf16.mxu0 0
      %1131 = vmatpush1.bf16.msra.mxu0 0
      %1132 = vmatprep.subr.bf16.mxu0 0
      %1133 = vmatpush1.bf16.msra.mxu0 0
      %1134 = vmatprep.subr.bf16.mxu0 0
      %1135 = vmatpush1.bf16.msra.mxu0 0
      %1136 = vmatprep.subr.bf16.mxu0 0
      %1137 = vmatpush1.bf16.msra.mxu0 0
      %1138 = vmatprep.subr.bf16.mxu0 0
      %1139 = vmatpush1.bf16.msra.mxu0 0
      %1140 = vmatprep.subr.bf16.mxu0 0
      %1141 = vmatpush1.bf16.msra.mxu0 0
      %1142 = vmatprep.mubr.bf16.mxu0 0
      %1143 = vmatmul.mubr.bf16.gmra.mrb[0].mxu0 %v1099
      %v1144 = vpop.f32.mrb[0].mxu0
      %v1145 = vadd.f32 0.0, %v1144
      %v1146 = vpop.f32.mrb[0].mxu0
      %v1147 = vadd.f32 0.0, %v1146
      %v1148 = vpop.f32.mrb[0].mxu0
      %v1149 = vpop.f32.mrb[0].mxu0
      %1150 = vdwg.mxu0
      %1151 = vmatprep.subr.bf16.mxu0 0
      %1152 = vmatpush1.bf16.msra.mxu0 %v1108
      %1153 = vmatprep.subr.bf16.mxu0 0
      %1154 = vmatpush1.bf16.msra.mxu0 0
      %1155 = vmatprep.subr.bf16.mxu0 0
      %1156 = vmatpush1.bf16.msra.mxu0 0
      %1157 = vmatprep.subr.bf16.mxu0 0
      %1158 = vmatpush1.bf16.msra.mxu0 0
      %1159 = vmatprep.subr.bf16.mxu0 0
      %1160 = vmatpush1.bf16.msra.mxu0 0
      %1161 = vmatprep.subr.bf16.mxu0 0
      %1162 = vmatpush1.bf16.msra.mxu0 0
      %1163 = vmatprep.subr.bf16.mxu0 0
      %1164 = vmatpush1.bf16.msra.mxu0 0
      %1165 = vmatprep.subr.bf16.mxu0 0
      %1166 = vmatpush1.bf16.msra.mxu0 0
      %1167 = vmatprep.subr.bf16.mxu0 0
      %1168 = vmatpush1.bf16.msra.mxu0 0
      %1169 = vmatprep.subr.bf16.mxu0 0
      %1170 = vmatpush1.bf16.msra.mxu0 0
      %1171 = vmatprep.subr.bf16.mxu0 0
      %1172 = vmatpush1.bf16.msra.mxu0 0
      %1173 = vmatprep.subr.bf16.mxu0 0
      %1174 = vmatpush1.bf16.msra.mxu0 0
      %1175 = vmatprep.subr.bf16.mxu0 0
      %1176 = vmatpush1.bf16.msra.mxu0 0
      %1177 = vmatprep.subr.bf16.mxu0 0
      %1178 = vmatpush1.bf16.msra.mxu0 0
      %1179 = vmatprep.subr.bf16.mxu0 0
      %1180 = vmatpush1.bf16.msra.mxu0 0
      %1181 = vmatprep.subr.bf16.mxu0 0
      %1182 = vmatpush1.bf16.msra.mxu0 0
      %1183 = vmatprep.mubr.bf16.mxu0 0
      %1184 = vmatmul.mubr.bf16.gmra.mrb[0].mxu0 %v1099
      %v1185 = vpop.f32.mrb[0].mxu0
      %v1186 = vadd.f32 0.0, %v1185
      %v1187 = vpop.f32.mrb[0].mxu0
      %v1188 = vpop.f32.mrb[0].mxu0
      %v1189 = vpop.f32.mrb[0].mxu0
      %1190 = vdwg.mxu0
      %v1191 = vadd.f32 %v1084, %v1145
      %v1192 = vadd.f32 %v1085, %v1147
      %v1193 = vadd.f32 %v1086, %v1186
      %s1194 = scalar_lea.vmem %s3, 14
      %v1195 = vld [vmem:[%s1194] sm:$0x3]
      %1196 = vrot.lane.b32.xlu0 %v453, 91
      %v1197 = vpop.permute.xlu0 %1196
      %1198 = vrot.lane.b32.xlu0 %v461, 91
      %v1199 = vpop.permute.xlu0 %1198
      %1200 = vrot.lane.b32.xlu0 %v460, 91
      %v1201 = vpop.permute.xlu0 %1200
      %vm1202 = vcmask 744448
      %v1203 = vsel %vm1202, %v1197, %v1199
      %v1204 = vsel %vm1202, %v1199, %v1201
      %v1206 = vsel %vm471, %v1195, 0
      %v1209 = vsel %vm475, %v1203, 0
      %v1212 = vsel %vm475, %v1204, 0
      %v1215 = vsel %vm475, %v1201, 0
      %1217 = vmatprep.subr.bf16.mxu0 %v1212
      %1218 = vmatpush1.bf16.msra.mxu0 %v1209
      %1219 = vmatprep.subr.bf16.mxu0 0
      %1220 = vmatpush1.bf16.msra.mxu0 0
      %1221 = vmatprep.subr.bf16.mxu0 0
      %1222 = vmatpush1.bf16.msra.mxu0 0
      %1223 = vmatprep.subr.bf16.mxu0 0
      %1224 = vmatpush1.bf16.msra.mxu0 0
      %1225 = vmatprep.subr.bf16.mxu0 0
      %1226 = vmatpush1.bf16.msra.mxu0 0
      %1227 = vmatprep.subr.bf16.mxu0 0
      %1228 = vmatpush1.bf16.msra.mxu0 0
      %1229 = vmatprep.subr.bf16.mxu0 0
      %1230 = vmatpush1.bf16.msra.mxu0 0
      %1231 = vmatprep.subr.bf16.mxu0 0
      %1232 = vmatpush1.bf16.msra.mxu0 0
      %1233 = vmatprep.subr.bf16.mxu0 0
      %1234 = vmatpush1.bf16.msra.mxu0 0
      %1235 = vmatprep.subr.bf16.mxu0 0
      %1236 = vmatpush1.bf16.msra.mxu0 0
      %1237 = vmatprep.subr.bf16.mxu0 0
      %1238 = vmatpush1.bf16.msra.mxu0 0
      %1239 = vmatprep.subr.bf16.mxu0 0
      %1240 = vmatpush1.bf16.msra.mxu0 0
      %1241 = vmatprep.subr.bf16.mxu0 0
      %1242 = vmatpush1.bf16.msra.mxu0 0
      %1243 = vmatprep.subr.bf16.mxu0 0
      %1244 = vmatpush1.bf16.msra.mxu0 0
      %1245 = vmatprep.subr.bf16.mxu0 0
      %1246 = vmatpush1.bf16.msra.mxu0 0
      %1247 = vmatprep.subr.bf16.mxu0 0
      %1248 = vmatpush1.bf16.msra.mxu0 0
      %1249 = vmatprep.mubr.bf16.mxu0 0
      %1250 = vmatmul.mubr.bf16.gmra.mrb[0].mxu0 %v1206
      %v1251 = vpop.f32.mrb[0].mxu0
      %v1252 = vadd.f32 0.0, %v1251
      %v1253 = vpop.f32.mrb[0].mxu0
      %v1254 = vadd.f32 0.0, %v1253
      %v1255 = vpop.f32.mrb[0].mxu0
      %v1256 = vpop.f32.mrb[0].mxu0
      %1257 = vdwg.mxu0
      %1258 = vmatprep.subr.bf16.mxu0 0
      %1259 = vmatpush1.bf16.msra.mxu0 %v1215
      %1260 = vmatprep.subr.bf16.mxu0 0
      %1261 = vmatpush1.bf16.msra.mxu0 0
      %1262 = vmatprep.subr.bf16.mxu0 0
      %1263 = vmatpush1.bf16.msra.mxu0 0
      %1264 = vmatprep.subr.bf16.mxu0 0
      %1265 = vmatpush1.bf16.msra.mxu0 0
      %1266 = vmatprep.subr.bf16.mxu0 0
      %1267 = vmatpush1.bf16.msra.mxu0 0
      %1268 = vmatprep.subr.bf16.mxu0 0
      %1269 = vmatpush1.bf16.msra.mxu0 0
      %1270 = vmatprep.subr.bf16.mxu0 0
      %1271 = vmatpush1.bf16.msra.mxu0 0
      %1272 = vmatprep.subr.bf16.mxu0 0
      %1273 = vmatpush1.bf16.msra.mxu0 0
      %1274 = vmatprep.subr.bf16.mxu0 0
      %1275 = vmatpush1.bf16.msra.mxu0 0
      %1276 = vmatprep.subr.bf16.mxu0 0
      %1277 = vmatpush1.bf16.msra.mxu0 0
      %1278 = vmatprep.subr.bf16.mxu0 0
      %1279 = vmatpush1.bf16.msra.mxu0 0
      %1280 = vmatprep.subr.bf16.mxu0 0
      %1281 = vmatpush1.bf16.msra.mxu0 0
      %1282 = vmatprep.subr.bf16.mxu0 0
      %1283 = vmatpush1.bf16.msra.mxu0 0
      %1284 = vmatprep.subr.bf16.mxu0 0
      %1285 = vmatpush1.bf16.msra.mxu0 0
      %1286 = vmatprep.subr.bf16.mxu0 0
      %1287 = vmatpush1.bf16.msra.mxu0 0
      %1288 = vmatprep.subr.bf16.mxu0 0
      %1289 = vmatpush1.bf16.msra.mxu0 0
      %1290 = vmatprep.mubr.bf16.mxu0 0
      %1291 = vmatmul.mubr.bf16.gmra.mrb[0].mxu0 %v1206
      %v1292 = vpop.f32.mrb[0].mxu0
      %v1293 = vadd.f32 0.0, %v1292
      %v1294 = vpop.f32.mrb[0].mxu0
      %v1295 = vpop.f32.mrb[0].mxu0
      %v1296 = vpop.f32.mrb[0].mxu0
      %1297 = vdwg.mxu0
      %v1298 = vadd.f32 %v1191, %v1252
      %v1299 = vadd.f32 %v1192, %v1254
      %v1300 = vadd.f32 %v1193, %v1293
      %s1301 = scalar_lea.vmem %s3, 16
      %v1302 = vld [vmem:[%s1301] sm:$0x3]
      %1303 = vrot.lane.b32.xlu0 %v453, 90
      %v1304 = vpop.permute.xlu0 %1303
      %1305 = vrot.lane.b32.xlu0 %v461, 90
      %v1306 = vpop.permute.xlu0 %1305
      %1307 = vrot.lane.b32.xlu0 %v460, 90
      %v1308 = vpop.permute.xlu0 %1307
      %vm1309 = vcmask 736256
      %v1310 = vsel %vm1309, %v1304, %v1306
      %v1311 = vsel %vm1309, %v1306, %v1308
      %v1313 = vsel %vm471, %v1302, 0
      %v1316 = vsel %vm475, %v1310, 0
      %v1319 = vsel %vm475, %v1311, 0
      %v1322 = vsel %vm475, %v1308, 0
      %1324 = vmatprep.subr.bf16.mxu0 %v1319
      %1325 = vmatpush1.bf16.msra.mxu0 %v1316
      %1326 = vmatprep.subr.bf16.mxu0 0
      %1327 = vmatpush1.bf16.msra.mxu0 0
      %1328 = vmatprep.subr.bf16.mxu0 0
      %1329 = vmatpush1.bf16.msra.mxu0 0
      %1330 = vmatprep.subr.bf16.mxu0 0
      %1331 = vmatpush1.bf16.msra.mxu0 0
      %1332 = vmatprep.subr.bf16.mxu0 0
      %1333 = vmatpush1.bf16.msra.mxu0 0
      %1334 = vmatprep.subr.bf16.mxu0 0
      %1335 = vmatpush1.bf16.msra.mxu0 0
      %1336 = vmatprep.subr.bf16.mxu0 0
      %1337 = vmatpush1.bf16.msra.mxu0 0
      %1338 = vmatprep.subr.bf16.mxu0 0
      %1339 = vmatpush1.bf16.msra.mxu0 0
      %1340 = vmatprep.subr.bf16.mxu0 0
      %1341 = vmatpush1.bf16.msra.mxu0 0
      %1342 = vmatprep.subr.bf16.mxu0 0
      %1343 = vmatpush1.bf16.msra.mxu0 0
      %1344 = vmatprep.subr.bf16.mxu0 0
      %1345 = vmatpush1.bf16.msra.mxu0 0
      %1346 = vmatprep.subr.bf16.mxu0 0
      %1347 = vmatpush1.bf16.msra.mxu0 0
      %1348 = vmatprep.subr.bf16.mxu0 0
      %1349 = vmatpush1.bf16.msra.mxu0 0
      %1350 = vmatprep.subr.bf16.mxu0 0
      %1351 = vmatpush1.bf16.msra.mxu0 0
      %1352 = vmatprep.subr.bf16.mxu0 0
      %1353 = vmatpush1.bf16.msra.mxu0 0
      %1354 = vmatprep.subr.bf16.mxu0 0
      %1355 = vmatpush1.bf16.msra.mxu0 0
      %1356 = vmatprep.mubr.bf16.mxu0 0
      %1357 = vmatmul.mubr.bf16.gmra.mrb[0].mxu0 %v1313
      %v1358 = vpop.f32.mrb[0].mxu0
      %v1359 = vadd.f32 0.0, %v1358
      %v1360 = vpop.f32.mrb[0].mxu0
      %v1361 = vadd.f32 0.0, %v1360
      %v1362 = vpop.f32.mrb[0].mxu0
      %v1363 = vpop.f32.mrb[0].mxu0
      %1364 = vdwg.mxu0
      %1365 = vmatprep.subr.bf16.mxu0 0
      %1366 = vmatpush1.bf16.msra.mxu0 %v1322
      %1367 = vmatprep.subr.bf16.mxu0 0
      %1368 = vmatpush1.bf16.msra.mxu0 0
      %1369 = vmatprep.subr.bf16.mxu0 0
      %1370 = vmatpush1.bf16.msra.mxu0 0
      %1371 = vmatprep.subr.bf16.mxu0 0
      %1372 = vmatpush1.bf16.msra.mxu0 0
      %1373 = vmatprep.subr.bf16.mxu0 0
      %1374 = vmatpush1.bf16.msra.mxu0 0
      %1375 = vmatprep.subr.bf16.mxu0 0
      %1376 = vmatpush1.bf16.msra.mxu0 0
      %1377 = vmatprep.subr.bf16.mxu0 0
      %1378 = vmatpush1.bf16.msra.mxu0 0
      %1379 = vmatprep.subr.bf16.mxu0 0
      %1380 = vmatpush1.bf16.msra.mxu0 0
      %1381 = vmatprep.subr.bf16.mxu0 0
      %1382 = vmatpush1.bf16.msra.mxu0 0
      %1383 = vmatprep.subr.bf16.mxu0 0
      %1384 = vmatpush1.bf16.msra.mxu0 0
      %1385 = vmatprep.subr.bf16.mxu0 0
      %1386 = vmatpush1.bf16.msra.mxu0 0
      %1387 = vmatprep.subr.bf16.mxu0 0
      %1388 = vmatpush1.bf16.msra.mxu0 0
      %1389 = vmatprep.subr.bf16.mxu0 0
      %1390 = vmatpush1.bf16.msra.mxu0 0
      %1391 = vmatprep.subr.bf16.mxu0 0
      %1392 = vmatpush1.bf16.msra.mxu0 0
      %1393 = vmatprep.subr.bf16.mxu0 0
      %1394 = vmatpush1.bf16.msra.mxu0 0
      %1395 = vmatprep.subr.bf16.mxu0 0
      %1396 = vmatpush1.bf16.msra.mxu0 0
      %1397 = vmatprep.mubr.bf16.mxu0 0
      %1398 = vmatmul.mubr.bf16.gmra.mrb[0].mxu0 %v1313
      %v1399 = vpop.f32.mrb[0].mxu0
      %v1400 = vadd.f32 0.0, %v1399
      %v1401 = vpop.f32.mrb[0].mxu0
      %v1402 = vpop.f32.mrb[0].mxu0
      %v1403 = vpop.f32.mrb[0].mxu0
      %1404 = vdwg.mxu0
      %v1405 = vadd.f32 %v1298, %v1359
      %v1406 = vadd.f32 %v1299, %v1361
      %v1407 = vadd.f32 %v1300, %v1400
      %s1408 = scalar_lea.vmem %s3, 18
      %v1409 = vld [vmem:[%s1408] sm:$0x3]
      %v1411 = vcombine.high %v440, %v440
      %v1413 = vunpack.c.l.s4 1983009808
      %v1414 = vunpack.c.0.s8 %v1413
      %v1415 = vlaneseq
      %v1416 = vshrl.u32 %v1415, 7
      %v1417 = vsub.s32 %v1414, %v1416
      %v1418 = vrot.slane %v440, %v1417
      %v1420 = vunpack.c.l.s4 1983009808
      %v1421 = vunpack.c.0.s8 %v1420
      %v1422 = vlaneseq
      %v1423 = vshrl.u32 %v1422, 7
      %v1424 = vsub.s32 %v1421, %v1423
      %v1425 = vrot.slane %v1411, %v1424
      %v1426 = vcombine.high %v1418, %v1418
      %v1428 = vsel %vm471, %v1409, 0
      %v1431 = vsel %vm475, %v1418, 0
      %v1434 = vsel %vm475, %v1426, 0
      %v1437 = vsel %vm475, %v1425, 0
      %1439 = vmatprep.subr.bf16.mxu0 %v1434
      %1440 = vmatpush1.bf16.msra.mxu0 %v1431
      %1441 = vmatprep.subr.bf16.mxu0 0
      %1442 = vmatpush1.bf16.msra.mxu0 0
      %1443 = vmatprep.subr.bf16.mxu0 0
      %1444 = vmatpush1.bf16.msra.mxu0 0
      %1445 = vmatprep.subr.bf16.mxu0 0
      %1446 = vmatpush1.bf16.msra.mxu0 0
      %1447 = vmatprep.subr.bf16.mxu0 0
      %1448 = vmatpush1.bf16.msra.mxu0 0
      %1449 = vmatprep.subr.bf16.mxu0 0
      %1450 = vmatpush1.bf16.msra.mxu0 0
      %1451 = vmatprep.subr.bf16.mxu0 0
      %1452 = vmatpush1.bf16.msra.mxu0 0
      %1453 = vmatprep.subr.bf16.mxu0 0
      %1454 = vmatpush1.bf16.msra.mxu0 0
      %1455 = vmatprep.subr.bf16.mxu0 0
      %1456 = vmatpush1.bf16.msra.mxu0 0
      %1457 = vmatprep.subr.bf16.mxu0 0
      %1458 = vmatpush1.bf16.msra.mxu0 0
      %1459 = vmatprep.subr.bf16.mxu0 0
      %1460 = vmatpush1.bf16.msra.mxu0 0
      %1461 = vmatprep.subr.bf16.mxu0 0
      %1462 = vmatpush1.bf16.msra.mxu0 0
      %1463 = vmatprep.subr.bf16.mxu0 0
      %1464 = vmatpush1.bf16.msra.mxu0 0
      %1465 = vmatprep.subr.bf16.mxu0 0
      %1466 = vmatpush1.bf16.msra.mxu0 0
      %1467 = vmatprep.subr.bf16.mxu0 0
      %1468 = vmatpush1.bf16.msra.mxu0 0
      %1469 = vmatprep.subr.bf16.mxu0 0
      %1470 = vmatpush1.bf16.msra.mxu0 0
      %1471 = vmatprep.mubr.bf16.mxu0 0
      %1472 = vmatmul.mubr.bf16.gmra.mrb[0].mxu0 %v1428
      %v1473 = vpop.f32.mrb[0].mxu0
      %v1474 = vadd.f32 0.0, %v1473
      %v1475 = vpop.f32.mrb[0].mxu0
      %v1476 = vadd.f32 0.0, %v1475
      %v1477 = vpop.f32.mrb[0].mxu0
      %v1478 = vpop.f32.mrb[0].mxu0
      %1479 = vdwg.mxu0
      %1480 = vmatprep.subr.bf16.mxu0 0
      %1481 = vmatpush1.bf16.msra.mxu0 %v1437
      %1482 = vmatprep.subr.bf16.mxu0 0
      %1483 = vmatpush1.bf16.msra.mxu0 0
      %1484 = vmatprep.subr.bf16.mxu0 0
      %1485 = vmatpush1.bf16.msra.mxu0 0
      %1486 = vmatprep.subr.bf16.mxu0 0
      %1487 = vmatpush1.bf16.msra.mxu0 0
      %1488 = vmatprep.subr.bf16.mxu0 0
      %1489 = vmatpush1.bf16.msra.mxu0 0
      %1490 = vmatprep.subr.bf16.mxu0 0
      %1491 = vmatpush1.bf16.msra.mxu0 0
      %1492 = vmatprep.subr.bf16.mxu0 0
      %1493 = vmatpush1.bf16.msra.mxu0 0
      %1494 = vmatprep.subr.bf16.mxu0 0
      %1495 = vmatpush1.bf16.msra.mxu0 0
      %1496 = vmatprep.subr.bf16.mxu0 0
      %1497 = vmatpush1.bf16.msra.mxu0 0
      %1498 = vmatprep.subr.bf16.mxu0 0
      %1499 = vmatpush1.bf16.msra.mxu0 0
      %1500 = vmatprep.subr.bf16.mxu0 0
      %1501 = vmatpush1.bf16.msra.mxu0 0
      %1502 = vmatprep.subr.bf16.mxu0 0
      %1503 = vmatpush1.bf16.msra.mxu0 0
      %1504 = vmatprep.subr.bf16.mxu0 0
      %1505 = vmatpush1.bf16.msra.mxu0 0
      %1506 = vmatprep.subr.bf16.mxu0 0
      %1507 = vmatpush1.bf16.msra.mxu0 0
      %1508 = vmatprep.subr.bf16.mxu0 0
      %1509 = vmatpush1.bf16.msra.mxu0 0
      %1510 = vmatprep.subr.bf16.mxu0 0
      %1511 = vmatpush1.bf16.msra.mxu0 0
      %1512 = vmatprep.mubr.bf16.mxu0 0
      %1513 = vmatmul.mubr.bf16.gmra.mrb[0].mxu0 %v1428
      %v1514 = vpop.f32.mrb[0].mxu0
      %v1515 = vadd.f32 0.0, %v1514
      %v1516 = vpop.f32.mrb[0].mxu0
      %v1517 = vpop.f32.mrb[0].mxu0
      %v1518 = vpop.f32.mrb[0].mxu0
      %1519 = vdwg.mxu0
      %v1520 = vadd.f32 %v1405, %v1474
      %v1521 = vadd.f32 %v1406, %v1476
      %v1522 = vadd.f32 %v1407, %v1515
      %s1523 = scalar_lea.vmem %s3, 20
      %v1524 = vld [vmem:[%s1523] sm:$0x3]
      %1525 = vrot.lane.b32.xlu0 %v1418, 127
      %v1526 = vpop.permute.xlu0 %1525
      %1527 = vrot.lane.b32.xlu0 %v1426, 127
      %v1528 = vpop.permute.xlu0 %1527
      %1529 = vrot.lane.b32.xlu0 %v1425, 127
      %v1530 = vpop.permute.xlu0 %1529
      %v1531 = vsel %vm468, %v1526, %v1528
      %v1532 = vsel %vm468, %v1528, %v1530
      %v1534 = vsel %vm471, %v1524, 0
      %v1537 = vsel %vm475, %v1531, 0
      %v1540 = vsel %vm475, %v1532, 0
      %v1543 = vsel %vm475, %v1530, 0
      %1545 = vmatprep.subr.bf16.mxu0 %v1540
      %1546 = vmatpush1.bf16.msra.mxu0 %v1537
      %1547 = vmatprep.subr.bf16.mxu0 0
      %1548 = vmatpush1.bf16.msra.mxu0 0
      %1549 = vmatprep.subr.bf16.mxu0 0
      %1550 = vmatpush1.bf16.msra.mxu0 0
      %1551 = vmatprep.subr.bf16.mxu0 0
      %1552 = vmatpush1.bf16.msra.mxu0 0
      %1553 = vmatprep.subr.bf16.mxu0 0
      %1554 = vmatpush1.bf16.msra.mxu0 0
      %1555 = vmatprep.subr.bf16.mxu0 0
      %1556 = vmatpush1.bf16.msra.mxu0 0
      %1557 = vmatprep.subr.bf16.mxu0 0
      %1558 = vmatpush1.bf16.msra.mxu0 0
      %1559 = vmatprep.subr.bf16.mxu0 0
      %1560 = vmatpush1.bf16.msra.mxu0 0
      %1561 = vmatprep.subr.bf16.mxu0 0
      %1562 = vmatpush1.bf16.msra.mxu0 0
      %1563 = vmatprep.subr.bf16.mxu0 0
      %1564 = vmatpush1.bf16.msra.mxu0 0
      %1565 = vmatprep.subr.bf16.mxu0 0
      %1566 = vmatpush1.bf16.msra.mxu0 0
      %1567 = vmatprep.subr.bf16.mxu0 0
      %1568 = vmatpush1.bf16.msra.mxu0 0
      %1569 = vmatprep.subr.bf16.mxu0 0
      %1570 = vmatpush1.bf16.msra.mxu0 0
      %1571 = vmatprep.subr.bf16.mxu0 0
      %1572 = vmatpush1.bf16.msra.mxu0 0
      %1573 = vmatprep.subr.bf16.mxu0 0
      %1574 = vmatpush1.bf16.msra.mxu0 0
      %1575 = vmatprep.subr.bf16.mxu0 0
      %1576 = vmatpush1.bf16.msra.mxu0 0
      %1577 = vmatprep.mubr.bf16.mxu0 0
      %1578 = vmatmul.mubr.bf16.gmra.mrb[0].mxu0 %v1534
      %v1579 = vpop.f32.mrb[0].mxu0
      %v1580 = vadd.f32 0.0, %v1579
      %v1581 = vpop.f32.mrb[0].mxu0
      %v1582 = vadd.f32 0.0, %v1581
      %v1583 = vpop.f32.mrb[0].mxu0
      %v1584 = vpop.f32.mrb[0].mxu0
      %1585 = vdwg.mxu0
      %1586 = vmatprep.subr.bf16.mxu0 0
      %1587 = vmatpush1.bf16.msra.mxu0 %v1543
      %1588 = vmatprep.subr.bf16.mxu0 0
      %1589 = vmatpush1.bf16.msra.mxu0 0
      %1590 = vmatprep.subr.bf16.mxu0 0
      %1591 = vmatpush1.bf16.msra.mxu0 0
      %1592 = vmatprep.subr.bf16.mxu0 0
      %1593 = vmatpush1.bf16.msra.mxu0 0
      %1594 = vmatprep.subr.bf16.mxu0 0
      %1595 = vmatpush1.bf16.msra.mxu0 0
      %1596 = vmatprep.subr.bf16.mxu0 0
      %1597 = vmatpush1.bf16.msra.mxu0 0
      %1598 = vmatprep.subr.bf16.mxu0 0
      %1599 = vmatpush1.bf16.msra.mxu0 0
      %1600 = vmatprep.subr.bf16.mxu0 0
      %1601 = vmatpush1.bf16.msra.mxu0 0
      %1602 = vmatprep.subr.bf16.mxu0 0
      %1603 = vmatpush1.bf16.msra.mxu0 0
      %1604 = vmatprep.subr.bf16.mxu0 0
      %1605 = vmatpush1.bf16.msra.mxu0 0
      %1606 = vmatprep.subr.bf16.mxu0 0
      %1607 = vmatpush1.bf16.msra.mxu0 0
      %1608 = vmatprep.subr.bf16.mxu0 0
      %1609 = vmatpush1.bf16.msra.mxu0 0
      %1610 = vmatprep.subr.bf16.mxu0 0
      %1611 = vmatpush1.bf16.msra.mxu0 0
      %1612 = vmatprep.subr.bf16.mxu0 0
      %1613 = vmatpush1.bf16.msra.mxu0 0
      %1614 = vmatprep.subr.bf16.mxu0 0
      %1615 = vmatpush1.bf16.msra.mxu0 0
      %1616 = vmatprep.subr.bf16.mxu0 0
      %1617 = vmatpush1.bf16.msra.mxu0 0
      %1618 = vmatprep.mubr.bf16.mxu0 0
      %1619 = vmatmul.mubr.bf16.gmra.mrb[0].mxu0 %v1534
      %v1620 = vpop.f32.mrb[0].mxu0
      %v1621 = vadd.f32 0.0, %v1620
      %v1622 = vpop.f32.mrb[0].mxu0
      %v1623 = vpop.f32.mrb[0].mxu0
      %v1624 = vpop.f32.mrb[0].mxu0
      %1625 = vdwg.mxu0
      %v1626 = vadd.f32 %v1520, %v1580
      %v1627 = vadd.f32 %v1521, %v1582
      %v1628 = vadd.f32 %v1522, %v1621
      %s1629 = scalar_lea.vmem %s3, 22
      %v1630 = vld [vmem:[%s1629] sm:$0x3]
      %1631 = vrot.lane.b32.xlu0 %v1418, 126
      %v1632 = vpop.permute.xlu0 %1631
      %1633 = vrot.lane.b32.xlu0 %v1426, 126
      %v1634 = vpop.permute.xlu0 %1633
      %1635 = vrot.lane.b32.xlu0 %v1425, 126
      %v1636 = vpop.permute.xlu0 %1635
      %v1637 = vsel %vm667, %v1632, %v1634
      %v1638 = vsel %vm667, %v1634, %v1636
      %v1640 = vsel %vm471, %v1630, 0
      %v1643 = vsel %vm475, %v1637, 0
      %v1646 = vsel %vm475, %v1638, 0
      %v1649 = vsel %vm475, %v1636, 0
      %1651 = vmatprep.subr.bf16.mxu0 %v1646
      %1652 = vmatpush1.bf16.msra.mxu0 %v1643
      %1653 = vmatprep.subr.bf16.mxu0 0
      %1654 = vmatpush1.bf16.msra.mxu0 0
      %1655 = vmatprep.subr.bf16.mxu0 0
      %1656 = vmatpush1.bf16.msra.mxu0 0
      %1657 = vmatprep.subr.bf16.mxu0 0
      %1658 = vmatpush1.bf16.msra.mxu0 0
      %1659 = vmatprep.subr.bf16.mxu0 0
      %1660 = vmatpush1.bf16.msra.mxu0 0
      %1661 = vmatprep.subr.bf16.mxu0 0
      %1662 = vmatpush1.bf16.msra.mxu0 0
      %1663 = vmatprep.subr.bf16.mxu0 0
      %1664 = vmatpush1.bf16.msra.mxu0 0
      %1665 = vmatprep.subr.bf16.mxu0 0
      %1666 = vmatpush1.bf16.msra.mxu0 0
      %1667 = vmatprep.subr.bf16.mxu0 0
      %1668 = vmatpush1.bf16.msra.mxu0 0
      %1669 = vmatprep.subr.bf16.mxu0 0
      %1670 = vmatpush1.bf16.msra.mxu0 0
      %1671 = vmatprep.subr.bf16.mxu0 0
      %1672 = vmatpush1.bf16.msra.mxu0 0
      %1673 = vmatprep.subr.bf16.mxu0 0
      %1674 = vmatpush1.bf16.msra.mxu0 0
      %1675 = vmatprep.subr.bf16.mxu0 0
      %1676 = vmatpush1.bf16.msra.mxu0 0
      %1677 = vmatprep.subr.bf16.mxu0 0
      %1678 = vmatpush1.bf16.msra.mxu0 0
      %1679 = vmatprep.subr.bf16.mxu0 0
      %1680 = vmatpush1.bf16.msra.mxu0 0
      %1681 = vmatprep.subr.bf16.mxu0 0
      %1682 = vmatpush1.bf16.msra.mxu0 0
      %1683 = vmatprep.mubr.bf16.mxu0 0
      %1684 = vmatmul.mubr.bf16.gmra.mrb[0].mxu0 %v1640
      %v1685 = vpop.f32.mrb[0].mxu0
      %v1686 = vadd.f32 0.0, %v1685
      %v1687 = vpop.f32.mrb[0].mxu0
      %v1688 = vadd.f32 0.0, %v1687
      %v1689 = vpop.f32.mrb[0].mxu0
      %v1690 = vpop.f32.mrb[0].mxu0
      %1691 = vdwg.mxu0
      %1692 = vmatprep.subr.bf16.mxu0 0
      %1693 = vmatpush1.bf16.msra.mxu0 %v1649
      %1694 = vmatprep.subr.bf16.mxu0 0
      %1695 = vmatpush1.bf16.msra.mxu0 0
      %1696 = vmatprep.subr.bf16.mxu0 0
      %1697 = vmatpush1.bf16.msra.mxu0 0
      %1698 = vmatprep.subr.bf16.mxu0 0
      %1699 = vmatpush1.bf16.msra.mxu0 0
      %1700 = vmatprep.subr.bf16.mxu0 0
      %1701 = vmatpush1.bf16.msra.mxu0 0
      %1702 = vmatprep.subr.bf16.mxu0 0
      %1703 = vmatpush1.bf16.msra.mxu0 0
      %1704 = vmatprep.subr.bf16.mxu0 0
      %1705 = vmatpush1.bf16.msra.mxu0 0
      %1706 = vmatprep.subr.bf16.mxu0 0
      %1707 = vmatpush1.bf16.msra.mxu0 0
      %1708 = vmatprep.subr.bf16.mxu0 0
      %1709 = vmatpush1.bf16.msra.mxu0 0
      %1710 = vmatprep.subr.bf16.mxu0 0
      %1711 = vmatpush1.bf16.msra.mxu0 0
      %1712 = vmatprep.subr.bf16.mxu0 0
      %1713 = vmatpush1.bf16.msra.mxu0 0
      %1714 = vmatprep.subr.bf16.mxu0 0
      %1715 = vmatpush1.bf16.msra.mxu0 0
      %1716 = vmatprep.subr.bf16.mxu0 0
      %1717 = vmatpush1.bf16.msra.mxu0 0
      %1718 = vmatprep.subr.bf16.mxu0 0
      %1719 = vmatpush1.bf16.msra.mxu0 0
      %1720 = vmatprep.subr.bf16.mxu0 0
      %1721 = vmatpush1.bf16.msra.mxu0 0
      %1722 = vmatprep.subr.bf16.mxu0 0
      %1723 = vmatpush1.bf16.msra.mxu0 0
      %1724 = vmatprep.mubr.bf16.mxu0 0
      %1725 = vmatmul.mubr.bf16.gmra.mrb[0].mxu0 %v1640
      %v1726 = vpop.f32.mrb[0].mxu0
      %v1727 = vadd.f32 0.0, %v1726
      %v1728 = vpop.f32.mrb[0].mxu0
      %v1729 = vpop.f32.mrb[0].mxu0
      %v1730 = vpop.f32.mrb[0].mxu0
      %1731 = vdwg.mxu0
      %v1732 = vadd.f32 %v1626, %v1686
      %v1733 = vadd.f32 %v1627, %v1688
      %v1734 = vadd.f32 %v1628, %v1727
      %s1735 = scalar_lea.vmem %s3, 24
      %v1736 = vld [vmem:[%s1735] sm:$0x3]
      %1737 = vrot.lane.b32.xlu0 %v1418, 110
      %v1738 = vpop.permute.xlu0 %1737
      %1739 = vrot.lane.b32.xlu0 %v1426, 110
      %v1740 = vpop.permute.xlu0 %1739
      %1741 = vrot.lane.b32.xlu0 %v1425, 110
      %v1742 = vpop.permute.xlu0 %1741
      %v1743 = vsel %vm774, %v1738, %v1740
      %v1744 = vsel %vm774, %v1740, %v1742
      %v1746 = vsel %vm471, %v1736, 0
      %v1749 = vsel %vm475, %v1743, 0
      %v1752 = vsel %vm475, %v1744, 0
      %v1755 = vsel %vm475, %v1742, 0
      %1757 = vmatprep.subr.bf16.mxu0 %v1752
      %1758 = vmatpush1.bf16.msra.mxu0 %v1749
      %1759 = vmatprep.subr.bf16.mxu0 0
      %1760 = vmatpush1.bf16.msra.mxu0 0
      %1761 = vmatprep.subr.bf16.mxu0 0
      %1762 = vmatpush1.bf16.msra.mxu0 0
      %1763 = vmatprep.subr.bf16.mxu0 0
      %1764 = vmatpush1.bf16.msra.mxu0 0
      %1765 = vmatprep.subr.bf16.mxu0 0
      %1766 = vmatpush1.bf16.msra.mxu0 0
      %1767 = vmatprep.subr.bf16.mxu0 0
      %1768 = vmatpush1.bf16.msra.mxu0 0
      %1769 = vmatprep.subr.bf16.mxu0 0
      %1770 = vmatpush1.bf16.msra.mxu0 0
      %1771 = vmatprep.subr.bf16.mxu0 0
      %1772 = vmatpush1.bf16.msra.mxu0 0
      %1773 = vmatprep.subr.bf16.mxu0 0
      %1774 = vmatpush1.bf16.msra.mxu0 0
      %1775 = vmatprep.subr.bf16.mxu0 0
      %1776 = vmatpush1.bf16.msra.mxu0 0
      %1777 = vmatprep.subr.bf16.mxu0 0
      %1778 = vmatpush1.bf16.msra.mxu0 0
      %1779 = vmatprep.subr.bf16.mxu0 0
      %1780 = vmatpush1.bf16.msra.mxu0 0
      %1781 = vmatprep.subr.bf16.mxu0 0
      %1782 = vmatpush1.bf16.msra.mxu0 0
      %1783 = vmatprep.subr.bf16.mxu0 0
      %1784 = vmatpush1.bf16.msra.mxu0 0
      %1785 = vmatprep.subr.bf16.mxu0 0
      %1786 = vmatpush1.bf16.msra.mxu0 0
      %1787 = vmatprep.subr.bf16.mxu0 0
      %1788 = vmatpush1.bf16.msra.mxu0 0
      %1789 = vmatprep.mubr.bf16.mxu0 0
      %1790 = vmatmul.mubr.bf16.gmra.mrb[0].mxu0 %v1746
      %v1791 = vpop.f32.mrb[0].mxu0
      %v1792 = vadd.f32 0.0, %v1791
      %v1793 = vpop.f32.mrb[0].mxu0
      %v1794 = vadd.f32 0.0, %v1793
      %v1795 = vpop.f32.mrb[0].mxu0
      %v1796 = vpop.f32.mrb[0].mxu0
      %1797 = vdwg.mxu0
      %1798 = vmatprep.subr.bf16.mxu0 0
      %1799 = vmatpush1.bf16.msra.mxu0 %v1755
      %1800 = vmatprep.subr.bf16.mxu0 0
      %1801 = vmatpush1.bf16.msra.mxu0 0
      %1802 = vmatprep.subr.bf16.mxu0 0
      %1803 = vmatpush1.bf16.msra.mxu0 0
      %1804 = vmatprep.subr.bf16.mxu0 0
      %1805 = vmatpush1.bf16.msra.mxu0 0
      %1806 = vmatprep.subr.bf16.mxu0 0
      %1807 = vmatpush1.bf16.msra.mxu0 0
      %1808 = vmatprep.subr.bf16.mxu0 0
      %1809 = vmatpush1.bf16.msra.mxu0 0
      %1810 = vmatprep.subr.bf16.mxu0 0
      %1811 = vmatpush1.bf16.msra.mxu0 0
      %1812 = vmatprep.subr.bf16.mxu0 0
      %1813 = vmatpush1.bf16.msra.mxu0 0
      %1814 = vmatprep.subr.bf16.mxu0 0
      %1815 = vmatpush1.bf16.msra.mxu0 0
      %1816 = vmatprep.subr.bf16.mxu0 0
      %1817 = vmatpush1.bf16.msra.mxu0 0
      %1818 = vmatprep.subr.bf16.mxu0 0
      %1819 = vmatpush1.bf16.msra.mxu0 0
      %1820 = vmatprep.subr.bf16.mxu0 0
      %1821 = vmatpush1.bf16.msra.mxu0 0
      %1822 = vmatprep.subr.bf16.mxu0 0
      %1823 = vmatpush1.bf16.msra.mxu0 0
      %1824 = vmatprep.subr.bf16.mxu0 0
      %1825 = vmatpush1.bf16.msra.mxu0 0
      %1826 = vmatprep.subr.bf16.mxu0 0
      %1827 = vmatpush1.bf16.msra.mxu0 0
      %1828 = vmatprep.subr.bf16.mxu0 0
      %1829 = vmatpush1.bf16.msra.mxu0 0
      %1830 = vmatprep.mubr.bf16.mxu0 0
      %1831 = vmatmul.mubr.bf16.gmra.mrb[0].mxu0 %v1746
      %v1832 = vpop.f32.mrb[0].mxu0
      %v1833 = vadd.f32 0.0, %v1832
      %v1834 = vpop.f32.mrb[0].mxu0
      %v1835 = vpop.f32.mrb[0].mxu0
      %v1836 = vpop.f32.mrb[0].mxu0
      %1837 = vdwg.mxu0
      %v1838 = vadd.f32 %v1732, %v1792
      %v1839 = vadd.f32 %v1733, %v1794
      %v1840 = vadd.f32 %v1734, %v1833
      %s1841 = scalar_lea.vmem %s3, 26
      %v1842 = vld [vmem:[%s1841] sm:$0x3]
      %1843 = vrot.lane.b32.xlu0 %v1418, 109
      %v1844 = vpop.permute.xlu0 %1843
      %1845 = vrot.lane.b32.xlu0 %v1426, 109
      %v1846 = vpop.permute.xlu0 %1845
      %1847 = vrot.lane.b32.xlu0 %v1425, 109
      %v1848 = vpop.permute.xlu0 %1847
      %v1849 = vsel %vm881, %v1844, %v1846
      %v1850 = vsel %vm881, %v1846, %v1848
      %v1852 = vsel %vm471, %v1842, 0
      %v1855 = vsel %vm475, %v1849, 0
      %v1858 = vsel %vm475, %v1850, 0
      %v1861 = vsel %vm475, %v1848, 0
      %1863 = vmatprep.subr.bf16.mxu0 %v1858
      %1864 = vmatpush1.bf16.msra.mxu0 %v1855
      %1865 = vmatprep.subr.bf16.mxu0 0
      %1866 = vmatpush1.bf16.msra.mxu0 0
      %1867 = vmatprep.subr.bf16.mxu0 0
      %1868 = vmatpush1.bf16.msra.mxu0 0
      %1869 = vmatprep.subr.bf16.mxu0 0
      %1870 = vmatpush1.bf16.msra.mxu0 0
      %1871 = vmatprep.subr.bf16.mxu0 0
      %1872 = vmatpush1.bf16.msra.mxu0 0
      %1873 = vmatprep.subr.bf16.mxu0 0
      %1874 = vmatpush1.bf16.msra.mxu0 0
      %1875 = vmatprep.subr.bf16.mxu0 0
      %1876 = vmatpush1.bf16.msra.mxu0 0
      %1877 = vmatprep.subr.bf16.mxu0 0
      %1878 = vmatpush1.bf16.msra.mxu0 0
      %1879 = vmatprep.subr.bf16.mxu0 0
      %1880 = vmatpush1.bf16.msra.mxu0 0
      %1881 = vmatprep.subr.bf16.mxu0 0
      %1882 = vmatpush1.bf16.msra.mxu0 0
      %1883 = vmatprep.subr.bf16.mxu0 0
      %1884 = vmatpush1.bf16.msra.mxu0 0
      %1885 = vmatprep.subr.bf16.mxu0 0
      %1886 = vmatpush1.bf16.msra.mxu0 0
      %1887 = vmatprep.subr.bf16.mxu0 0
      %1888 = vmatpush1.bf16.msra.mxu0 0
      %1889 = vmatprep.subr.bf16.mxu0 0
      %1890 = vmatpush1.bf16.msra.mxu0 0
      %1891 = vmatprep.subr.bf16.mxu0 0
      %1892 = vmatpush1.bf16.msra.mxu0 0
      %1893 = vmatprep.subr.bf16.mxu0 0
      %1894 = vmatpush1.bf16.msra.mxu0 0
      %1895 = vmatprep.mubr.bf16.mxu0 0
      %1896 = vmatmul.mubr.bf16.gmra.mrb[0].mxu0 %v1852
      %v1897 = vpop.f32.mrb[0].mxu0
      %v1898 = vadd.f32 0.0, %v1897
      %v1899 = vpop.f32.mrb[0].mxu0
      %v1900 = vadd.f32 0.0, %v1899
      %v1901 = vpop.f32.mrb[0].mxu0
      %v1902 = vpop.f32.mrb[0].mxu0
      %1903 = vdwg.mxu0
      %1904 = vmatprep.subr.bf16.mxu0 0
      %1905 = vmatpush1.bf16.msra.mxu0 %v1861
      %1906 = vmatprep.subr.bf16.mxu0 0
      %1907 = vmatpush1.bf16.msra.mxu0 0
      %1908 = vmatprep.subr.bf16.mxu0 0
      %1909 = vmatpush1.bf16.msra.mxu0 0
      %1910 = vmatprep.subr.bf16.mxu0 0
      %1911 = vmatpush1.bf16.msra.mxu0 0
      %1912 = vmatprep.subr.bf16.mxu0 0
      %1913 = vmatpush1.bf16.msra.mxu0 0
      %1914 = vmatprep.subr.bf16.mxu0 0
      %1915 = vmatpush1.bf16.msra.mxu0 0
      %1916 = vmatprep.subr.bf16.mxu0 0
      %1917 = vmatpush1.bf16.msra.mxu0 0
      %1918 = vmatprep.subr.bf16.mxu0 0
      %1919 = vmatpush1.bf16.msra.mxu0 0
      %1920 = vmatprep.subr.bf16.mxu0 0
      %1921 = vmatpush1.bf16.msra.mxu0 0
      %1922 = vmatprep.subr.bf16.mxu0 0
      %1923 = vmatpush1.bf16.msra.mxu0 0
      %1924 = vmatprep.subr.bf16.mxu0 0
      %1925 = vmatpush1.bf16.msra.mxu0 0
      %1926 = vmatprep.subr.bf16.mxu0 0
      %1927 = vmatpush1.bf16.msra.mxu0 0
      %1928 = vmatprep.subr.bf16.mxu0 0
      %1929 = vmatpush1.bf16.msra.mxu0 0
      %1930 = vmatprep.subr.bf16.mxu0 0
      %1931 = vmatpush1.bf16.msra.mxu0 0
      %1932 = vmatprep.subr.bf16.mxu0 0
      %1933 = vmatpush1.bf16.msra.mxu0 0
      %1934 = vmatprep.subr.bf16.mxu0 0
      %1935 = vmatpush1.bf16.msra.mxu0 0
      %1936 = vmatprep.mubr.bf16.mxu0 0
      %1937 = vmatmul.mubr.bf16.gmra.mrb[0].mxu0 %v1852
      %v1938 = vpop.f32.mrb[0].mxu0
      %v1939 = vadd.f32 0.0, %v1938
      %v1940 = vpop.f32.mrb[0].mxu0
      %v1941 = vpop.f32.mrb[0].mxu0
      %v1942 = vpop.f32.mrb[0].mxu0
      %1943 = vdwg.mxu0
      %v1944 = vadd.f32 %v1838, %v1898
      %v1945 = vadd.f32 %v1839, %v1900
      %v1946 = vadd.f32 %v1840, %v1939
      %s1947 = scalar_lea.vmem %s3, 28
      %v1948 = vld [vmem:[%s1947] sm:$0x3]
      %1949 = vrot.lane.b32.xlu0 %v1418, 108
      %v1950 = vpop.permute.xlu0 %1949
      %1951 = vrot.lane.b32.xlu0 %v1426, 108
      %v1952 = vpop.permute.xlu0 %1951
      %1953 = vrot.lane.b32.xlu0 %v1425, 108
      %v1954 = vpop.permute.xlu0 %1953
      %v1955 = vsel %vm988, %v1950, %v1952
      %v1956 = vsel %vm988, %v1952, %v1954
      %v1958 = vsel %vm471, %v1948, 0
      %v1961 = vsel %vm475, %v1955, 0
      %v1964 = vsel %vm475, %v1956, 0
      %v1967 = vsel %vm475, %v1954, 0
      %1969 = vmatprep.subr.bf16.mxu0 %v1964
      %1970 = vmatpush1.bf16.msra.mxu0 %v1961
      %1971 = vmatprep.subr.bf16.mxu0 0
      %1972 = vmatpush1.bf16.msra.mxu0 0
      %1973 = vmatprep.subr.bf16.mxu0 0
      %1974 = vmatpush1.bf16.msra.mxu0 0
      %1975 = vmatprep.subr.bf16.mxu0 0
      %1976 = vmatpush1.bf16.msra.mxu0 0
      %1977 = vmatprep.subr.bf16.mxu0 0
      %1978 = vmatpush1.bf16.msra.mxu0 0
      %1979 = vmatprep.subr.bf16.mxu0 0
      %1980 = vmatpush1.bf16.msra.mxu0 0
      %1981 = vmatprep.subr.bf16.mxu0 0
      %1982 = vmatpush1.bf16.msra.mxu0 0
      %1983 = vmatprep.subr.bf16.mxu0 0
      %1984 = vmatpush1.bf16.msra.mxu0 0
      %1985 = vmatprep.subr.bf16.mxu0 0
      %1986 = vmatpush1.bf16.msra.mxu0 0
      %1987 = vmatprep.subr.bf16.mxu0 0
      %1988 = vmatpush1.bf16.msra.mxu0 0
      %1989 = vmatprep.subr.bf16.mxu0 0
      %1990 = vmatpush1.bf16.msra.mxu0 0
      %1991 = vmatprep.subr.bf16.mxu0 0
      %1992 = vmatpush1.bf16.msra.mxu0 0
      %1993 = vmatprep.subr.bf16.mxu0 0
      %1994 = vmatpush1.bf16.msra.mxu0 0
      %1995 = vmatprep.subr.bf16.mxu0 0
      %1996 = vmatpush1.bf16.msra.mxu0 0
      %1997 = vmatprep.subr.bf16.mxu0 0
      %1998 = vmatpush1.bf16.msra.mxu0 0
      %1999 = vmatprep.subr.bf16.mxu0 0
      %2000 = vmatpush1.bf16.msra.mxu0 0
      %2001 = vmatprep.mubr.bf16.mxu0 0
      %2002 = vmatmul.mubr.bf16.gmra.mrb[0].mxu0 %v1958
      %v2003 = vpop.f32.mrb[0].mxu0
      %v2004 = vadd.f32 0.0, %v2003
      %v2005 = vpop.f32.mrb[0].mxu0
      %v2006 = vadd.f32 0.0, %v2005
      %v2007 = vpop.f32.mrb[0].mxu0
      %v2008 = vpop.f32.mrb[0].mxu0
      %2009 = vdwg.mxu0
      %2010 = vmatprep.subr.bf16.mxu0 0
      %2011 = vmatpush1.bf16.msra.mxu0 %v1967
      %2012 = vmatprep.subr.bf16.mxu0 0
      %2013 = vmatpush1.bf16.msra.mxu0 0
      %2014 = vmatprep.subr.bf16.mxu0 0
      %2015 = vmatpush1.bf16.msra.mxu0 0
      %2016 = vmatprep.subr.bf16.mxu0 0
      %2017 = vmatpush1.bf16.msra.mxu0 0
      %2018 = vmatprep.subr.bf16.mxu0 0
      %2019 = vmatpush1.bf16.msra.mxu0 0
      %2020 = vmatprep.subr.bf16.mxu0 0
      %2021 = vmatpush1.bf16.msra.mxu0 0
      %2022 = vmatprep.subr.bf16.mxu0 0
      %2023 = vmatpush1.bf16.msra.mxu0 0
      %2024 = vmatprep.subr.bf16.mxu0 0
      %2025 = vmatpush1.bf16.msra.mxu0 0
      %2026 = vmatprep.subr.bf16.mxu0 0
      %2027 = vmatpush1.bf16.msra.mxu0 0
      %2028 = vmatprep.subr.bf16.mxu0 0
      %2029 = vmatpush1.bf16.msra.mxu0 0
      %2030 = vmatprep.subr.bf16.mxu0 0
      %2031 = vmatpush1.bf16.msra.mxu0 0
      %2032 = vmatprep.subr.bf16.mxu0 0
      %2033 = vmatpush1.bf16.msra.mxu0 0
      %2034 = vmatprep.subr.bf16.mxu0 0
      %2035 = vmatpush1.bf16.msra.mxu0 0
      %2036 = vmatprep.subr.bf16.mxu0 0
      %2037 = vmatpush1.bf16.msra.mxu0 0
      %2038 = vmatprep.subr.bf16.mxu0 0
      %2039 = vmatpush1.bf16.msra.mxu0 0
      %2040 = vmatprep.subr.bf16.mxu0 0
      %2041 = vmatpush1.bf16.msra.mxu0 0
      %2042 = vmatprep.mubr.bf16.mxu0 0
      %2043 = vmatmul.mubr.bf16.gmra.mrb[0].mxu0 %v1958
      %v2044 = vpop.f32.mrb[0].mxu0
      %v2045 = vadd.f32 0.0, %v2044
      %v2046 = vpop.f32.mrb[0].mxu0
      %v2047 = vpop.f32.mrb[0].mxu0
      %v2048 = vpop.f32.mrb[0].mxu0
      %2049 = vdwg.mxu0
      %v2050 = vadd.f32 %v1944, %v2004
      %v2051 = vadd.f32 %v1945, %v2006
      %v2052 = vadd.f32 %v1946, %v2045
      %s2053 = scalar_lea.vmem %s3, 30
      %v2054 = vld [vmem:[%s2053] sm:$0x3]
      %2055 = vrot.lane.b32.xlu0 %v1418, 92
      %v2056 = vpop.permute.xlu0 %2055
      %2057 = vrot.lane.b32.xlu0 %v1426, 92
      %v2058 = vpop.permute.xlu0 %2057
      %2059 = vrot.lane.b32.xlu0 %v1425, 92
      %v2060 = vpop.permute.xlu0 %2059
      %v2061 = vsel %vm1095, %v2056, %v2058
      %v2062 = vsel %vm1095, %v2058, %v2060
      %v2064 = vsel %vm471, %v2054, 0
      %v2067 = vsel %vm475, %v2061, 0
      %v2070 = vsel %vm475, %v2062, 0
      %v2073 = vsel %vm475, %v2060, 0
      %2075 = vmatprep.subr.bf16.mxu0 %v2070
      %2076 = vmatpush1.bf16.msra.mxu0 %v2067
      %2077 = vmatprep.subr.bf16.mxu0 0
      %2078 = vmatpush1.bf16.msra.mxu0 0
      %2079 = vmatprep.subr.bf16.mxu0 0
      %2080 = vmatpush1.bf16.msra.mxu0 0
      %2081 = vmatprep.subr.bf16.mxu0 0
      %2082 = vmatpush1.bf16.msra.mxu0 0
      %2083 = vmatprep.subr.bf16.mxu0 0
      %2084 = vmatpush1.bf16.msra.mxu0 0
      %2085 = vmatprep.subr.bf16.mxu0 0
      %2086 = vmatpush1.bf16.msra.mxu0 0
      %2087 = vmatprep.subr.bf16.mxu0 0
      %2088 = vmatpush1.bf16.msra.mxu0 0
      %2089 = vmatprep.subr.bf16.mxu0 0
      %2090 = vmatpush1.bf16.msra.mxu0 0
      %2091 = vmatprep.subr.bf16.mxu0 0
      %2092 = vmatpush1.bf16.msra.mxu0 0
      %2093 = vmatprep.subr.bf16.mxu0 0
      %2094 = vmatpush1.bf16.msra.mxu0 0
      %2095 = vmatprep.subr.bf16.mxu0 0
      %2096 = vmatpush1.bf16.msra.mxu0 0
      %2097 = vmatprep.subr.bf16.mxu0 0
      %2098 = vmatpush1.bf16.msra.mxu0 0
      %2099 = vmatprep.subr.bf16.mxu0 0
      %2100 = vmatpush1.bf16.msra.mxu0 0
      %2101 = vmatprep.subr.bf16.mxu0 0
      %2102 = vmatpush1.bf16.msra.mxu0 0
      %2103 = vmatprep.subr.bf16.mxu0 0
      %2104 = vmatpush1.bf16.msra.mxu0 0
      %2105 = vmatprep.subr.bf16.mxu0 0
      %2106 = vmatpush1.bf16.msra.mxu0 0
      %2107 = vmatprep.mubr.bf16.mxu0 0
      %2108 = vmatmul.mubr.bf16.gmra.mrb[0].mxu0 %v2064
      %v2109 = vpop.f32.mrb[0].mxu0
      %v2110 = vadd.f32 0.0, %v2109
      %v2111 = vpop.f32.mrb[0].mxu0
      %v2112 = vadd.f32 0.0, %v2111
      %v2113 = vpop.f32.mrb[0].mxu0
      %v2114 = vpop.f32.mrb[0].mxu0
      %2115 = vdwg.mxu0
      %2116 = vmatprep.subr.bf16.mxu0 0
      %2117 = vmatpush1.bf16.msra.mxu0 %v2073
      %2118 = vmatprep.subr.bf16.mxu0 0
      %2119 = vmatpush1.bf16.msra.mxu0 0
      %2120 = vmatprep.subr.bf16.mxu0 0
      %2121 = vmatpush1.bf16.msra.mxu0 0
      %2122 = vmatprep.subr.bf16.mxu0 0
      %2123 = vmatpush1.bf16.msra.mxu0 0
      %2124 = vmatprep.subr.bf16.mxu0 0
      %2125 = vmatpush1.bf16.msra.mxu0 0
      %2126 = vmatprep.subr.bf16.mxu0 0
      %2127 = vmatpush1.bf16.msra.mxu0 0
      %2128 = vmatprep.subr.bf16.mxu0 0
      %2129 = vmatpush1.bf16.msra.mxu0 0
      %2130 = vmatprep.subr.bf16.mxu0 0
      %2131 = vmatpush1.bf16.msra.mxu0 0
      %2132 = vmatprep.subr.bf16.mxu0 0
      %2133 = vmatpush1.bf16.msra.mxu0 0
      %2134 = vmatprep.subr.bf16.mxu0 0
      %2135 = vmatpush1.bf16.msra.mxu0 0
      %2136 = vmatprep.subr.bf16.mxu0 0
      %2137 = vmatpush1.bf16.msra.mxu0 0
      %2138 = vmatprep.subr.bf16.mxu0 0
      %2139 = vmatpush1.bf16.msra.mxu0 0
      %2140 = vmatprep.subr.bf16.mxu0 0
      %2141 = vmatpush1.bf16.msra.mxu0 0
      %2142 = vmatprep.subr.bf16.mxu0 0
      %2143 = vmatpush1.bf16.msra.mxu0 0
      %2144 = vmatprep.subr.bf16.mxu0 0
      %2145 = vmatpush1.bf16.msra.mxu0 0
      %2146 = vmatprep.subr.bf16.mxu0 0
      %2147 = vmatpush1.bf16.msra.mxu0 0
      %2148 = vmatprep.mubr.bf16.mxu0 0
      %2149 = vmatmul.mubr.bf16.gmra.mrb[0].mxu0 %v2064
      %v2150 = vpop.f32.mrb[0].mxu0
      %v2151 = vadd.f32 0.0, %v2150
      %v2152 = vpop.f32.mrb[0].mxu0
      %v2153 = vpop.f32.mrb[0].mxu0
      %v2154 = vpop.f32.mrb[0].mxu0
      %2155 = vdwg.mxu0
      %v2156 = vadd.f32 %v2050, %v2110
      %v2157 = vadd.f32 %v2051, %v2112
      %v2158 = vadd.f32 %v2052, %v2151
      %s2159 = scalar_lea.vmem %s3, 32
      %v2160 = vld [vmem:[%s2159] sm:$0x3]
      %2161 = vrot.lane.b32.xlu0 %v1418, 91
      %v2162 = vpop.permute.xlu0 %2161
      %2163 = vrot.lane.b32.xlu0 %v1426, 91
      %v2164 = vpop.permute.xlu0 %2163
      %2165 = vrot.lane.b32.xlu0 %v1425, 91
      %v2166 = vpop.permute.xlu0 %2165
      %v2167 = vsel %vm1202, %v2162, %v2164
      %v2168 = vsel %vm1202, %v2164, %v2166
      %v2170 = vsel %vm471, %v2160, 0
      %v2173 = vsel %vm475, %v2167, 0
      %v2176 = vsel %vm475, %v2168, 0
      %v2179 = vsel %vm475, %v2166, 0
      %2181 = vmatprep.subr.bf16.mxu0 %v2176
      %2182 = vmatpush1.bf16.msra.mxu0 %v2173
      %2183 = vmatprep.subr.bf16.mxu0 0
      %2184 = vmatpush1.bf16.msra.mxu0 0
      %2185 = vmatprep.subr.bf16.mxu0 0
      %2186 = vmatpush1.bf16.msra.mxu0 0
      %2187 = vmatprep.subr.bf16.mxu0 0
      %2188 = vmatpush1.bf16.msra.mxu0 0
      %2189 = vmatprep.subr.bf16.mxu0 0
      %2190 = vmatpush1.bf16.msra.mxu0 0
      %2191 = vmatprep.subr.bf16.mxu0 0
      %2192 = vmatpush1.bf16.msra.mxu0 0
      %2193 = vmatprep.subr.bf16.mxu0 0
      %2194 = vmatpush1.bf16.msra.mxu0 0
      %2195 = vmatprep.subr.bf16.mxu0 0
      %2196 = vmatpush1.bf16.msra.mxu0 0
      %2197 = vmatprep.subr.bf16.mxu0 0
      %2198 = vmatpush1.bf16.msra.mxu0 0
      %2199 = vmatprep.subr.bf16.mxu0 0
      %2200 = vmatpush1.bf16.msra.mxu0 0
      %2201 = vmatprep.subr.bf16.mxu0 0
      %2202 = vmatpush1.bf16.msra.mxu0 0
      %2203 = vmatprep.subr.bf16.mxu0 0
      %2204 = vmatpush1.bf16.msra.mxu0 0
      %2205 = vmatprep.subr.bf16.mxu0 0
      %2206 = vmatpush1.bf16.msra.mxu0 0
      %2207 = vmatprep.subr.bf16.mxu0 0
      %2208 = vmatpush1.bf16.msra.mxu0 0
      %2209 = vmatprep.subr.bf16.mxu0 0
      %2210 = vmatpush1.bf16.msra.mxu0 0
      %2211 = vmatprep.subr.bf16.mxu0 0
      %2212 = vmatpush1.bf16.msra.mxu0 0
      %2213 = vmatprep.mubr.bf16.mxu0 0
      %2214 = vmatmul.mubr.bf16.gmra.mrb[0].mxu0 %v2170
      %v2215 = vpop.f32.mrb[0].mxu0
      %v2216 = vadd.f32 0.0, %v2215
      %v2217 = vpop.f32.mrb[0].mxu0
      %v2218 = vadd.f32 0.0, %v2217
      %v2219 = vpop.f32.mrb[0].mxu0
      %v2220 = vpop.f32.mrb[0].mxu0
      %2221 = vdwg.mxu0
      %2222 = vmatprep.subr.bf16.mxu0 0
      %2223 = vmatpush1.bf16.msra.mxu0 %v2179
      %2224 = vmatprep.subr.bf16.mxu0 0
      %2225 = vmatpush1.bf16.msra.mxu0 0
      %2226 = vmatprep.subr.bf16.mxu0 0
      %2227 = vmatpush1.bf16.msra.mxu0 0
      %2228 = vmatprep.subr.bf16.mxu0 0
      %2229 = vmatpush1.bf16.msra.mxu0 0
      %2230 = vmatprep.subr.bf16.mxu0 0
      %2231 = vmatpush1.bf16.msra.mxu0 0
      %2232 = vmatprep.subr.bf16.mxu0 0
      %2233 = vmatpush1.bf16.msra.mxu0 0
      %2234 = vmatprep.subr.bf16.mxu0 0
      %2235 = vmatpush1.bf16.msra.mxu0 0
      %2236 = vmatprep.subr.bf16.mxu0 0
      %2237 = vmatpush1.bf16.msra.mxu0 0
      %2238 = vmatprep.subr.bf16.mxu0 0
      %2239 = vmatpush1.bf16.msra.mxu0 0
      %2240 = vmatprep.subr.bf16.mxu0 0
      %2241 = vmatpush1.bf16.msra.mxu0 0
      %2242 = vmatprep.subr.bf16.mxu0 0
      %2243 = vmatpush1.bf16.msra.mxu0 0
      %2244 = vmatprep.subr.bf16.mxu0 0
      %2245 = vmatpush1.bf16.msra.mxu0 0
      %2246 = vmatprep.subr.bf16.mxu0 0
      %2247 = vmatpush1.bf16.msra.mxu0 0
      %2248 = vmatprep.subr.bf16.mxu0 0
      %2249 = vmatpush1.bf16.msra.mxu0 0
      %2250 = vmatprep.subr.bf16.mxu0 0
      %2251 = vmatpush1.bf16.msra.mxu0 0
      %2252 = vmatprep.subr.bf16.mxu0 0
      %2253 = vmatpush1.bf16.msra.mxu0 0
      %2254 = vmatprep.mubr.bf16.mxu0 0
      %2255 = vmatmul.mubr.bf16.gmra.mrb[0].mxu0 %v2170
      %v2256 = vpop.f32.mrb[0].mxu0
      %v2257 = vadd.f32 0.0, %v2256
      %v2258 = vpop.f32.mrb[0].mxu0
      %v2259 = vpop.f32.mrb[0].mxu0
      %v2260 = vpop.f32.mrb[0].mxu0
      %2261 = vdwg.mxu0
      %v2262 = vadd.f32 %v2156, %v2216
      %v2263 = vadd.f32 %v2157, %v2218
      %v2264 = vadd.f32 %v2158, %v2257
      %s2265 = scalar_lea.vmem %s3, 34
      %v2266 = vld [vmem:[%s2265] sm:$0x3]
      %2267 = vrot.lane.b32.xlu0 %v1418, 90
      %v2268 = vpop.permute.xlu0 %2267
      %2269 = vrot.lane.b32.xlu0 %v1426, 90
      %v2270 = vpop.permute.xlu0 %2269
      %2271 = vrot.lane.b32.xlu0 %v1425, 90
      %v2272 = vpop.permute.xlu0 %2271
      %v2273 = vsel %vm1309, %v2268, %v2270
      %v2274 = vsel %vm1309, %v2270, %v2272
      %v2276 = vsel %vm471, %v2266, 0
      %v2279 = vsel %vm475, %v2273, 0
      %v2282 = vsel %vm475, %v2274, 0
      %v2285 = vsel %vm475, %v2272, 0
      %2287 = vmatprep.subr.bf16.mxu0 %v2282
      %2288 = vmatpush1.bf16.msra.mxu0 %v2279
      %2289 = vmatprep.subr.bf16.mxu0 0
      %2290 = vmatpush1.bf16.msra.mxu0 0
      %2291 = vmatprep.subr.bf16.mxu0 0
      %2292 = vmatpush1.bf16.msra.mxu0 0
      %2293 = vmatprep.subr.bf16.mxu0 0
      %2294 = vmatpush1.bf16.msra.mxu0 0
      %2295 = vmatprep.subr.bf16.mxu0 0
      %2296 = vmatpush1.bf16.msra.mxu0 0
      %2297 = vmatprep.subr.bf16.mxu0 0
      %2298 = vmatpush1.bf16.msra.mxu0 0
      %2299 = vmatprep.subr.bf16.mxu0 0
      %2300 = vmatpush1.bf16.msra.mxu0 0
      %2301 = vmatprep.subr.bf16.mxu0 0
      %2302 = vmatpush1.bf16.msra.mxu0 0
      %2303 = vmatprep.subr.bf16.mxu0 0
      %2304 = vmatpush1.bf16.msra.mxu0 0
      %2305 = vmatprep.subr.bf16.mxu0 0
      %2306 = vmatpush1.bf16.msra.mxu0 0
      %2307 = vmatprep.subr.bf16.mxu0 0
      %2308 = vmatpush1.bf16.msra.mxu0 0
      %2309 = vmatprep.subr.bf16.mxu0 0
      %2310 = vmatpush1.bf16.msra.mxu0 0
      %2311 = vmatprep.subr.bf16.mxu0 0
      %2312 = vmatpush1.bf16.msra.mxu0 0
      %2313 = vmatprep.subr.bf16.mxu0 0
      %2314 = vmatpush1.bf16.msra.mxu0 0
      %2315 = vmatprep.subr.bf16.mxu0 0
      %2316 = vmatpush1.bf16.msra.mxu0 0
      %2317 = vmatprep.subr.bf16.mxu0 0
      %2318 = vmatpush1.bf16.msra.mxu0 0
      %2319 = vmatprep.mubr.bf16.mxu0 0
      %2320 = vmatmul.mubr.bf16.gmra.mrb[0].mxu0 %v2276
      %v2321 = vpop.f32.mrb[0].mxu0
      %v2322 = vadd.f32 0.0, %v2321
      %v2323 = vpop.f32.mrb[0].mxu0
      %v2324 = vadd.f32 0.0, %v2323
      %v2325 = vpop.f32.mrb[0].mxu0
      %v2326 = vpop.f32.mrb[0].mxu0
      %2327 = vdwg.mxu0
      %2328 = vmatprep.subr.bf16.mxu0 0
      %2329 = vmatpush1.bf16.msra.mxu0 %v2285
      %2330 = vmatprep.subr.bf16.mxu0 0
      %2331 = vmatpush1.bf16.msra.mxu0 0
      %2332 = vmatprep.subr.bf16.mxu0 0
      %2333 = vmatpush1.bf16.msra.mxu0 0
      %2334 = vmatprep.subr.bf16.mxu0 0
      %2335 = vmatpush1.bf16.msra.mxu0 0
      %2336 = vmatprep.subr.bf16.mxu0 0
      %2337 = vmatpush1.bf16.msra.mxu0 0
      %2338 = vmatprep.subr.bf16.mxu0 0
      %2339 = vmatpush1.bf16.msra.mxu0 0
      %2340 = vmatprep.subr.bf16.mxu0 0
      %2341 = vmatpush1.bf16.msra.mxu0 0
      %2342 = vmatprep.subr.bf16.mxu0 0
      %2343 = vmatpush1.bf16.msra.mxu0 0
      %2344 = vmatprep.subr.bf16.mxu0 0
      %2345 = vmatpush1.bf16.msra.mxu0 0
      %2346 = vmatprep.subr.bf16.mxu0 0
      %2347 = vmatpush1.bf16.msra.mxu0 0
      %2348 = vmatprep.subr.bf16.mxu0 0
      %2349 = vmatpush1.bf16.msra.mxu0 0
      %2350 = vmatprep.subr.bf16.mxu0 0
      %2351 = vmatpush1.bf16.msra.mxu0 0
      %2352 = vmatprep.subr.bf16.mxu0 0
      %2353 = vmatpush1.bf16.msra.mxu0 0
      %2354 = vmatprep.subr.bf16.mxu0 0
      %2355 = vmatpush1.bf16.msra.mxu0 0
      %2356 = vmatprep.subr.bf16.mxu0 0
      %2357 = vmatpush1.bf16.msra.mxu0 0
      %2358 = vmatprep.subr.bf16.mxu0 0
      %2359 = vmatpush1.bf16.msra.mxu0 0
      %2360 = vmatprep.mubr.bf16.mxu0 0
      %2361 = vmatmul.mubr.bf16.gmra.mrb[0].mxu0 %v2276
      %v2362 = vpop.f32.mrb[0].mxu0
      %v2363 = vadd.f32 0.0, %v2362
      %v2364 = vpop.f32.mrb[0].mxu0
      %v2365 = vpop.f32.mrb[0].mxu0
      %v2366 = vpop.f32.mrb[0].mxu0
      %2367 = vdwg.mxu0
      %v2368 = vadd.f32 %v2262, %v2322
      %v2369 = vadd.f32 %v2263, %v2324
      %v2370 = vadd.f32 %v2264, %v2363
      %s2371 = scalar_lea.vmem %s3, 36
      %v2372 = vld [vmem:[%s2371] sm:$0x3]
      %v2374 = vcombine.high %v441, %v441
      %v2376 = vunpack.c.l.s4 1983009808
      %v2377 = vunpack.c.0.s8 %v2376
      %v2378 = vlaneseq
      %v2379 = vshrl.u32 %v2378, 7
      %v2380 = vsub.s32 %v2377, %v2379
      %v2381 = vrot.slane %v441, %v2380
      %v2383 = vunpack.c.l.s4 1983009808
      %v2384 = vunpack.c.0.s8 %v2383
      %v2385 = vlaneseq
      %v2386 = vshrl.u32 %v2385, 7
      %v2387 = vsub.s32 %v2384, %v2386
      %v2388 = vrot.slane %v2374, %v2387
      %v2389 = vcombine.high %v2381, %v2381
      %v2391 = vsel %vm471, %v2372, 0
      %v2394 = vsel %vm475, %v2381, 0
      %v2397 = vsel %vm475, %v2389, 0
      %v2400 = vsel %vm475, %v2388, 0
      %2402 = vmatprep.subr.bf16.mxu0 %v2397
      %2403 = vmatpush1.bf16.msra.mxu0 %v2394
      %2404 = vmatprep.subr.bf16.mxu0 0
      %2405 = vmatpush1.bf16.msra.mxu0 0
      %2406 = vmatprep.subr.bf16.mxu0 0
      %2407 = vmatpush1.bf16.msra.mxu0 0
      %2408 = vmatprep.subr.bf16.mxu0 0
      %2409 = vmatpush1.bf16.msra.mxu0 0
      %2410 = vmatprep.subr.bf16.mxu0 0
      %2411 = vmatpush1.bf16.msra.mxu0 0
      %2412 = vmatprep.subr.bf16.mxu0 0
      %2413 = vmatpush1.bf16.msra.mxu0 0
      %2414 = vmatprep.subr.bf16.mxu0 0
      %2415 = vmatpush1.bf16.msra.mxu0 0
      %2416 = vmatprep.subr.bf16.mxu0 0
      %2417 = vmatpush1.bf16.msra.mxu0 0
      %2418 = vmatprep.subr.bf16.mxu0 0
      %2419 = vmatpush1.bf16.msra.mxu0 0
      %2420 = vmatprep.subr.bf16.mxu0 0
      %2421 = vmatpush1.bf16.msra.mxu0 0
      %2422 = vmatprep.subr.bf16.mxu0 0
      %2423 = vmatpush1.bf16.msra.mxu0 0
      %2424 = vmatprep.subr.bf16.mxu0 0
      %2425 = vmatpush1.bf16.msra.mxu0 0
      %2426 = vmatprep.subr.bf16.mxu0 0
      %2427 = vmatpush1.bf16.msra.mxu0 0
      %2428 = vmatprep.subr.bf16.mxu0 0
      %2429 = vmatpush1.bf16.msra.mxu0 0
      %2430 = vmatprep.subr.bf16.mxu0 0
      %2431 = vmatpush1.bf16.msra.mxu0 0
      %2432 = vmatprep.subr.bf16.mxu0 0
      %2433 = vmatpush1.bf16.msra.mxu0 0
      %2434 = vmatprep.mubr.bf16.mxu0 0
      %2435 = vmatmul.mubr.bf16.gmra.mrb[0].mxu0 %v2391
      %v2436 = vpop.f32.mrb[0].mxu0
      %v2437 = vadd.f32 0.0, %v2436
      %v2438 = vpop.f32.mrb[0].mxu0
      %v2439 = vadd.f32 0.0, %v2438
      %v2440 = vpop.f32.mrb[0].mxu0
      %v2441 = vpop.f32.mrb[0].mxu0
      %2442 = vdwg.mxu0
      %2443 = vmatprep.subr.bf16.mxu0 0
      %2444 = vmatpush1.bf16.msra.mxu0 %v2400
      %2445 = vmatprep.subr.bf16.mxu0 0
      %2446 = vmatpush1.bf16.msra.mxu0 0
      %2447 = vmatprep.subr.bf16.mxu0 0
      %2448 = vmatpush1.bf16.msra.mxu0 0
      %2449 = vmatprep.subr.bf16.mxu0 0
      %2450 = vmatpush1.bf16.msra.mxu0 0
      %2451 = vmatprep.subr.bf16.mxu0 0
      %2452 = vmatpush1.bf16.msra.mxu0 0
      %2453 = vmatprep.subr.bf16.mxu0 0
      %2454 = vmatpush1.bf16.msra.mxu0 0
      %2455 = vmatprep.subr.bf16.mxu0 0
      %2456 = vmatpush1.bf16.msra.mxu0 0
      %2457 = vmatprep.subr.bf16.mxu0 0
      %2458 = vmatpush1.bf16.msra.mxu0 0
      %2459 = vmatprep.subr.bf16.mxu0 0
      %2460 = vmatpush1.bf16.msra.mxu0 0
      %2461 = vmatprep.subr.bf16.mxu0 0
      %2462 = vmatpush1.bf16.msra.mxu0 0
      %2463 = vmatprep.subr.bf16.mxu0 0
      %2464 = vmatpush1.bf16.msra.mxu0 0
      %2465 = vmatprep.subr.bf16.mxu0 0
      %2466 = vmatpush1.bf16.msra.mxu0 0
      %2467 = vmatprep.subr.bf16.mxu0 0
      %2468 = vmatpush1.bf16.msra.mxu0 0
      %2469 = vmatprep.subr.bf16.mxu0 0
      %2470 = vmatpush1.bf16.msra.mxu0 0
      %2471 = vmatprep.subr.bf16.mxu0 0
      %2472 = vmatpush1.bf16.msra.mxu0 0
      %2473 = vmatprep.subr.bf16.mxu0 0
      %2474 = vmatpush1.bf16.msra.mxu0 0
      %2475 = vmatprep.mubr.bf16.mxu0 0
      %2476 = vmatmul.mubr.bf16.gmra.mrb[0].mxu0 %v2391
      %v2477 = vpop.f32.mrb[0].mxu0
      %v2478 = vadd.f32 0.0, %v2477
      %v2479 = vpop.f32.mrb[0].mxu0
      %v2480 = vpop.f32.mrb[0].mxu0
      %v2481 = vpop.f32.mrb[0].mxu0
      %2482 = vdwg.mxu0
      %v2483 = vadd.f32 %v2368, %v2437
      %v2484 = vadd.f32 %v2369, %v2439
      %v2485 = vadd.f32 %v2370, %v2478
      %s2486 = scalar_lea.vmem %s3, 38
      %v2487 = vld [vmem:[%s2486] sm:$0x3]
      %2488 = vrot.lane.b32.xlu0 %v2381, 127
      %v2489 = vpop.permute.xlu0 %2488
      %2490 = vrot.lane.b32.xlu0 %v2389, 127
      %v2491 = vpop.permute.xlu0 %2490
      %2492 = vrot.lane.b32.xlu0 %v2388, 127
      %v2493 = vpop.permute.xlu0 %2492
      %v2494 = vsel %vm468, %v2489, %v2491
      %v2495 = vsel %vm468, %v2491, %v2493
      %v2497 = vsel %vm471, %v2487, 0
      %v2500 = vsel %vm475, %v2494, 0
      %v2503 = vsel %vm475, %v2495, 0
      %v2506 = vsel %vm475, %v2493, 0
      %2508 = vmatprep.subr.bf16.mxu0 %v2503
      %2509 = vmatpush1.bf16.msra.mxu0 %v2500
      %2510 = vmatprep.subr.bf16.mxu0 0
      %2511 = vmatpush1.bf16.msra.mxu0 0
      %2512 = vmatprep.subr.bf16.mxu0 0
      %2513 = vmatpush1.bf16.msra.mxu0 0
      %2514 = vmatprep.subr.bf16.mxu0 0
      %2515 = vmatpush1.bf16.msra.mxu0 0
      %2516 = vmatprep.subr.bf16.mxu0 0
      %2517 = vmatpush1.bf16.msra.mxu0 0
      %2518 = vmatprep.subr.bf16.mxu0 0
      %2519 = vmatpush1.bf16.msra.mxu0 0
      %2520 = vmatprep.subr.bf16.mxu0 0
      %2521 = vmatpush1.bf16.msra.mxu0 0
      %2522 = vmatprep.subr.bf16.mxu0 0
      %2523 = vmatpush1.bf16.msra.mxu0 0
      %2524 = vmatprep.subr.bf16.mxu0 0
      %2525 = vmatpush1.bf16.msra.mxu0 0
      %2526 = vmatprep.subr.bf16.mxu0 0
      %2527 = vmatpush1.bf16.msra.mxu0 0
      %2528 = vmatprep.subr.bf16.mxu0 0
      %2529 = vmatpush1.bf16.msra.mxu0 0
      %2530 = vmatprep.subr.bf16.mxu0 0
      %2531 = vmatpush1.bf16.msra.mxu0 0
      %2532 = vmatprep.subr.bf16.mxu0 0
      %2533 = vmatpush1.bf16.msra.mxu0 0
      %2534 = vmatprep.subr.bf16.mxu0 0
      %2535 = vmatpush1.bf16.msra.mxu0 0
      %2536 = vmatprep.subr.bf16.mxu0 0
      %2537 = vmatpush1.bf16.msra.mxu0 0
      %2538 = vmatprep.subr.bf16.mxu0 0
      %2539 = vmatpush1.bf16.msra.mxu0 0
      %2540 = vmatprep.mubr.bf16.mxu0 0
      %2541 = vmatmul.mubr.bf16.gmra.mrb[0].mxu0 %v2497
      %v2542 = vpop.f32.mrb[0].mxu0
      %v2543 = vadd.f32 0.0, %v2542
      %v2544 = vpop.f32.mrb[0].mxu0
      %v2545 = vadd.f32 0.0, %v2544
      %v2546 = vpop.f32.mrb[0].mxu0
      %v2547 = vpop.f32.mrb[0].mxu0
      %2548 = vdwg.mxu0
      %2549 = vmatprep.subr.bf16.mxu0 0
      %2550 = vmatpush1.bf16.msra.mxu0 %v2506
      %2551 = vmatprep.subr.bf16.mxu0 0
      %2552 = vmatpush1.bf16.msra.mxu0 0
      %2553 = vmatprep.subr.bf16.mxu0 0
      %2554 = vmatpush1.bf16.msra.mxu0 0
      %2555 = vmatprep.subr.bf16.mxu0 0
      %2556 = vmatpush1.bf16.msra.mxu0 0
      %2557 = vmatprep.subr.bf16.mxu0 0
      %2558 = vmatpush1.bf16.msra.mxu0 0
      %2559 = vmatprep.subr.bf16.mxu0 0
      %2560 = vmatpush1.bf16.msra.mxu0 0
      %2561 = vmatprep.subr.bf16.mxu0 0
      %2562 = vmatpush1.bf16.msra.mxu0 0
      %2563 = vmatprep.subr.bf16.mxu0 0
      %2564 = vmatpush1.bf16.msra.mxu0 0
      %2565 = vmatprep.subr.bf16.mxu0 0
      %2566 = vmatpush1.bf16.msra.mxu0 0
      %2567 = vmatprep.subr.bf16.mxu0 0
      %2568 = vmatpush1.bf16.msra.mxu0 0
      %2569 = vmatprep.subr.bf16.mxu0 0
      %2570 = vmatpush1.bf16.msra.mxu0 0
      %2571 = vmatprep.subr.bf16.mxu0 0
      %2572 = vmatpush1.bf16.msra.mxu0 0
      %2573 = vmatprep.subr.bf16.mxu0 0
      %2574 = vmatpush1.bf16.msra.mxu0 0
      %2575 = vmatprep.subr.bf16.mxu0 0
      %2576 = vmatpush1.bf16.msra.mxu0 0
      %2577 = vmatprep.subr.bf16.mxu0 0
      %2578 = vmatpush1.bf16.msra.mxu0 0
      %2579 = vmatprep.subr.bf16.mxu0 0
      %2580 = vmatpush1.bf16.msra.mxu0 0
      %2581 = vmatprep.mubr.bf16.mxu0 0
      %2582 = vmatmul.mubr.bf16.gmra.mrb[0].mxu0 %v2497
      %v2583 = vpop.f32.mrb[0].mxu0
      %v2584 = vadd.f32 0.0, %v2583
      %v2585 = vpop.f32.mrb[0].mxu0
      %v2586 = vpop.f32.mrb[0].mxu0
      %v2587 = vpop.f32.mrb[0].mxu0
      %2588 = vdwg.mxu0
      %v2589 = vadd.f32 %v2483, %v2543
      %v2590 = vadd.f32 %v2484, %v2545
      %v2591 = vadd.f32 %v2485, %v2584
      %s2592 = scalar_lea.vmem %s3, 40
      %v2593 = vld [vmem:[%s2592] sm:$0x3]
      %2594 = vrot.lane.b32.xlu0 %v2381, 126
      %v2595 = vpop.permute.xlu0 %2594
      %2596 = vrot.lane.b32.xlu0 %v2389, 126
      %v2597 = vpop.permute.xlu0 %2596
      %2598 = vrot.lane.b32.xlu0 %v2388, 126
      %v2599 = vpop.permute.xlu0 %2598
      %v2600 = vsel %vm667, %v2595, %v2597
      %v2601 = vsel %vm667, %v2597, %v2599
      %v2603 = vsel %vm471, %v2593, 0
      %v2606 = vsel %vm475, %v2600, 0
      %v2609 = vsel %vm475, %v2601, 0
      %v2612 = vsel %vm475, %v2599, 0
      %2614 = vmatprep.subr.bf16.mxu0 %v2609
      %2615 = vmatpush1.bf16.msra.mxu0 %v2606
      %2616 = vmatprep.subr.bf16.mxu0 0
      %2617 = vmatpush1.bf16.msra.mxu0 0
      %2618 = vmatprep.subr.bf16.mxu0 0
      %2619 = vmatpush1.bf16.msra.mxu0 0
      %2620 = vmatprep.subr.bf16.mxu0 0
      %2621 = vmatpush1.bf16.msra.mxu0 0
      %2622 = vmatprep.subr.bf16.mxu0 0
      %2623 = vmatpush1.bf16.msra.mxu0 0
      %2624 = vmatprep.subr.bf16.mxu0 0
      %2625 = vmatpush1.bf16.msra.mxu0 0
      %2626 = vmatprep.subr.bf16.mxu0 0
      %2627 = vmatpush1.bf16.msra.mxu0 0
      %2628 = vmatprep.subr.bf16.mxu0 0
      %2629 = vmatpush1.bf16.msra.mxu0 0
      %2630 = vmatprep.subr.bf16.mxu0 0
      %2631 = vmatpush1.bf16.msra.mxu0 0
      %2632 = vmatprep.subr.bf16.mxu0 0
      %2633 = vmatpush1.bf16.msra.mxu0 0
      %2634 = vmatprep.subr.bf16.mxu0 0
      %2635 = vmatpush1.bf16.msra.mxu0 0
      %2636 = vmatprep.subr.bf16.mxu0 0
      %2637 = vmatpush1.bf16.msra.mxu0 0
      %2638 = vmatprep.subr.bf16.mxu0 0
      %2639 = vmatpush1.bf16.msra.mxu0 0
      %2640 = vmatprep.subr.bf16.mxu0 0
      %2641 = vmatpush1.bf16.msra.mxu0 0
      %2642 = vmatprep.subr.bf16.mxu0 0
      %2643 = vmatpush1.bf16.msra.mxu0 0
      %2644 = vmatprep.subr.bf16.mxu0 0
      %2645 = vmatpush1.bf16.msra.mxu0 0
      %2646 = vmatprep.mubr.bf16.mxu0 0
      %2647 = vmatmul.mubr.bf16.gmra.mrb[0].mxu0 %v2603
      %v2648 = vpop.f32.mrb[0].mxu0
      %v2649 = vadd.f32 0.0, %v2648
      %v2650 = vpop.f32.mrb[0].mxu0
      %v2651 = vadd.f32 0.0, %v2650
      %v2652 = vpop.f32.mrb[0].mxu0
      %v2653 = vpop.f32.mrb[0].mxu0
      %2654 = vdwg.mxu0
      %2655 = vmatprep.subr.bf16.mxu0 0
      %2656 = vmatpush1.bf16.msra.mxu0 %v2612
      %2657 = vmatprep.subr.bf16.mxu0 0
      %2658 = vmatpush1.bf16.msra.mxu0 0
      %2659 = vmatprep.subr.bf16.mxu0 0
      %2660 = vmatpush1.bf16.msra.mxu0 0
      %2661 = vmatprep.subr.bf16.mxu0 0
      %2662 = vmatpush1.bf16.msra.mxu0 0
      %2663 = vmatprep.subr.bf16.mxu0 0
      %2664 = vmatpush1.bf16.msra.mxu0 0
      %2665 = vmatprep.subr.bf16.mxu0 0
      %2666 = vmatpush1.bf16.msra.mxu0 0
      %2667 = vmatprep.subr.bf16.mxu0 0
      %2668 = vmatpush1.bf16.msra.mxu0 0
      %2669 = vmatprep.subr.bf16.mxu0 0
      %2670 = vmatpush1.bf16.msra.mxu0 0
      %2671 = vmatprep.subr.bf16.mxu0 0
      %2672 = vmatpush1.bf16.msra.mxu0 0
      %2673 = vmatprep.subr.bf16.mxu0 0
      %2674 = vmatpush1.bf16.msra.mxu0 0
      %2675 = vmatprep.subr.bf16.mxu0 0
      %2676 = vmatpush1.bf16.msra.mxu0 0
      %2677 = vmatprep.subr.bf16.mxu0 0
      %2678 = vmatpush1.bf16.msra.mxu0 0
      %2679 = vmatprep.subr.bf16.mxu0 0
      %2680 = vmatpush1.bf16.msra.mxu0 0
      %2681 = vmatprep.subr.bf16.mxu0 0
      %2682 = vmatpush1.bf16.msra.mxu0 0
      %2683 = vmatprep.subr.bf16.mxu0 0
      %2684 = vmatpush1.bf16.msra.mxu0 0
      %2685 = vmatprep.subr.bf16.mxu0 0
      %2686 = vmatpush1.bf16.msra.mxu0 0
      %2687 = vmatprep.mubr.bf16.mxu0 0
      %2688 = vmatmul.mubr.bf16.gmra.mrb[0].mxu0 %v2603
      %v2689 = vpop.f32.mrb[0].mxu0
      %v2690 = vadd.f32 0.0, %v2689
      %v2691 = vpop.f32.mrb[0].mxu0
      %v2692 = vpop.f32.mrb[0].mxu0
      %v2693 = vpop.f32.mrb[0].mxu0
      %2694 = vdwg.mxu0
      %v2695 = vadd.f32 %v2589, %v2649
      %v2696 = vadd.f32 %v2590, %v2651
      %v2697 = vadd.f32 %v2591, %v2690
      %s2698 = scalar_lea.vmem %s3, 42
      %v2699 = vld [vmem:[%s2698] sm:$0x3]
      %2700 = vrot.lane.b32.xlu0 %v2381, 110
      %v2701 = vpop.permute.xlu0 %2700
      %2702 = vrot.lane.b32.xlu0 %v2389, 110
      %v2703 = vpop.permute.xlu0 %2702
      %2704 = vrot.lane.b32.xlu0 %v2388, 110
      %v2705 = vpop.permute.xlu0 %2704
      %v2706 = vsel %vm774, %v2701, %v2703
      %v2707 = vsel %vm774, %v2703, %v2705
      %v2709 = vsel %vm471, %v2699, 0
      %v2712 = vsel %vm475, %v2706, 0
      %v2715 = vsel %vm475, %v2707, 0
      %v2718 = vsel %vm475, %v2705, 0
      %2720 = vmatprep.subr.bf16.mxu0 %v2715
      %2721 = vmatpush1.bf16.msra.mxu0 %v2712
      %2722 = vmatprep.subr.bf16.mxu0 0
      %2723 = vmatpush1.bf16.msra.mxu0 0
      %2724 = vmatprep.subr.bf16.mxu0 0
      %2725 = vmatpush1.bf16.msra.mxu0 0
      %2726 = vmatprep.subr.bf16.mxu0 0
      %2727 = vmatpush1.bf16.msra.mxu0 0
      %2728 = vmatprep.subr.bf16.mxu0 0
      %2729 = vmatpush1.bf16.msra.mxu0 0
      %2730 = vmatprep.subr.bf16.mxu0 0
      %2731 = vmatpush1.bf16.msra.mxu0 0
      %2732 = vmatprep.subr.bf16.mxu0 0
      %2733 = vmatpush1.bf16.msra.mxu0 0
      %2734 = vmatprep.subr.bf16.mxu0 0
      %2735 = vmatpush1.bf16.msra.mxu0 0
      %2736 = vmatprep.subr.bf16.mxu0 0
      %2737 = vmatpush1.bf16.msra.mxu0 0
      %2738 = vmatprep.subr.bf16.mxu0 0
      %2739 = vmatpush1.bf16.msra.mxu0 0
      %2740 = vmatprep.subr.bf16.mxu0 0
      %2741 = vmatpush1.bf16.msra.mxu0 0
      %2742 = vmatprep.subr.bf16.mxu0 0
      %2743 = vmatpush1.bf16.msra.mxu0 0
      %2744 = vmatprep.subr.bf16.mxu0 0
      %2745 = vmatpush1.bf16.msra.mxu0 0
      %2746 = vmatprep.subr.bf16.mxu0 0
      %2747 = vmatpush1.bf16.msra.mxu0 0
      %2748 = vmatprep.subr.bf16.mxu0 0
      %2749 = vmatpush1.bf16.msra.mxu0 0
      %2750 = vmatprep.subr.bf16.mxu0 0
      %2751 = vmatpush1.bf16.msra.mxu0 0
      %2752 = vmatprep.mubr.bf16.mxu0 0
      %2753 = vmatmul.mubr.bf16.gmra.mrb[0].mxu0 %v2709
      %v2754 = vpop.f32.mrb[0].mxu0
      %v2755 = vadd.f32 0.0, %v2754
      %v2756 = vpop.f32.mrb[0].mxu0
      %v2757 = vadd.f32 0.0, %v2756
      %v2758 = vpop.f32.mrb[0].mxu0
      %v2759 = vpop.f32.mrb[0].mxu0
      %2760 = vdwg.mxu0
      %2761 = vmatprep.subr.bf16.mxu0 0
      %2762 = vmatpush1.bf16.msra.mxu0 %v2718
      %2763 = vmatprep.subr.bf16.mxu0 0
      %2764 = vmatpush1.bf16.msra.mxu0 0
      %2765 = vmatprep.subr.bf16.mxu0 0
      %2766 = vmatpush1.bf16.msra.mxu0 0
      %2767 = vmatprep.subr.bf16.mxu0 0
      %2768 = vmatpush1.bf16.msra.mxu0 0
      %2769 = vmatprep.subr.bf16.mxu0 0
      %2770 = vmatpush1.bf16.msra.mxu0 0
      %2771 = vmatprep.subr.bf16.mxu0 0
      %2772 = vmatpush1.bf16.msra.mxu0 0
      %2773 = vmatprep.subr.bf16.mxu0 0
      %2774 = vmatpush1.bf16.msra.mxu0 0
      %2775 = vmatprep.subr.bf16.mxu0 0
      %2776 = vmatpush1.bf16.msra.mxu0 0
      %2777 = vmatprep.subr.bf16.mxu0 0
      %2778 = vmatpush1.bf16.msra.mxu0 0
      %2779 = vmatprep.subr.bf16.mxu0 0
      %2780 = vmatpush1.bf16.msra.mxu0 0
      %2781 = vmatprep.subr.bf16.mxu0 0
      %2782 = vmatpush1.bf16.msra.mxu0 0
      %2783 = vmatprep.subr.bf16.mxu0 0
      %2784 = vmatpush1.bf16.msra.mxu0 0
      %2785 = vmatprep.subr.bf16.mxu0 0
      %2786 = vmatpush1.bf16.msra.mxu0 0
      %2787 = vmatprep.subr.bf16.mxu0 0
      %2788 = vmatpush1.bf16.msra.mxu0 0
      %2789 = vmatprep.subr.bf16.mxu0 0
      %2790 = vmatpush1.bf16.msra.mxu0 0
      %2791 = vmatprep.subr.bf16.mxu0 0
      %2792 = vmatpush1.bf16.msra.mxu0 0
      %2793 = vmatprep.mubr.bf16.mxu0 0
      %2794 = vmatmul.mubr.bf16.gmra.mrb[0].mxu0 %v2709
      %v2795 = vpop.f32.mrb[0].mxu0
      %v2796 = vadd.f32 0.0, %v2795
      %v2797 = vpop.f32.mrb[0].mxu0
      %v2798 = vpop.f32.mrb[0].mxu0
      %v2799 = vpop.f32.mrb[0].mxu0
      %2800 = vdwg.mxu0
      %v2801 = vadd.f32 %v2695, %v2755
      %v2802 = vadd.f32 %v2696, %v2757
      %v2803 = vadd.f32 %v2697, %v2796
      %s2804 = scalar_lea.vmem %s3, 44
      %v2805 = vld [vmem:[%s2804] sm:$0x3]
      %2806 = vrot.lane.b32.xlu0 %v2381, 109
      %v2807 = vpop.permute.xlu0 %2806
      %2808 = vrot.lane.b32.xlu0 %v2389, 109
      %v2809 = vpop.permute.xlu0 %2808
      %2810 = vrot.lane.b32.xlu0 %v2388, 109
      %v2811 = vpop.permute.xlu0 %2810
      %v2812 = vsel %vm881, %v2807, %v2809
      %v2813 = vsel %vm881, %v2809, %v2811
      %v2815 = vsel %vm471, %v2805, 0
      %v2818 = vsel %vm475, %v2812, 0
      %v2821 = vsel %vm475, %v2813, 0
      %v2824 = vsel %vm475, %v2811, 0
      %2826 = vmatprep.subr.bf16.mxu0 %v2821
      %2827 = vmatpush1.bf16.msra.mxu0 %v2818
      %2828 = vmatprep.subr.bf16.mxu0 0
      %2829 = vmatpush1.bf16.msra.mxu0 0
      %2830 = vmatprep.subr.bf16.mxu0 0
      %2831 = vmatpush1.bf16.msra.mxu0 0
      %2832 = vmatprep.subr.bf16.mxu0 0
      %2833 = vmatpush1.bf16.msra.mxu0 0
      %2834 = vmatprep.subr.bf16.mxu0 0
      %2835 = vmatpush1.bf16.msra.mxu0 0
      %2836 = vmatprep.subr.bf16.mxu0 0
      %2837 = vmatpush1.bf16.msra.mxu0 0
      %2838 = vmatprep.subr.bf16.mxu0 0
      %2839 = vmatpush1.bf16.msra.mxu0 0
      %2840 = vmatprep.subr.bf16.mxu0 0
      %2841 = vmatpush1.bf16.msra.mxu0 0
      %2842 = vmatprep.subr.bf16.mxu0 0
      %2843 = vmatpush1.bf16.msra.mxu0 0
      %2844 = vmatprep.subr.bf16.mxu0 0
      %2845 = vmatpush1.bf16.msra.mxu0 0
      %2846 = vmatprep.subr.bf16.mxu0 0
      %2847 = vmatpush1.bf16.msra.mxu0 0
      %2848 = vmatprep.subr.bf16.mxu0 0
      %2849 = vmatpush1.bf16.msra.mxu0 0
      %2850 = vmatprep.subr.bf16.mxu0 0
      %2851 = vmatpush1.bf16.msra.mxu0 0
      %2852 = vmatprep.subr.bf16.mxu0 0
      %2853 = vmatpush1.bf16.msra.mxu0 0
      %2854 = vmatprep.subr.bf16.mxu0 0
      %2855 = vmatpush1.bf16.msra.mxu0 0
      %2856 = vmatprep.subr.bf16.mxu0 0
      %2857 = vmatpush1.bf16.msra.mxu0 0
      %2858 = vmatprep.mubr.bf16.mxu0 0
      %2859 = vmatmul.mubr.bf16.gmra.mrb[0].mxu0 %v2815
      %v2860 = vpop.f32.mrb[0].mxu0
      %v2861 = vadd.f32 0.0, %v2860
      %v2862 = vpop.f32.mrb[0].mxu0
      %v2863 = vadd.f32 0.0, %v2862
      %v2864 = vpop.f32.mrb[0].mxu0
      %v2865 = vpop.f32.mrb[0].mxu0
      %2866 = vdwg.mxu0
      %2867 = vmatprep.subr.bf16.mxu0 0
      %2868 = vmatpush1.bf16.msra.mxu0 %v2824
      %2869 = vmatprep.subr.bf16.mxu0 0
      %2870 = vmatpush1.bf16.msra.mxu0 0
      %2871 = vmatprep.subr.bf16.mxu0 0
      %2872 = vmatpush1.bf16.msra.mxu0 0
      %2873 = vmatprep.subr.bf16.mxu0 0
      %2874 = vmatpush1.bf16.msra.mxu0 0
      %2875 = vmatprep.subr.bf16.mxu0 0
      %2876 = vmatpush1.bf16.msra.mxu0 0
      %2877 = vmatprep.subr.bf16.mxu0 0
      %2878 = vmatpush1.bf16.msra.mxu0 0
      %2879 = vmatprep.subr.bf16.mxu0 0
      %2880 = vmatpush1.bf16.msra.mxu0 0
      %2881 = vmatprep.subr.bf16.mxu0 0
      %2882 = vmatpush1.bf16.msra.mxu0 0
      %2883 = vmatprep.subr.bf16.mxu0 0
      %2884 = vmatpush1.bf16.msra.mxu0 0
      %2885 = vmatprep.subr.bf16.mxu0 0
      %2886 = vmatpush1.bf16.msra.mxu0 0
      %2887 = vmatprep.subr.bf16.mxu0 0
      %2888 = vmatpush1.bf16.msra.mxu0 0
      %2889 = vmatprep.subr.bf16.mxu0 0
      %2890 = vmatpush1.bf16.msra.mxu0 0
      %2891 = vmatprep.subr.bf16.mxu0 0
      %2892 = vmatpush1.bf16.msra.mxu0 0
      %2893 = vmatprep.subr.bf16.mxu0 0
      %2894 = vmatpush1.bf16.msra.mxu0 0
      %2895 = vmatprep.subr.bf16.mxu0 0
      %2896 = vmatpush1.bf16.msra.mxu0 0
      %2897 = vmatprep.subr.bf16.mxu0 0
      %2898 = vmatpush1.bf16.msra.mxu0 0
      %2899 = vmatprep.mubr.bf16.mxu0 0
      %2900 = vmatmul.mubr.bf16.gmra.mrb[0].mxu0 %v2815
      %v2901 = vpop.f32.mrb[0].mxu0
      %v2902 = vadd.f32 0.0, %v2901
      %v2903 = vpop.f32.mrb[0].mxu0
      %v2904 = vpop.f32.mrb[0].mxu0
      %v2905 = vpop.f32.mrb[0].mxu0
      %2906 = vdwg.mxu0
      %v2907 = vadd.f32 %v2801, %v2861
      %v2908 = vadd.f32 %v2802, %v2863
      %v2909 = vadd.f32 %v2803, %v2902
      %s2910 = scalar_lea.vmem %s3, 46
      %v2911 = vld [vmem:[%s2910] sm:$0x3]
      %2912 = vrot.lane.b32.xlu0 %v2381, 108
      %v2913 = vpop.permute.xlu0 %2912
      %2914 = vrot.lane.b32.xlu0 %v2389, 108
      %v2915 = vpop.permute.xlu0 %2914
      %2916 = vrot.lane.b32.xlu0 %v2388, 108
      %v2917 = vpop.permute.xlu0 %2916
      %v2918 = vsel %vm988, %v2913, %v2915
      %v2919 = vsel %vm988, %v2915, %v2917
      %v2921 = vsel %vm471, %v2911, 0
      %v2924 = vsel %vm475, %v2918, 0
      %v2927 = vsel %vm475, %v2919, 0
      %v2930 = vsel %vm475, %v2917, 0
      %2932 = vmatprep.subr.bf16.mxu0 %v2927
      %2933 = vmatpush1.bf16.msra.mxu0 %v2924
      %2934 = vmatprep.subr.bf16.mxu0 0
      %2935 = vmatpush1.bf16.msra.mxu0 0
      %2936 = vmatprep.subr.bf16.mxu0 0
      %2937 = vmatpush1.bf16.msra.mxu0 0
      %2938 = vmatprep.subr.bf16.mxu0 0
      %2939 = vmatpush1.bf16.msra.mxu0 0
      %2940 = vmatprep.subr.bf16.mxu0 0
      %2941 = vmatpush1.bf16.msra.mxu0 0
      %2942 = vmatprep.subr.bf16.mxu0 0
      %2943 = vmatpush1.bf16.msra.mxu0 0
      %2944 = vmatprep.subr.bf16.mxu0 0
      %2945 = vmatpush1.bf16.msra.mxu0 0
      %2946 = vmatprep.subr.bf16.mxu0 0
      %2947 = vmatpush1.bf16.msra.mxu0 0
      %2948 = vmatprep.subr.bf16.mxu0 0
      %2949 = vmatpush1.bf16.msra.mxu0 0
      %2950 = vmatprep.subr.bf16.mxu0 0
      %2951 = vmatpush1.bf16.msra.mxu0 0
      %2952 = vmatprep.subr.bf16.mxu0 0
      %2953 = vmatpush1.bf16.msra.mxu0 0
      %2954 = vmatprep.subr.bf16.mxu0 0
      %2955 = vmatpush1.bf16.msra.mxu0 0
      %2956 = vmatprep.subr.bf16.mxu0 0
      %2957 = vmatpush1.bf16.msra.mxu0 0
      %2958 = vmatprep.subr.bf16.mxu0 0
      %2959 = vmatpush1.bf16.msra.mxu0 0
      %2960 = vmatprep.subr.bf16.mxu0 0
      %2961 = vmatpush1.bf16.msra.mxu0 0
      %2962 = vmatprep.subr.bf16.mxu0 0
      %2963 = vmatpush1.bf16.msra.mxu0 0
      %2964 = vmatprep.mubr.bf16.mxu0 0
      %2965 = vmatmul.mubr.bf16.gmra.mrb[0].mxu0 %v2921
      %v2966 = vpop.f32.mrb[0].mxu0
      %v2967 = vadd.f32 0.0, %v2966
      %v2968 = vpop.f32.mrb[0].mxu0
      %v2969 = vadd.f32 0.0, %v2968
      %v2970 = vpop.f32.mrb[0].mxu0
      %v2971 = vpop.f32.mrb[0].mxu0
      %2972 = vdwg.mxu0
      %2973 = vmatprep.subr.bf16.mxu0 0
      %2974 = vmatpush1.bf16.msra.mxu0 %v2930
      %2975 = vmatprep.subr.bf16.mxu0 0
      %2976 = vmatpush1.bf16.msra.mxu0 0
      %2977 = vmatprep.subr.bf16.mxu0 0
      %2978 = vmatpush1.bf16.msra.mxu0 0
      %2979 = vmatprep.subr.bf16.mxu0 0
      %2980 = vmatpush1.bf16.msra.mxu0 0
      %2981 = vmatprep.subr.bf16.mxu0 0
      %2982 = vmatpush1.bf16.msra.mxu0 0
      %2983 = vmatprep.subr.bf16.mxu0 0
      %2984 = vmatpush1.bf16.msra.mxu0 0
      %2985 = vmatprep.subr.bf16.mxu0 0
      %2986 = vmatpush1.bf16.msra.mxu0 0
      %2987 = vmatprep.subr.bf16.mxu0 0
      %2988 = vmatpush1.bf16.msra.mxu0 0
      %2989 = vmatprep.subr.bf16.mxu0 0
      %2990 = vmatpush1.bf16.msra.mxu0 0
      %2991 = vmatprep.subr.bf16.mxu0 0
      %2992 = vmatpush1.bf16.msra.mxu0 0
      %2993 = vmatprep.subr.bf16.mxu0 0
      %2994 = vmatpush1.bf16.msra.mxu0 0
      %2995 = vmatprep.subr.bf16.mxu0 0
      %2996 = vmatpush1.bf16.msra.mxu0 0
      %2997 = vmatprep.subr.bf16.mxu0 0
      %2998 = vmatpush1.bf16.msra.mxu0 0
      %2999 = vmatprep.subr.bf16.mxu0 0
      %3000 = vmatpush1.bf16.msra.mxu0 0
      %3001 = vmatprep.subr.bf16.mxu0 0
      %3002 = vmatpush1.bf16.msra.mxu0 0
      %3003 = vmatprep.subr.bf16.mxu0 0
      %3004 = vmatpush1.bf16.msra.mxu0 0
      %3005 = vmatprep.mubr.bf16.mxu0 0
      %3006 = vmatmul.mubr.bf16.gmra.mrb[0].mxu0 %v2921
      %v3007 = vpop.f32.mrb[0].mxu0
      %v3008 = vadd.f32 0.0, %v3007
      %v3009 = vpop.f32.mrb[0].mxu0
      %v3010 = vpop.f32.mrb[0].mxu0
      %v3011 = vpop.f32.mrb[0].mxu0
      %3012 = vdwg.mxu0
      %v3013 = vadd.f32 %v2907, %v2967
      %v3014 = vadd.f32 %v2908, %v2969
      %v3015 = vadd.f32 %v2909, %v3008
      %s3016 = scalar_lea.vmem %s3, 48
      %v3017 = vld [vmem:[%s3016] sm:$0x3]
      %3018 = vrot.lane.b32.xlu0 %v2381, 92
      %v3019 = vpop.permute.xlu0 %3018
      %3020 = vrot.lane.b32.xlu0 %v2389, 92
      %v3021 = vpop.permute.xlu0 %3020
      %3022 = vrot.lane.b32.xlu0 %v2388, 92
      %v3023 = vpop.permute.xlu0 %3022
      %v3024 = vsel %vm1095, %v3019, %v3021
      %v3025 = vsel %vm1095, %v3021, %v3023
      %v3027 = vsel %vm471, %v3017, 0
      %v3030 = vsel %vm475, %v3024, 0
      %v3033 = vsel %vm475, %v3025, 0
      %v3036 = vsel %vm475, %v3023, 0
      %3038 = vmatprep.subr.bf16.mxu0 %v3033
      %3039 = vmatpush1.bf16.msra.mxu0 %v3030
      %3040 = vmatprep.subr.bf16.mxu0 0
      %3041 = vmatpush1.bf16.msra.mxu0 0
      %3042 = vmatprep.subr.bf16.mxu0 0
      %3043 = vmatpush1.bf16.msra.mxu0 0
      %3044 = vmatprep.subr.bf16.mxu0 0
      %3045 = vmatpush1.bf16.msra.mxu0 0
      %3046 = vmatprep.subr.bf16.mxu0 0
      %3047 = vmatpush1.bf16.msra.mxu0 0
      %3048 = vmatprep.subr.bf16.mxu0 0
      %3049 = vmatpush1.bf16.msra.mxu0 0
      %3050 = vmatprep.subr.bf16.mxu0 0
      %3051 = vmatpush1.bf16.msra.mxu0 0
      %3052 = vmatprep.subr.bf16.mxu0 0
      %3053 = vmatpush1.bf16.msra.mxu0 0
      %3054 = vmatprep.subr.bf16.mxu0 0
      %3055 = vmatpush1.bf16.msra.mxu0 0
      %3056 = vmatprep.subr.bf16.mxu0 0
      %3057 = vmatpush1.bf16.msra.mxu0 0
      %3058 = vmatprep.subr.bf16.mxu0 0
      %3059 = vmatpush1.bf16.msra.mxu0 0
      %3060 = vmatprep.subr.bf16.mxu0 0
      %3061 = vmatpush1.bf16.msra.mxu0 0
      %3062 = vmatprep.subr.bf16.mxu0 0
      %3063 = vmatpush1.bf16.msra.mxu0 0
      %3064 = vmatprep.subr.bf16.mxu0 0
      %3065 = vmatpush1.bf16.msra.mxu0 0
      %3066 = vmatprep.subr.bf16.mxu0 0
      %3067 = vmatpush1.bf16.msra.mxu0 0
      %3068 = vmatprep.subr.bf16.mxu0 0
      %3069 = vmatpush1.bf16.msra.mxu0 0
      %3070 = vmatprep.mubr.bf16.mxu0 0
      %3071 = vmatmul.mubr.bf16.gmra.mrb[0].mxu0 %v3027
      %v3072 = vpop.f32.mrb[0].mxu0
      %v3073 = vadd.f32 0.0, %v3072
      %v3074 = vpop.f32.mrb[0].mxu0
      %v3075 = vadd.f32 0.0, %v3074
      %v3076 = vpop.f32.mrb[0].mxu0
      %v3077 = vpop.f32.mrb[0].mxu0
      %3078 = vdwg.mxu0
      %3079 = vmatprep.subr.bf16.mxu0 0
      %3080 = vmatpush1.bf16.msra.mxu0 %v3036
      %3081 = vmatprep.subr.bf16.mxu0 0
      %3082 = vmatpush1.bf16.msra.mxu0 0
      %3083 = vmatprep.subr.bf16.mxu0 0
      %3084 = vmatpush1.bf16.msra.mxu0 0
      %3085 = vmatprep.subr.bf16.mxu0 0
      %3086 = vmatpush1.bf16.msra.mxu0 0
      %3087 = vmatprep.subr.bf16.mxu0 0
      %3088 = vmatpush1.bf16.msra.mxu0 0
      %3089 = vmatprep.subr.bf16.mxu0 0
      %3090 = vmatpush1.bf16.msra.mxu0 0
      %3091 = vmatprep.subr.bf16.mxu0 0
      %3092 = vmatpush1.bf16.msra.mxu0 0
      %3093 = vmatprep.subr.bf16.mxu0 0
      %3094 = vmatpush1.bf16.msra.mxu0 0
      %3095 = vmatprep.subr.bf16.mxu0 0
      %3096 = vmatpush1.bf16.msra.mxu0 0
      %3097 = vmatprep.subr.bf16.mxu0 0
      %3098 = vmatpush1.bf16.msra.mxu0 0
      %3099 = vmatprep.subr.bf16.mxu0 0
      %3100 = vmatpush1.bf16.msra.mxu0 0
      %3101 = vmatprep.subr.bf16.mxu0 0
      %3102 = vmatpush1.bf16.msra.mxu0 0
      %3103 = vmatprep.subr.bf16.mxu0 0
      %3104 = vmatpush1.bf16.msra.mxu0 0
      %3105 = vmatprep.subr.bf16.mxu0 0
      %3106 = vmatpush1.bf16.msra.mxu0 0
      %3107 = vmatprep.subr.bf16.mxu0 0
      %3108 = vmatpush1.bf16.msra.mxu0 0
      %3109 = vmatprep.subr.bf16.mxu0 0
      %3110 = vmatpush1.bf16.msra.mxu0 0
      %3111 = vmatprep.mubr.bf16.mxu0 0
      %3112 = vmatmul.mubr.bf16.gmra.mrb[0].mxu0 %v3027
      %v3113 = vpop.f32.mrb[0].mxu0
      %v3114 = vadd.f32 0.0, %v3113
      %v3115 = vpop.f32.mrb[0].mxu0
      %v3116 = vpop.f32.mrb[0].mxu0
      %v3117 = vpop.f32.mrb[0].mxu0
      %3118 = vdwg.mxu0
      %v3119 = vadd.f32 %v3013, %v3073
      %v3120 = vadd.f32 %v3014, %v3075
      %v3121 = vadd.f32 %v3015, %v3114
      %s3122 = scalar_lea.vmem %s3, 50
      %v3123 = vld [vmem:[%s3122] sm:$0x3]
      %3124 = vrot.lane.b32.xlu0 %v2381, 91
      %v3125 = vpop.permute.xlu0 %3124
      %3126 = vrot.lane.b32.xlu0 %v2389, 91
      %v3127 = vpop.permute.xlu0 %3126
      %3128 = vrot.lane.b32.xlu0 %v2388, 91
      %v3129 = vpop.permute.xlu0 %3128
      %v3130 = vsel %vm1202, %v3125, %v3127
      %v3131 = vsel %vm1202, %v3127, %v3129
      %v3133 = vsel %vm471, %v3123, 0
      %v3136 = vsel %vm475, %v3130, 0
      %v3139 = vsel %vm475, %v3131, 0
      %v3142 = vsel %vm475, %v3129, 0
      %3144 = vmatprep.subr.bf16.mxu0 %v3139
      %3145 = vmatpush1.bf16.msra.mxu0 %v3136
      %3146 = vmatprep.subr.bf16.mxu0 0
      %3147 = vmatpush1.bf16.msra.mxu0 0
      %3148 = vmatprep.subr.bf16.mxu0 0
      %3149 = vmatpush1.bf16.msra.mxu0 0
      %3150 = vmatprep.subr.bf16.mxu0 0
      %3151 = vmatpush1.bf16.msra.mxu0 0
      %3152 = vmatprep.subr.bf16.mxu0 0
      %3153 = vmatpush1.bf16.msra.mxu0 0
      %3154 = vmatprep.subr.bf16.mxu0 0
      %3155 = vmatpush1.bf16.msra.mxu0 0
      %3156 = vmatprep.subr.bf16.mxu0 0
      %3157 = vmatpush1.bf16.msra.mxu0 0
      %3158 = vmatprep.subr.bf16.mxu0 0
      %3159 = vmatpush1.bf16.msra.mxu0 0
      %3160 = vmatprep.subr.bf16.mxu0 0
      %3161 = vmatpush1.bf16.msra.mxu0 0
      %3162 = vmatprep.subr.bf16.mxu0 0
      %3163 = vmatpush1.bf16.msra.mxu0 0
      %3164 = vmatprep.subr.bf16.mxu0 0
      %3165 = vmatpush1.bf16.msra.mxu0 0
      %3166 = vmatprep.subr.bf16.mxu0 0
      %3167 = vmatpush1.bf16.msra.mxu0 0
      %3168 = vmatprep.subr.bf16.mxu0 0
      %3169 = vmatpush1.bf16.msra.mxu0 0
      %3170 = vmatprep.subr.bf16.mxu0 0
      %3171 = vmatpush1.bf16.msra.mxu0 0
      %3172 = vmatprep.subr.bf16.mxu0 0
      %3173 = vmatpush1.bf16.msra.mxu0 0
      %3174 = vmatprep.subr.bf16.mxu0 0
      %3175 = vmatpush1.bf16.msra.mxu0 0
      %3176 = vmatprep.mubr.bf16.mxu0 0
      %3177 = vmatmul.mubr.bf16.gmra.mrb[0].mxu0 %v3133
      %v3178 = vpop.f32.mrb[0].mxu0
      %v3179 = vadd.f32 0.0, %v3178
      %v3180 = vpop.f32.mrb[0].mxu0
      %v3181 = vadd.f32 0.0, %v3180
      %v3182 = vpop.f32.mrb[0].mxu0
      %v3183 = vpop.f32.mrb[0].mxu0
      %3184 = vdwg.mxu0
      %3185 = vmatprep.subr.bf16.mxu0 0
      %3186 = vmatpush1.bf16.msra.mxu0 %v3142
      %3187 = vmatprep.subr.bf16.mxu0 0
      %3188 = vmatpush1.bf16.msra.mxu0 0
      %3189 = vmatprep.subr.bf16.mxu0 0
      %3190 = vmatpush1.bf16.msra.mxu0 0
      %3191 = vmatprep.subr.bf16.mxu0 0
      %3192 = vmatpush1.bf16.msra.mxu0 0
      %3193 = vmatprep.subr.bf16.mxu0 0
      %3194 = vmatpush1.bf16.msra.mxu0 0
      %3195 = vmatprep.subr.bf16.mxu0 0
      %3196 = vmatpush1.bf16.msra.mxu0 0
      %3197 = vmatprep.subr.bf16.mxu0 0
      %3198 = vmatpush1.bf16.msra.mxu0 0
      %3199 = vmatprep.subr.bf16.mxu0 0
      %3200 = vmatpush1.bf16.msra.mxu0 0
      %3201 = vmatprep.subr.bf16.mxu0 0
      %3202 = vmatpush1.bf16.msra.mxu0 0
      %3203 = vmatprep.subr.bf16.mxu0 0
      %3204 = vmatpush1.bf16.msra.mxu0 0
      %3205 = vmatprep.subr.bf16.mxu0 0
      %3206 = vmatpush1.bf16.msra.mxu0 0
      %3207 = vmatprep.subr.bf16.mxu0 0
      %3208 = vmatpush1.bf16.msra.mxu0 0
      %3209 = vmatprep.subr.bf16.mxu0 0
      %3210 = vmatpush1.bf16.msra.mxu0 0
      %3211 = vmatprep.subr.bf16.mxu0 0
      %3212 = vmatpush1.bf16.msra.mxu0 0
      %3213 = vmatprep.subr.bf16.mxu0 0
      %3214 = vmatpush1.bf16.msra.mxu0 0
      %3215 = vmatprep.subr.bf16.mxu0 0
      %3216 = vmatpush1.bf16.msra.mxu0 0
      %3217 = vmatprep.mubr.bf16.mxu0 0
      %3218 = vmatmul.mubr.bf16.gmra.mrb[0].mxu0 %v3133
      %v3219 = vpop.f32.mrb[0].mxu0
      %v3220 = vadd.f32 0.0, %v3219
      %v3221 = vpop.f32.mrb[0].mxu0
      %v3222 = vpop.f32.mrb[0].mxu0
      %v3223 = vpop.f32.mrb[0].mxu0
      %3224 = vdwg.mxu0
      %v3225 = vadd.f32 %v3119, %v3179
      %v3226 = vadd.f32 %v3120, %v3181
      %v3227 = vadd.f32 %v3121, %v3220
      %s3228 = scalar_lea.vmem %s3, 52
      %v3229 = vld [vmem:[%s3228] sm:$0x3]
      %3230 = vrot.lane.b32.xlu0 %v2381, 90
      %v3231 = vpop.permute.xlu0 %3230
      %3232 = vrot.lane.b32.xlu0 %v2389, 90
      %v3233 = vpop.permute.xlu0 %3232
      %3234 = vrot.lane.b32.xlu0 %v2388, 90
      %v3235 = vpop.permute.xlu0 %3234
      %v3236 = vsel %vm1309, %v3231, %v3233
      %v3237 = vsel %vm1309, %v3233, %v3235
      %v3239 = vsel %vm471, %v3229, 0
      %v3242 = vsel %vm475, %v3236, 0
      %v3245 = vsel %vm475, %v3237, 0
      %v3248 = vsel %vm475, %v3235, 0
      %3250 = vmatprep.subr.bf16.mxu0 %v3245
      %3251 = vmatpush1.bf16.msra.mxu0 %v3242
      %3252 = vmatprep.subr.bf16.mxu0 0
      %3253 = vmatpush1.bf16.msra.mxu0 0
      %3254 = vmatprep.subr.bf16.mxu0 0
      %3255 = vmatpush1.bf16.msra.mxu0 0
      %3256 = vmatprep.subr.bf16.mxu0 0
      %3257 = vmatpush1.bf16.msra.mxu0 0
      %3258 = vmatprep.subr.bf16.mxu0 0
      %3259 = vmatpush1.bf16.msra.mxu0 0
      %3260 = vmatprep.subr.bf16.mxu0 0
      %3261 = vmatpush1.bf16.msra.mxu0 0
      %3262 = vmatprep.subr.bf16.mxu0 0
      %3263 = vmatpush1.bf16.msra.mxu0 0
      %3264 = vmatprep.subr.bf16.mxu0 0
      %3265 = vmatpush1.bf16.msra.mxu0 0
      %3266 = vmatprep.subr.bf16.mxu0 0
      %3267 = vmatpush1.bf16.msra.mxu0 0
      %3268 = vmatprep.subr.bf16.mxu0 0
      %3269 = vmatpush1.bf16.msra.mxu0 0
      %3270 = vmatprep.subr.bf16.mxu0 0
      %3271 = vmatpush1.bf16.msra.mxu0 0
      %3272 = vmatprep.subr.bf16.mxu0 0
      %3273 = vmatpush1.bf16.msra.mxu0 0
      %3274 = vmatprep.subr.bf16.mxu0 0
      %3275 = vmatpush1.bf16.msra.mxu0 0
      %3276 = vmatprep.subr.bf16.mxu0 0
      %3277 = vmatpush1.bf16.msra.mxu0 0
      %3278 = vmatprep.subr.bf16.mxu0 0
      %3279 = vmatpush1.bf16.msra.mxu0 0
      %3280 = vmatprep.subr.bf16.mxu0 0
      %3281 = vmatpush1.bf16.msra.mxu0 0
      %3282 = vmatprep.mubr.bf16.mxu0 0
      %3283 = vmatmul.mubr.bf16.gmra.mrb[0].mxu0 %v3239
      %v3284 = vpop.f32.mrb[0].mxu0
      %v3285 = vadd.f32 0.0, %v3284
      %v3286 = vpop.f32.mrb[0].mxu0
      %v3287 = vadd.f32 0.0, %v3286
      %v3288 = vpop.f32.mrb[0].mxu0
      %v3289 = vpop.f32.mrb[0].mxu0
      %3290 = vdwg.mxu0
      %3291 = vmatprep.subr.bf16.mxu0 0
      %3292 = vmatpush1.bf16.msra.mxu0 %v3248
      %3293 = vmatprep.subr.bf16.mxu0 0
      %3294 = vmatpush1.bf16.msra.mxu0 0
      %3295 = vmatprep.subr.bf16.mxu0 0
      %3296 = vmatpush1.bf16.msra.mxu0 0
      %3297 = vmatprep.subr.bf16.mxu0 0
      %3298 = vmatpush1.bf16.msra.mxu0 0
      %3299 = vmatprep.subr.bf16.mxu0 0
      %3300 = vmatpush1.bf16.msra.mxu0 0
      %3301 = vmatprep.subr.bf16.mxu0 0
      %3302 = vmatpush1.bf16.msra.mxu0 0
      %3303 = vmatprep.subr.bf16.mxu0 0
      %3304 = vmatpush1.bf16.msra.mxu0 0
      %3305 = vmatprep.subr.bf16.mxu0 0
      %3306 = vmatpush1.bf16.msra.mxu0 0
      %3307 = vmatprep.subr.bf16.mxu0 0
      %3308 = vmatpush1.bf16.msra.mxu0 0
      %3309 = vmatprep.subr.bf16.mxu0 0
      %3310 = vmatpush1.bf16.msra.mxu0 0
      %3311 = vmatprep.subr.bf16.mxu0 0
      %3312 = vmatpush1.bf16.msra.mxu0 0
      %3313 = vmatprep.subr.bf16.mxu0 0
      %3314 = vmatpush1.bf16.msra.mxu0 0
      %3315 = vmatprep.subr.bf16.mxu0 0
      %3316 = vmatpush1.bf16.msra.mxu0 0
      %3317 = vmatprep.subr.bf16.mxu0 0
      %3318 = vmatpush1.bf16.msra.mxu0 0
      %3319 = vmatprep.subr.bf16.mxu0 0
      %3320 = vmatpush1.bf16.msra.mxu0 0
      %3321 = vmatprep.subr.bf16.mxu0 0
      %3322 = vmatpush1.bf16.msra.mxu0 0
      %3323 = vmatprep.mubr.bf16.mxu0 0
      %3324 = vmatmul.mubr.bf16.gmra.mrb[0].mxu0 %v3239
      %v3325 = vpop.f32.mrb[0].mxu0
      %v3326 = vadd.f32 0.0, %v3325
      %v3327 = vpop.f32.mrb[0].mxu0
      %v3328 = vpop.f32.mrb[0].mxu0
      %v3329 = vpop.f32.mrb[0].mxu0
      %3330 = vdwg.mxu0
      %v3331 = vadd.f32 %v3225, %v3285
      %v3332 = vadd.f32 %v3226, %v3287
      %v3333 = vadd.f32 %v3227, %v3326
      %v3334 = vld [vmem:[%s4] sm:$0x7]
      %v3336 = vlaneseq
      %v3337 = vshrl.u32 %v3336, 7
      %v3338 = vsub.s32 0, %v3337
      %v3339 = vrot.slane %v3334, %v3338
      %v3340 = vlaneseq
      %v3341 = vshrl.u32 %v3340, 7
      %v3342 = vsub.s32 1, %v3341
      %v3343 = vrot.slane %v3334, %v3342
      %v3344 = vlaneseq
      %v3345 = vshrl.u32 %v3344, 7
      %v3346 = vsub.s32 2, %v3345
      %v3347 = vrot.slane %v3334, %v3346
      %v3351 = vmul.f32 %v3331, %v3339
      %v3352 = vmul.f32 %v3332, %v3343
      %v3353 = vmul.f32 %v3333, %v3347
      %v3356 = vcombine.low %v3351, %v3352
      %3358 = vst [vmem:[%s421] sm:$0xff] %v3356
      %vm3359 = vcmask 551936
      %3360 = vst.msk [vmem:[%s421 + $0x8] sm:$0xf] %vm3359, %v3353
      %vm3361 = vcmask 1043456
      %v3362 = vsel %vm3361, %v3351, 0.0
      %v3363 = vsel %vm3361, %v3352, 0.0
      %v3364 = vadd.f32 %v3362, %v3363
      %v3365 = vsel %vm3359, %v3353, 0.0
      %v3366 = vadd.f32 %v3364, %v3365
      %3367 = vadd.xlane.f32.xlu0 %v3366
      %v3368 = vpop.xlane.xlu0 %3367
      %vm3369 = vcmask 3072
      %3370 = vst.msk [vmem:[%s429] sm:$0xf] %vm3369, %v3368
      %v3371 = vmul.f32 %v3351, %v3351
      %v3372 = vmul.f32 %v3352, %v3352
      %v3373 = vmul.f32 %v3353, %v3353
      %v3374 = vsel %vm3361, %v3371, 0.0
      %v3375 = vsel %vm3361, %v3372, 0.0
      %v3376 = vadd.f32 %v3374, %v3375
      %v3377 = vsel %vm3359, %v3373, 0.0
      %v3378 = vadd.f32 %v3376, %v3377
      %3379 = vadd.xlane.f32.xlu0 %v3378
      %v3380 = vpop.xlane.xlu0 %3379
      %3381 = vst.msk [vmem:[%s437] sm:$0xf] %vm3369, %v3380
      %p3382 = scmp.lt.s32.totalorder %s23, 1
      %s3383 = scalar_select %p3382, %s23, 1
      %p3384 = scmp.lt.s32.totalorder %s24, 15
      %s3385 = scalar_select %p3384, %s24, 15
      %s3386 = smul.addr %s3385, 3
      %s3387 = smul.addr %s3383, 48
      %s3388 = sadd.s32 %s3386, %s3387
      %s3389 = smul.addr %s3388, 4
      %s3390 = scalar_lea.vmem %s5, %s3389
      %p3391 = scmp.lt.s32.totalorder %s23, 1
      %s3392 = scalar_select %p3391, %s23, 1
      %p3393 = scmp.lt.s32.totalorder %s24, 15
      %s3394 = scalar_select %p3393, %s24, 15
      %s3395 = smul.addr %s3392, 16
      %s3396 = sadd.s32 %s3394, %s3395
      %s3397 = smul.addr %s3396, 4
      %s3398 = scalar_lea.vmem %s6, %s3397
      %p3399 = scmp.lt.s32.totalorder %s23, 1
      %s3400 = scalar_select %p3399, %s23, 1
      %p3401 = scmp.lt.s32.totalorder %s24, 15
      %s3402 = scalar_select %p3401, %s24, 15
      %s3403 = smul.addr %s3400, 16
      %s3404 = sadd.s32 %s3402, %s3403
      %s3405 = smul.addr %s3404, 4
      %s3406 = scalar_lea.vmem %s7, %s3405
      // Predicated region
      $region41: #{regular_conv_forward.2} parent=39 // pred_check
        %p3407 = pneg %p181
      $region42: #{regular_conv_forward.2} parent=39 // pred_check_branch
        %3409 = sbr.rel (%p3407) target = $region44
      $region43: #{regular_conv_forward.2} parent=39 // pred_region
        _
      $region44: #{regular_conv_forward.2} parent=39 // pred_fallthru
        _
      // Predicated region
      $region45: #{regular_conv_forward.2} parent=39 // pred_check
        %p3410 = pneg %p209
      $region46: #{regular_conv_forward.2} parent=39 // pred_check_branch
        %3412 = sbr.rel (%p3410) target = $region48
      $region47: #{regular_conv_forward.2} parent=39 // pred_region
        _
      $region48: #{regular_conv_forward.2} parent=39 // pred_fallthru
        _
      // Predicated region
      $region49: #{regular_conv_forward.2} parent=39 // pred_check
        %p3413 = pneg %p237
      $region50: #{regular_conv_forward.2} parent=39 // pred_check_branch
        %3415 = sbr.rel (%p3413) target = $region52
      $region51: #{regular_conv_forward.2} parent=39 // pred_region
        _
      $region52: #{regular_conv_forward.2} parent=39 // pred_fallthru
        _
    $region40: #{regular_conv_forward.2} parent=5 // pred_fallthru
      _
    %p3416 = scmp.le.s32.totalorder 2, %s14
    // Predicated region
    $region53: #{regular_conv_forward.2} parent=5 // pred_check
      %p3417 = pneg %p3416
    $region54: #{regular_conv_forward.2} parent=5 // pred_check_branch
      %3419 = sbr.rel (%p3417) target = $region56
    $region55: #{regular_conv_forward.2} parent=5 // pred_region
      %s3420 = ssub.s32 %s14, 2
      // Predicated region
      $region57: #{regular_conv_forward.2} parent=55 // pred_check
        %p3421 = pneg %p187
      $region58: #{regular_conv_forward.2} parent=55 // pred_check_branch
        %3423 = sbr.rel (%p3421) target = $region60
      $region59: #{regular_conv_forward.2} parent=55 // pred_region
        %p3424 = scmp.lt.s32.totalorder %s25, 1
        %s3425 = scalar_select %p3424, %s25, 1
        %p3426 = scmp.lt.s32.totalorder %s26, 15
        %s3427 = scalar_select %p3426, %s26, 15
        %s3428 = smul.addr %s3427, 3
        %s3429 = smul.addr %s3425, 48
        %s3430 = sadd.s32 %s3428, %s3429
        %s3431 = smul.addr %s3430, 4
        %s3432 = scalar_lea.vmem %s5, %s3431
      $region60: #{regular_conv_forward.2} parent=55 // pred_fallthru
        _
      // Predicated region
      $region61: #{regular_conv_forward.2} parent=55 // pred_check
        %p3433 = pneg %p215
      $region62: #{regular_conv_forward.2} parent=55 // pred_check_branch
        %3435 = sbr.rel (%p3433) target = $region64
      $region63: #{regular_conv_forward.2} parent=55 // pred_region
        %p3436 = scmp.lt.s32.totalorder %s25, 1
        %s3437 = scalar_select %p3436, %s25, 1
        %p3438 = scmp.lt.s32.totalorder %s26, 15
        %s3439 = scalar_select %p3438, %s26, 15
        %s3440 = smul.addr %s3437, 16
        %s3441 = sadd.s32 %s3439, %s3440
        %s3442 = smul.addr %s3441, 4
        %s3443 = scalar_lea.vmem %s6, %s3442
      $region64: #{regular_conv_forward.2} parent=55 // pred_fallthru
        _
      // Predicated region
      $region65: #{regular_conv_forward.2} parent=55 // pred_check
        %p3444 = pneg %p243
      $region66: #{regular_conv_forward.2} parent=55 // pred_check_branch
        %3446 = sbr.rel (%p3444) target = $region68
      $region67: #{regular_conv_forward.2} parent=55 // pred_region
        %p3447 = scmp.lt.s32.totalorder %s25, 1
        %s3448 = scalar_select %p3447, %s25, 1
        %p3449 = scmp.lt.s32.totalorder %s26, 15
        %s3450 = scalar_select %p3449, %s26, 15
        %s3451 = smul.addr %s3448, 16
        %s3452 = sadd.s32 %s3450, %s3451
        %s3453 = smul.addr %s3452, 4
        %s3454 = scalar_lea.vmem %s7, %s3453
      $region68: #{regular_conv_forward.2} parent=55 // pred_fallthru
        _
    $region56: #{regular_conv_forward.2} parent=5 // pred_fallthru
      _
  $region6: #{regular_conv_forward.2} parent=0 // loop_footer
    %s18 = sadd.s32 1, %s14
  $region7: #{regular_conv_forward.2} parent=0 // loop_footer_branch
    %13 = sbr.rel target = $region3
  $region8: #{regular_conv_forward.2} parent=0 // loop_exit
    _

</llo_original>
